<compile_context>
chip_gen: v7x
topology: tpu7x:2x2x1
jax: 0.10.0
libtpu: 0.0.40
codegen_flags: <defaults>
</compile_context>

<pallas_src>
import jax
import jax.numpy as jnp
from jax.experimental import pallas as pl
from jax.experimental.pallas import tpu as pltpu

HIDDEN = 512


def _round_up(n, m):
    return ((n + m - 1) // m) * m


def mlp_kernel(x_ref, w1_ref, b1_ref, w2_ref, b2_ref, w3_ref, b3_ref,
               w4t_ref, b4t_ref, o_ref):
    x = x_ref[...]  # (tb, 2) f32

    # Layer 1 (K=2 contraction) on the VPU: two broadcast multiply-adds instead
    # of a padded MXU matmul.  Bias-add / ReLU stay in f32.
    h = x[:, 0:1] * w1_ref[0:1, :] + x[:, 1:2] * w1_ref[1:2, :] + b1_ref[...]
    h = jnp.maximum(h, 0.0)

    # Layers 2/3: bf16 operands on the MXU, f32 accumulation, f32 epilogue.
    h = jnp.dot(h.astype(jnp.bfloat16), w2_ref[...],
                preferred_element_type=jnp.float32)
    h = jnp.maximum(h + b2_ref[...], 0.0)

    h = jnp.dot(h.astype(jnp.bfloat16), w3_ref[...],
                preferred_element_type=jnp.float32)
    h = jnp.maximum(h + b3_ref[...], 0.0)

    # Output projection, transposed: (2, 512) x (tb, 512) -> (2, tb).
    # Lane-dense store (last dim = tb), 64x less output DMA than padded layout.
    out = jax.lax.dot_general(
        w4t_ref[...], h.astype(jnp.bfloat16),
        dimension_numbers=(((1,), (1,)), ((), ())),
        preferred_element_type=jnp.float32)
    o_ref[...] = (out + b4t_ref[...]).astype(o_ref.dtype)


def mlp_forward(x, params, tile_b=512):
    """x: (B, 2) float32. params: dict of f32 weights/biases. Returns (B, 2) f32."""
    B, D_in = x.shape
    assert D_in == 2
    assert tile_b % 128 == 0, "tile_b must be a multiple of 128"

    # Batch-tile selection:
    #  * B <= 128:     one tile (tb == Bp, multiple of 8 sublanes).
    #  * B <= 2*tile:  exactly 2 tiles (dual-TC on v7x), tb multiple of 128
    #                  so the transposed output block stays lane-aligned.
    #  * otherwise:    tb = tile_b (multiple of 128).
    if B <= 128:
        tb = max(8, _round_up(B, 8))
    elif B <= 2 * tile_b:
        tb = _round_up(pl.cdiv(B, 2), 128)
    else:
        tb = tile_b
    Bp = _round_up(B, tb)
    if Bp != B:
        x = jnp.pad(x, ((0, Bp - B), (0, 0)))
    num_tiles = Bp // tb

    # Weight prep (wrapper level): bf16 for the MXU matmuls, f32 for the tiny
    # VPU layer-1 weights and all biases.  Output projection pre-transposed.
    w1 = params["w1"].astype(jnp.float32)              # (2, 512)
    b1 = params["b1"].astype(jnp.float32)              # (1, 512)
    w2 = params["w2"].astype(jnp.bfloat16)             # (512, 512)
    b2 = params["b2"].astype(jnp.float32)
    w3 = params["w3"].astype(jnp.bfloat16)             # (512, 512)
    b3 = params["b3"].astype(jnp.float32)
    w4t = params["w4"].T.astype(jnp.bfloat16)          # (2, 512)
    b4t = params["b4"].T.astype(jnp.float32)           # (2, 1)

    # Constant-index (VMEM-resident) operands: single-buffered — the second
    # pipeline buffer is pure waste for a never-changing block.
    def const(a):
        return pl.BlockSpec(a.shape, lambda i: tuple(0 for _ in a.shape),
                            pipeline_mode=pl.Buffered(1))

    weight_bytes = ((w1.size + b1.size + b2.size + b3.size + b4t.size) * 4
                    + (w2.size + w3.size + w4t.size) * 2)
    cost = pl.CostEstimate(
        flops=2 * Bp * HIDDEN * (2 + HIDDEN + HIDDEN + 2),
        transcendentals=0,
        bytes_accessed=int(weight_bytes + Bp * 2 * 4 + 2 * Bp * 4))

    out_t = pl.pallas_call(
        mlp_kernel,
        out_shape=jax.ShapeDtypeStruct((2, Bp), jnp.float32),
        grid=(num_tiles,),
        in_specs=[
            pl.BlockSpec((tb, 2), lambda i: (i, 0)),   # x, tiled over batch
            const(w1), const(b1),                      # weights/biases resident
            const(w2), const(b2),
            const(w3), const(b3),
            const(w4t), const(b4t),
        ],
        out_specs=pl.BlockSpec((2, tb), lambda i: (0, i)),
        compiler_params=pltpu.CompilerParams(
            # Batch tiles are independent: shard across both TCs on v7x
            # (harmless no-op on single-TC v5e/v6e).
            dimension_semantics=("parallel",),
            # Covers v5e's 16 MiB scoped-VMEM default if tile_b is raised;
            # comfortably under physical VMEM on all generations.
            vmem_limit_bytes=32 * 1024 * 1024,
        ),
        cost_estimate=cost,
    )(x, w1, b1, w2, b2, w3, b3, w4t, b4t)

    return out_t[:, :B].T


def init_params(key):
    """Deterministic synthetic parameters matching the PyTorch module's shapes."""
    dims = [(2, HIDDEN), (HIDDEN, HIDDEN), (HIDDEN, HIDDEN), (HIDDEN, 2)]
    params = {}
    keys = jax.random.split(key, 2 * len(dims))
    for i, (d_in, d_out) in enumerate(dims):
        bound = 1.0 / (d_in ** 0.5)  # matches nn.Linear default init range
        params[f"w{i + 1}"] = jax.random.uniform(
            keys[2 * i], (d_in, d_out), jnp.float32, minval=-bound, maxval=bound)
        params[f"b{i + 1}"] = jax.random.uniform(
            keys[2 * i + 1], (1, d_out), jnp.float32, minval=-bound, maxval=bound)
    return params


def mlp_reference(x, params):
    """Reference mirroring the kernel's bf16-weight / f32-accumulate arithmetic."""
    bf = lambda a: a.astype(jnp.bfloat16)
    h = jnp.maximum(x @ params["w1"] + params["b1"], 0.0)
    h = jnp.maximum(
        jnp.dot(bf(h), bf(params["w2"]), preferred_element_type=jnp.float32)
        + params["b2"], 0.0)
    h = jnp.maximum(
        jnp.dot(bf(h), bf(params["w3"]), preferred_element_type=jnp.float32)
        + params["b3"], 0.0)
    return (jnp.dot(bf(h), bf(params["w4"]), preferred_element_type=jnp.float32)
            + params["b4"])


if __name__ == "__main__":
    key = jax.random.PRNGKey(0)
    k_params, k_x = jax.random.split(key)
    params = init_params(k_params)

    # nn.Flatten on a (B, 2) input is the identity, so the kernel consumes (B, 2).
    # B=200 exercises the 2-tile path (pads to 256, grid=(2,)) while staying small.
    B = 200
    x = jax.random.normal(k_x, (B, 2), jnp.float32)

    out = mlp_forward(x, params)
    out = jax.block_until_ready(out)

    ref = mlp_reference(x, params)
    assert out.shape == (B, 2)
    assert jnp.allclose(out, ref, atol=1e-2, rtol=1e-2), "mismatch vs reference"

    print("KERNEL_OK")
</pallas_src>

<mosaic_0001>
module attributes {stable_mosaic.version = 11 : i64} {
  func.func @mlp_kernel(%arg0: i32, %arg1: memref<128x2xf32, #tpu.memory_space<vmem>>, %arg2: memref<2x512xf32, #tpu.memory_space<vmem>>, %arg3: memref<1x512xf32, #tpu.memory_space<vmem>>, %arg4: memref<512x512xbf16, #tpu.memory_space<vmem>>, %arg5: memref<1x512xf32, #tpu.memory_space<vmem>>, %arg6: memref<512x512xbf16, #tpu.memory_space<vmem>>, %arg7: memref<1x512xf32, #tpu.memory_space<vmem>>, %arg8: memref<2x512xbf16, #tpu.memory_space<vmem>>, %arg9: memref<2x1xf32, #tpu.memory_space<vmem>>, %arg10: memref<2x128xf32, #tpu.memory_space<vmem>>) attributes {dimension_semantics = [#tpu.dimension_semantics<parallel>], iteration_bounds = array<i64: 2>, scalar_prefetch = 0 : i64, scratch_operands = 0 : i64, tpu.core_type = #tpu.core_type<tc>, window_params = [{transform_indices = @transform_0, window_bounds = array<i64: 128, 2>}, {pipeline_mode = #tpu.pipeline_mode<synchronous>, transform_indices = @transform_1, window_bounds = array<i64: 2, 512>}, {pipeline_mode = #tpu.pipeline_mode<synchronous>, transform_indices = @transform_2, window_bounds = array<i64: 1, 512>}, {pipeline_mode = #tpu.pipeline_mode<synchronous>, transform_indices = @transform_3, window_bounds = array<i64: 512, 512>}, {pipeline_mode = #tpu.pipeline_mode<synchronous>, transform_indices = @transform_4, window_bounds = array<i64: 1, 512>}, {pipeline_mode = #tpu.pipeline_mode<synchronous>, transform_indices = @transform_5, window_bounds = array<i64: 512, 512>}, {pipeline_mode = #tpu.pipeline_mode<synchronous>, transform_indices = @transform_6, window_bounds = array<i64: 1, 512>}, {pipeline_mode = #tpu.pipeline_mode<synchronous>, transform_indices = @transform_7, window_bounds = array<i64: 2, 512>}, {pipeline_mode = #tpu.pipeline_mode<synchronous>, transform_indices = @transform_8, window_bounds = array<i64: 2, 1>}, {transform_indices = @transform_9, window_bounds = array<i64: 2, 128>}]} {
    %c0 = arith.constant 0 : index
    %c0_0 = arith.constant 0 : index
    %0 = vector.load %arg1[%c0, %c0_0] : memref<128x2xf32, #tpu.memory_space<vmem>>, vector<128x2xf32>
    %1 = vector.extract_strided_slice %0 {offsets = [0, 0], sizes = [128, 1], strides = [1, 1]} : vector<128x2xf32> to vector<128x1xf32>
    %c0_1 = arith.constant 0 : index
    %c0_2 = arith.constant 0 : index
    %2 = vector.load %arg2[%c0_1, %c0_2] : memref<2x512xf32, #tpu.memory_space<vmem>>, vector<1x512xf32>
    %3 = vector.broadcast %1 : vector<128x1xf32> to vector<128x512xf32>
    %4 = vector.broadcast %2 : vector<1x512xf32> to vector<128x512xf32>
    %5 = arith.mulf %3, %4 : vector<128x512xf32>
    %6 = vector.extract_strided_slice %0 {offsets = [0, 1], sizes = [128, 1], strides = [1, 1]} : vector<128x2xf32> to vector<128x1xf32>
    %c1 = arith.constant 1 : index
    %c0_3 = arith.constant 0 : index
    %7 = vector.load %arg2[%c1, %c0_3] : memref<2x512xf32, #tpu.memory_space<vmem>>, vector<1x512xf32>
    %8 = vector.broadcast %6 : vector<128x1xf32> to vector<128x512xf32>
    %9 = vector.broadcast %7 : vector<1x512xf32> to vector<128x512xf32>
    %10 = arith.mulf %8, %9 : vector<128x512xf32>
    %11 = arith.addf %5, %10 : vector<128x512xf32>
    %c0_4 = arith.constant 0 : index
    %c0_5 = arith.constant 0 : index
    %12 = vector.load %arg3[%c0_4, %c0_5] : memref<1x512xf32, #tpu.memory_space<vmem>>, vector<1x512xf32>
    %13 = vector.broadcast %12 : vector<1x512xf32> to vector<128x512xf32>
    %14 = arith.addf %11, %13 : vector<128x512xf32>
    %cst = arith.constant 0.000000e+00 : f32
    %15 = vector.broadcast %cst : f32 to vector<128x512xf32>
    %16 = arith.maximumf %14, %15 : vector<128x512xf32>
    %17 = arith.truncf %16 : vector<128x512xf32> to vector<128x512xbf16>
    %c0_6 = arith.constant 0 : index
    %c0_7 = arith.constant 0 : index
    %18 = vector.load %arg4[%c0_6, %c0_7] : memref<512x512xbf16, #tpu.memory_space<vmem>>, vector<512x512xbf16>
    %cst_8 = arith.constant dense<0.000000e+00> : vector<128x512xf32>
    %19 = tpu.matmul %17, %18, %cst_8 {dimension_numbers = #tpu.dot_dimension_numbers<[1], [0], [0], [1], [0, 0, 1, 1], [], []>} : vector<128x512xbf16>, vector<512x512xbf16>, vector<128x512xf32> -> vector<128x512xf32>
    %c0_9 = arith.constant 0 : index
    %c0_10 = arith.constant 0 : index
    %20 = vector.load %arg5[%c0_9, %c0_10] : memref<1x512xf32, #tpu.memory_space<vmem>>, vector<1x512xf32>
    %21 = vector.broadcast %20 : vector<1x512xf32> to vector<128x512xf32>
    %22 = arith.addf %19, %21 : vector<128x512xf32>
    %cst_11 = arith.constant 0.000000e+00 : f32
    %23 = vector.broadcast %cst_11 : f32 to vector<128x512xf32>
    %24 = arith.maximumf %22, %23 : vector<128x512xf32>
    %25 = arith.truncf %24 : vector<128x512xf32> to vector<128x512xbf16>
    %c0_12 = arith.constant 0 : index
    %c0_13 = arith.constant 0 : index
    %26 = vector.load %arg6[%c0_12, %c0_13] : memref<512x512xbf16, #tpu.memory_space<vmem>>, vector<512x512xbf16>
    %cst_14 = arith.constant dense<0.000000e+00> : vector<128x512xf32>
    %27 = tpu.matmul %25, %26, %cst_14 {dimension_numbers = #tpu.dot_dimension_numbers<[1], [0], [0], [1], [0, 0, 1, 1], [], []>} : vector<128x512xbf16>, vector<512x512xbf16>, vector<128x512xf32> -> vector<128x512xf32>
    %c0_15 = arith.constant 0 : index
    %c0_16 = arith.constant 0 : index
    %28 = vector.load %arg7[%c0_15, %c0_16] : memref<1x512xf32, #tpu.memory_space<vmem>>, vector<1x512xf32>
    %29 = vector.broadcast %28 : vector<1x512xf32> to vector<128x512xf32>
    %30 = arith.addf %27, %29 : vector<128x512xf32>
    %cst_17 = arith.constant 0.000000e+00 : f32
    %31 = vector.broadcast %cst_17 : f32 to vector<128x512xf32>
    %32 = arith.maximumf %30, %31 : vector<128x512xf32>
    %c0_18 = arith.constant 0 : index
    %c0_19 = arith.constant 0 : index
    %33 = vector.load %arg8[%c0_18, %c0_19] : memref<2x512xbf16, #tpu.memory_space<vmem>>, vector<2x512xbf16>
    %34 = arith.truncf %32 : vector<128x512xf32> to vector<128x512xbf16>
    %cst_20 = arith.constant dense<0.000000e+00> : vector<2x128xf32>
    %35 = tpu.matmul %33, %34, %cst_20 {dimension_numbers = #tpu.dot_dimension_numbers<[1], [1], [0], [0], [0, 0, 1, 0], [], []>} : vector<2x512xbf16>, vector<128x512xbf16>, vector<2x128xf32> -> vector<2x128xf32>
    %c0_21 = arith.constant 0 : index
    %c0_22 = arith.constant 0 : index
    %36 = vector.load %arg9[%c0_21, %c0_22] : memref<2x1xf32, #tpu.memory_space<vmem>>, vector<2x1xf32>
    %37 = vector.broadcast %36 : vector<2x1xf32> to vector<2x128xf32>
    %38 = arith.addf %35, %37 : vector<2x128xf32>
    %c0_23 = arith.constant 0 : index
    %c0_24 = arith.constant 0 : index
    %39 = vector.load %arg10[%c0_23, %c0_24] : memref<2x128xf32, #tpu.memory_space<vmem>>, vector<2x128xf32>
    tpu.vector_store %arg10[%c0_23, %c0_24], %38 {strides = array<i32>} : memref<2x128xf32, #tpu.memory_space<vmem>>, vector<2x128xf32>,
    return
  }
  func.func @transform_0(%arg0: i32) -> (i32, i32) {
    %c0_i32 = arith.constant 0 : i32
    %c0_i32_0 = arith.constant 0 : i32
    return %arg0, %c0_i32 : i32, i32
  }
  func.func @transform_1(%arg0: i32) -> (i32, i32) {
    %c0_i32 = arith.constant 0 : i32
    %c0_i32_0 = arith.constant 0 : i32
    %c0_i32_1 = arith.constant 0 : i32
    return %c0_i32, %c0_i32_0 : i32, i32
  }
  func.func @transform_2(%arg0: i32) -> (i32, i32) {
    %c0_i32 = arith.constant 0 : i32
    %c0_i32_0 = arith.constant 0 : i32
    %c0_i32_1 = arith.constant 0 : i32
    return %c0_i32, %c0_i32_0 : i32, i32
  }
  func.func @transform_3(%arg0: i32) -> (i32, i32) {
    %c0_i32 = arith.constant 0 : i32
    %c0_i32_0 = arith.constant 0 : i32
    %c0_i32_1 = arith.constant 0 : i32
    return %c0_i32, %c0_i32_0 : i32, i32
  }
  func.func @transform_4(%arg0: i32) -> (i32, i32) {
    %c0_i32 = arith.constant 0 : i32
    %c0_i32_0 = arith.constant 0 : i32
    %c0_i32_1 = arith.constant 0 : i32
    return %c0_i32, %c0_i32_0 : i32, i32
  }
  func.func @transform_5(%arg0: i32) -> (i32, i32) {
    %c0_i32 = arith.constant 0 : i32
    %c0_i32_0 = arith.constant 0 : i32
    %c0_i32_1 = arith.constant 0 : i32
    return %c0_i32, %c0_i32_0 : i32, i32
  }
  func.func @transform_6(%arg0: i32) -> (i32, i32) {
    %c0_i32 = arith.constant 0 : i32
    %c0_i32_0 = arith.constant 0 : i32
    %c0_i32_1 = arith.constant 0 : i32
    return %c0_i32, %c0_i32_0 : i32, i32
  }
  func.func @transform_7(%arg0: i32) -> (i32, i32) {
    %c0_i32 = arith.constant 0 : i32
    %c0_i32_0 = arith.constant 0 : i32
    %c0_i32_1 = arith.constant 0 : i32
    return %c0_i32, %c0_i32_0 : i32, i32
  }
  func.func @transform_8(%arg0: i32) -> (i32, i32) {
    %c0_i32 = arith.constant 0 : i32
    %c0_i32_0 = arith.constant 0 : i32
    %c0_i32_1 = arith.constant 0 : i32
    return %c0_i32, %c0_i32_0 : i32, i32
  }
  func.func @transform_9(%arg0: i32) -> (i32, i32) {
    %c0_i32 = arith.constant 0 : i32
    %c0_i32_0 = arith.constant 0 : i32
    return %c0_i32, %arg0 : i32, i32
  }
}

</mosaic_0001>

<llo_original>
// kernel: tpu_custom_call.1
$region0: #{tpu_custom_call.1}
  #allocation0 [shape = 'u32[]', space=smem, size = 0x4, offset = 0x4, fixed_abs, tag = 'smem constant byte address 0x4 - core index']
  #allocation1 [shape = 'u32[144,128]{1,0:T(1,128)}', space=vmem, size = 0x12000, scoped, tag = 'internal scratch']
  %s0 = inlined_call_operand.vmem [shape: f32[256,2], index: 0, kind: input, shape index: {}]
  %s1 = inlined_call_operand.vmem [shape: f32[2,512], index: 1, kind: input, shape index: {}]
  %s2 = inlined_call_operand.vmem [shape: f32[1,512], index: 2, kind: input, shape index: {}]
  %s3 = inlined_call_operand.hbm [shape: bf16[512,512], index: 3, kind: input, shape index: {}]
  %s4 = inlined_call_operand.vmem [shape: f32[1,512], index: 4, kind: input, shape index: {}]
  %s5 = inlined_call_operand.hbm [shape: bf16[512,512], index: 5, kind: input, shape index: {}]
  %s6 = inlined_call_operand.vmem [shape: f32[1,512], index: 6, kind: input, shape index: {}]
  %s7 = inlined_call_operand.vmem [shape: bf16[2,512], index: 7, kind: input, shape index: {}]
  %s8 = inlined_call_operand.vmem [shape: f32[2,1], index: 8, kind: input, shape index: {}]
  %s9 = inlined_call_operand.hbm [shape: f32[2,256], index: 9, kind: output, shape index: {}]
  %s10 = sld [smem:[#allocation0]]
  $region77: #{tpu_custom_call.1} parent=0
    _
  %s12 = ssub.s32 1, %s10
  %s13 = scalar_select 0, %s12, %s10
  $region1: #{tpu_custom_call.1} parent=0
    #allocation2 [shape = 'u8[524288]{0}', space=vmem, size = 0x80000, scoped, tag = 'input window, operand 3, single buffered']
    #allocation3 [shape = 's32[2]{0}', space=sflag, size = 0x8, scoped, tag = 'scoped memory for tpu_custom_call.1']
    #allocation4 [shape = 's32[2]{0}', space=sflag, size = 0x8, scoped, tag = 'scoped memory for tpu_custom_call.1']
    #allocation5 [shape = 'u8[524288]{0}', space=vmem, size = 0x80000, scoped, tag = 'input window, operand 5, single buffered']
    #allocation6 [shape = 's32[1]{0}', space=sflag, size = 0x4, scoped, tag = 'scoped memory for tpu_custom_call.1']
    #allocation7 [shape = 'u8[2048]{0}', space=vmem, size = 0x800, scoped, tag = 'output window, operand 0']
    %14 = vsyncpa [#allocation3], 0
    %15 = vsyncpa [#allocation6], 0
    %16 = vsyncpa [#allocation4], 0
    %s17 = scalar_lea.sflag [#allocation4], 1
    %18 = vsyncpa %s17, 0
    loop: start=0, step=1, limit=4
    $region2: #{tpu_custom_call.1} parent=1 // loop_pre_header
      _
    $region3: #{tpu_custom_call.1} parent=1 // loop_header
      %s20 = sphi 0, %s24
      %p21 = scmp.ge.s32.totalorder %s20, 4
      %s30 = sphi 0, %s32
      %s33 = sphi 0, %s30
      %s34 = sphi 0, %s33
      %s50 = sphi 0, %s34
      %s54 = sphi 0, %s54
      %s56 = sphi 0, %s54
      %s57 = sphi 0, %s56
      %s71 = sphi 0, %s57
      %s75 = sphi 0, %s75
      %s77 = sphi 0, %s75
      %s78 = sphi 0, %s77
      %s92 = sphi 0, %s78
      %s96 = sphi 0, %s96
      %s98 = sphi 0, %s96
      %s99 = sphi 0, %s98
      %s113 = sphi 0, %s99
      %s117 = sphi 0, %s117
      %s119 = sphi 0, %s117
      %s120 = sphi 0, %s119
      %s134 = sphi 0, %s120
      %s138 = sphi 0, %s138
      %s140 = sphi 0, %s138
      %s141 = sphi 0, %s140
      %s155 = sphi 0, %s141
      %s159 = sphi 0, %s159
      %s161 = sphi 0, %s159
      %s162 = sphi 0, %s161
      %s176 = sphi 0, %s162
      %s180 = sphi 0, %s180
      %s182 = sphi 0, %s180
      %s183 = sphi 0, %s182
      %s197 = sphi 0, %s183
      %s201 = sphi 0, %s201
      %s203 = sphi 0, %s201
      %s204 = sphi 0, %s203
      %s218 = sphi 0, %s204
      %s224 = sphi 0, %s226
      %s227 = sphi 0, %s224
      %s228 = sphi 0, %s227
      %s244 = sphi 0, %s228
    $region4: #{tpu_custom_call.1} parent=1 // loop_header_branch
      %23 = sbr.rel (%p21) target = $region8
    $region5: #{tpu_custom_call.1} parent=1 // loop_body
      %s25 = ssub.s32 %s20, 1
      %s26 = ssub.s32 %s20, 2
      %s27 = sadd.s32 %s20, 1
      %s28 = ssub.s32 %s20, %s27
      %p29 = scmp.eq.s32.totalorder %s28, 0
      %s31 = sadd.s32 %s30, 1
      %s32 = scalar_select %p29, %s30, %s31
      %p35 = pneg %p29
      %p36 = scmp.eq.s32.totalorder %s20, 1
      %p37 = por %p35, %p36
      %p38 = scmp.ne.s32.totalorder %s30, %s33
      %p39 = scmp.eq.s32.totalorder %s20, 0
      %p40 = por %p38, %p39
      %p41 = scmp.ne.s32.totalorder %s30, %s33
      %p42 = scmp.eq.s32.totalorder %s25, 1
      %p43 = por %p41, %p42
      %p44 = scmp.ne.s32.totalorder %s33, %s34
      %p45 = scmp.eq.s32.totalorder %s25, 0
      %p46 = por %p44, %p45
      %p47 = scmp.ne.s32.totalorder %s33, %s34
      %p48 = scmp.eq.s32.totalorder %s26, 1
      %p49 = por %p47, %p48
      %p51 = scmp.ne.s32.totalorder %s34, %s50
      %p52 = scmp.eq.s32.totalorder %s26, 0
      %p53 = por %p51, %p52
      %s55 = sadd.s32 %s54, 1
      %p58 = scmp.eq.s32.totalorder %s20, 1
      %p59 = scmp.ne.s32.totalorder %s54, %s56
      %p60 = scmp.eq.s32.totalorder %s20, 0
      %p61 = por %p59, %p60
      %p62 = scmp.ne.s32.totalorder %s54, %s56
      %p63 = scmp.eq.s32.totalorder %s25, 1
      %p64 = por %p62, %p63
      %p65 = scmp.ne.s32.totalorder %s56, %s57
      %p66 = scmp.eq.s32.totalorder %s25, 0
      %p67 = por %p65, %p66
      %p68 = scmp.ne.s32.totalorder %s56, %s57
      %p69 = scmp.eq.s32.totalorder %s26, 1
      %p70 = por %p68, %p69
      %p72 = scmp.ne.s32.totalorder %s57, %s71
      %p73 = scmp.eq.s32.totalorder %s26, 0
      %p74 = por %p72, %p73
      %s76 = sadd.s32 %s75, 1
      %p79 = scmp.eq.s32.totalorder %s20, 1
      %p80 = scmp.ne.s32.totalorder %s75, %s77
      %p81 = scmp.eq.s32.totalorder %s20, 0
      %p82 = por %p80, %p81
      %p83 = scmp.ne.s32.totalorder %s75, %s77
      %p84 = scmp.eq.s32.totalorder %s25, 1
      %p85 = por %p83, %p84
      %p86 = scmp.ne.s32.totalorder %s77, %s78
      %p87 = scmp.eq.s32.totalorder %s25, 0
      %p88 = por %p86, %p87
      %p89 = scmp.ne.s32.totalorder %s77, %s78
      %p90 = scmp.eq.s32.totalorder %s26, 1
      %p91 = por %p89, %p90
      %p93 = scmp.ne.s32.totalorder %s78, %s92
      %p94 = scmp.eq.s32.totalorder %s26, 0
      %p95 = por %p93, %p94
      %s97 = sadd.s32 %s96, 1
      %p100 = scmp.eq.s32.totalorder %s20, 1
      %p101 = scmp.ne.s32.totalorder %s96, %s98
      %p102 = scmp.eq.s32.totalorder %s20, 0
      %p103 = por %p101, %p102
      %p104 = scmp.ne.s32.totalorder %s96, %s98
      %p105 = scmp.eq.s32.totalorder %s25, 1
      %p106 = por %p104, %p105
      %p107 = scmp.ne.s32.totalorder %s98, %s99
      %p108 = scmp.eq.s32.totalorder %s25, 0
      %p109 = por %p107, %p108
      %p110 = scmp.ne.s32.totalorder %s98, %s99
      %p111 = scmp.eq.s32.totalorder %s26, 1
      %p112 = por %p110, %p111
      %p114 = scmp.ne.s32.totalorder %s99, %s113
      %p115 = scmp.eq.s32.totalorder %s26, 0
      %p116 = por %p114, %p115
      %s118 = sadd.s32 %s117, 1
      %p121 = scmp.eq.s32.totalorder %s20, 1
      %p122 = scmp.ne.s32.totalorder %s117, %s119
      %p123 = scmp.eq.s32.totalorder %s20, 0
      %p124 = por %p122, %p123
      %p125 = scmp.ne.s32.totalorder %s117, %s119
      %p126 = scmp.eq.s32.totalorder %s25, 1
      %p127 = por %p125, %p126
      %p128 = scmp.ne.s32.totalorder %s119, %s120
      %p129 = scmp.eq.s32.totalorder %s25, 0
      %p130 = por %p128, %p129
      %p131 = scmp.ne.s32.totalorder %s119, %s120
      %p132 = scmp.eq.s32.totalorder %s26, 1
      %p133 = por %p131, %p132
      %p135 = scmp.ne.s32.totalorder %s120, %s134
      %p136 = scmp.eq.s32.totalorder %s26, 0
      %p137 = por %p135, %p136
      %s139 = sadd.s32 %s138, 1
      %p142 = scmp.eq.s32.totalorder %s20, 1
      %p143 = scmp.ne.s32.totalorder %s138, %s140
      %p144 = scmp.eq.s32.totalorder %s20, 0
      %p145 = por %p143, %p144
      %p146 = scmp.ne.s32.totalorder %s138, %s140
      %p147 = scmp.eq.s32.totalorder %s25, 1
      %p148 = por %p146, %p147
      %p149 = scmp.ne.s32.totalorder %s140, %s141
      %p150 = scmp.eq.s32.totalorder %s25, 0
      %p151 = por %p149, %p150
      %p152 = scmp.ne.s32.totalorder %s140, %s141
      %p153 = scmp.eq.s32.totalorder %s26, 1
      %p154 = por %p152, %p153
      %p156 = scmp.ne.s32.totalorder %s141, %s155
      %p157 = scmp.eq.s32.totalorder %s26, 0
      %p158 = por %p156, %p157
      %s160 = sadd.s32 %s159, 1
      %p163 = scmp.eq.s32.totalorder %s20, 1
      %p164 = scmp.ne.s32.totalorder %s159, %s161
      %p165 = scmp.eq.s32.totalorder %s20, 0
      %p166 = por %p164, %p165
      %p167 = scmp.ne.s32.totalorder %s159, %s161
      %p168 = scmp.eq.s32.totalorder %s25, 1
      %p169 = por %p167, %p168
      %p170 = scmp.ne.s32.totalorder %s161, %s162
      %p171 = scmp.eq.s32.totalorder %s25, 0
      %p172 = por %p170, %p171
      %p173 = scmp.ne.s32.totalorder %s161, %s162
      %p174 = scmp.eq.s32.totalorder %s26, 1
      %p175 = por %p173, %p174
      %p177 = scmp.ne.s32.totalorder %s162, %s176
      %p178 = scmp.eq.s32.totalorder %s26, 0
      %p179 = por %p177, %p178
      %s181 = sadd.s32 %s180, 1
      %p184 = scmp.eq.s32.totalorder %s20, 1
      %p185 = scmp.ne.s32.totalorder %s180, %s182
      %p186 = scmp.eq.s32.totalorder %s20, 0
      %p187 = por %p185, %p186
      %p188 = scmp.ne.s32.totalorder %s180, %s182
      %p189 = scmp.eq.s32.totalorder %s25, 1
      %p190 = por %p188, %p189
      %p191 = scmp.ne.s32.totalorder %s182, %s183
      %p192 = scmp.eq.s32.totalorder %s25, 0
      %p193 = por %p191, %p192
      %p194 = scmp.ne.s32.totalorder %s182, %s183
      %p195 = scmp.eq.s32.totalorder %s26, 1
      %p196 = por %p194, %p195
      %p198 = scmp.ne.s32.totalorder %s183, %s197
      %p199 = scmp.eq.s32.totalorder %s26, 0
      %p200 = por %p198, %p199
      %s202 = sadd.s32 %s201, 1
      %p205 = scmp.eq.s32.totalorder %s20, 1
      %p206 = scmp.ne.s32.totalorder %s201, %s203
      %p207 = scmp.eq.s32.totalorder %s20, 0
      %p208 = por %p206, %p207
      %p209 = scmp.ne.s32.totalorder %s201, %s203
      %p210 = scmp.eq.s32.totalorder %s25, 1
      %p211 = por %p209, %p210
      %p212 = scmp.ne.s32.totalorder %s203, %s204
      %p213 = scmp.eq.s32.totalorder %s25, 0
      %p214 = por %p212, %p213
      %p215 = scmp.ne.s32.totalorder %s203, %s204
      %p216 = scmp.eq.s32.totalorder %s26, 1
      %p217 = por %p215, %p216
      %p219 = scmp.ne.s32.totalorder %s204, %s218
      %p220 = scmp.eq.s32.totalorder %s26, 0
      %p221 = por %p219, %p220
      %s222 = ssub.s32 %s20, %s27
      %p223 = scmp.eq.s32.totalorder %s222, 0
      %s225 = sadd.s32 %s224, 1
      %s226 = scalar_select %p223, %s224, %s225
      %p229 = pneg %p223
      %p230 = scmp.eq.s32.totalorder %s20, 1
      %p231 = por %p229, %p230
      %p232 = scmp.ne.s32.totalorder %s224, %s227
      %p233 = scmp.eq.s32.totalorder %s20, 0
      %p234 = por %p232, %p233
      %p235 = scmp.ne.s32.totalorder %s224, %s227
      %p236 = scmp.eq.s32.totalorder %s25, 1
      %p237 = por %p235, %p236
      %p238 = scmp.ne.s32.totalorder %s227, %s228
      %p239 = scmp.eq.s32.totalorder %s25, 0
      %p240 = por %p238, %p239
      %p241 = scmp.ne.s32.totalorder %s227, %s228
      %p242 = scmp.eq.s32.totalorder %s26, 1
      %p243 = por %p241, %p242
      %p245 = scmp.ne.s32.totalorder %s228, %s244
      %p246 = scmp.eq.s32.totalorder %s26, 0
      %p247 = por %p245, %p246
      %p248 = scmp.le.s32.totalorder 1, %s20
      %p249 = scmp.lt.s32.totalorder %s20, 3
      %p250 = pnand %p248, %p249
      %p251 = pneg %p250
      // Predicated region
      $region9: #{tpu_custom_call.1} parent=5 // pred_check
        _
      $region10: #{tpu_custom_call.1} parent=5 // pred_check_branch
        %253 = sbr.rel (%p250) target = $region12
      $region11: #{tpu_custom_call.1} parent=5 // pred_region
        %s254 = ssub.s32 %s20, 1
        // Predicated region
        $region13: #{tpu_custom_call.1} parent=11 // pred_check
          %p255 = pneg %p67
        $region14: #{tpu_custom_call.1} parent=11 // pred_check_branch
          %257 = sbr.rel (%p255) target = $region16
        $region15: #{tpu_custom_call.1} parent=11 // pred_region
          _
        $region16: #{tpu_custom_call.1} parent=11 // pred_fallthru
          _
        // Predicated region
        $region17: #{tpu_custom_call.1} parent=11 // pred_check
          %p258 = pneg %p88
        $region18: #{tpu_custom_call.1} parent=11 // pred_check_branch
          %260 = sbr.rel (%p258) target = $region20
        $region19: #{tpu_custom_call.1} parent=11 // pred_region
          _
        $region20: #{tpu_custom_call.1} parent=11 // pred_fallthru
          _
        // Predicated region
        $region21: #{tpu_custom_call.1} parent=11 // pred_check
          %p261 = pneg %p109
        $region22: #{tpu_custom_call.1} parent=11 // pred_check_branch
          %263 = sbr.rel (%p261) target = $region24
        $region23: #{tpu_custom_call.1} parent=11 // pred_region
          %s265 = ssub.s32 16384, 16384
          %266 = vsyncadd [#allocation3], %s265
          %s267 = sshll.u32 [#allocation2], 4
          %s268 = int_to_ptr.vmem [resolvable:$true] %s267
          %273 = dma.hbm_to_vmem [thread:$0]  %s3, 16384, %s268, [#allocation3], 256, 256, 16
        $region24: #{tpu_custom_call.1} parent=11 // pred_fallthru
          _
        // Predicated region
        $region25: #{tpu_custom_call.1} parent=11 // pred_check
          %p274 = pneg %p130
        $region26: #{tpu_custom_call.1} parent=11 // pred_check_branch
          %276 = sbr.rel (%p274) target = $region28
        $region27: #{tpu_custom_call.1} parent=11 // pred_region
          _
        $region28: #{tpu_custom_call.1} parent=11 // pred_fallthru
          _
        // Predicated region
        $region29: #{tpu_custom_call.1} parent=11 // pred_check
          %p277 = pneg %p151
        $region30: #{tpu_custom_call.1} parent=11 // pred_check_branch
          %279 = sbr.rel (%p277) target = $region32
        $region31: #{tpu_custom_call.1} parent=11 // pred_region
          %s281 = ssub.s32 16384, 16384
          %282 = vsyncadd [#allocation6], %s281
          %s283 = sshll.u32 [#allocation5], 4
          %s284 = int_to_ptr.vmem [resolvable:$true] %s283
          %289 = dma.hbm_to_vmem [thread:$0]  %s5, 16384, %s284, [#allocation6], 256, 256, 16
        $region32: #{tpu_custom_call.1} parent=11 // pred_fallthru
          _
        // Predicated region
        $region33: #{tpu_custom_call.1} parent=11 // pred_check
          %p290 = pneg %p172
        $region34: #{tpu_custom_call.1} parent=11 // pred_check_branch
          %292 = sbr.rel (%p290) target = $region36
        $region35: #{tpu_custom_call.1} parent=11 // pred_region
          _
        $region36: #{tpu_custom_call.1} parent=11 // pred_fallthru
          _
        // Predicated region
        $region37: #{tpu_custom_call.1} parent=11 // pred_check
          %p293 = pneg %p193
        $region38: #{tpu_custom_call.1} parent=11 // pred_check_branch
          %295 = sbr.rel (%p293) target = $region40
        $region39: #{tpu_custom_call.1} parent=11 // pred_region
          _
        $region40: #{tpu_custom_call.1} parent=11 // pred_fallthru
          _
        // Predicated region
        $region41: #{tpu_custom_call.1} parent=11 // pred_check
          %p296 = pneg %p214
        $region42: #{tpu_custom_call.1} parent=11 // pred_check_branch
          %298 = sbr.rel (%p296) target = $region44
        $region43: #{tpu_custom_call.1} parent=11 // pred_region
          _
        $region44: #{tpu_custom_call.1} parent=11 // pred_fallthru
          _
      $region12: #{tpu_custom_call.1} parent=5 // pred_fallthru
        _
      %p299 = scmp.lt.s32.totalorder %s20, 2
      // Predicated region
      $region45: #{tpu_custom_call.1} parent=5 // pred_check
        %p300 = pneg %p299
      $region46: #{tpu_custom_call.1} parent=5 // pred_check_branch
        %302 = sbr.rel (%p300) target = $region48
      $region47: #{tpu_custom_call.1} parent=5 // pred_region
        // Predicated region
        $region49: #{tpu_custom_call.1} parent=47 // pred_check
          %p303 = pneg %p40
        $region50: #{tpu_custom_call.1} parent=47 // pred_check_branch
          %305 = sbr.rel (%p303) target = $region52
        $region51: #{tpu_custom_call.1} parent=47 // pred_region
          %s306 = smul.u32 16, %s20
          %p307 = scmp.lt.s32.totalorder %s306, 31
          %s308 = scalar_select %p307, %s306, 31
          %s309 = smul.addr %s308, 8
          %s310 = scalar_lea.vmem %s0, %s309
          %s311 = smul.u32 16, %s20
        $region52: #{tpu_custom_call.1} parent=47 // pred_fallthru
          _
      $region48: #{tpu_custom_call.1} parent=5 // pred_fallthru
        _
      %p312 = scmp.le.s32.totalorder 1, %s20
      %p313 = scmp.lt.s32.totalorder %s20, 3
      %p314 = pnand %p312, %p313
      %p315 = pneg %p314
      // Predicated region
      $region53: #{tpu_custom_call.1} parent=5 // pred_check
        _
      $region54: #{tpu_custom_call.1} parent=5 // pred_check_branch
        %317 = sbr.rel (%p314) target = $region56
      $region55: #{tpu_custom_call.1} parent=5 // pred_region
        %s318 = ssub.s32 %s20, 1
        // Predicated region
        $region57: #{tpu_custom_call.1} parent=55 // pred_check
          %p319 = pneg %p109
        $region58: #{tpu_custom_call.1} parent=55 // pred_check_branch
          %321 = sbr.rel (%p319) target = $region60
        $region59: #{tpu_custom_call.1} parent=55 // pred_region
          %322 = dma.done [#allocation3], 16384
        $region60: #{tpu_custom_call.1} parent=55 // pred_fallthru
          _
        // Predicated region
        $region61: #{tpu_custom_call.1} parent=55 // pred_check
          %p323 = pneg %p151
        $region62: #{tpu_custom_call.1} parent=55 // pred_check_branch
          %325 = sbr.rel (%p323) target = $region64
        $region63: #{tpu_custom_call.1} parent=55 // pred_region
          %326 = dma.done [#allocation6], 16384
        $region64: #{tpu_custom_call.1} parent=55 // pred_fallthru
          _
        %s327 = smul.u32 16, %s25
        %p328 = scmp.lt.s32.totalorder %s327, 31
        %s329 = scalar_select %p328, %s327, 31
        %s330 = smul.addr %s329, 8
        %s331 = scalar_lea.vmem %s0, %s330
        %p332 = pneg %p46
        %p333 = pneg %p43
        %p334 = pneg %p67
        %p335 = pneg %p64
        %p336 = pneg %p88
        %p337 = pneg %p85
        %p338 = pneg %p109
        %p339 = pneg %p106
        %p340 = pneg %p130
        %p341 = pneg %p127
        %p342 = pneg %p151
        %p343 = pneg %p148
        %p344 = pneg %p172
        %p345 = pneg %p169
        %p346 = pneg %p193
        %p347 = pneg %p190
        %p348 = pneg %p214
        %p349 = pneg %p211
        %p350 = pneg %p240
        %p351 = pneg %p237
        %s352 = sand.u32 %s227, 1
        %s353 = scalar_lea.sflag [#allocation4], %s352
        %s354 = sand.u32 %s227, 1
        %s355 = smul.addr %s354, 2
        %s356 = scalar_lea.vmem [#allocation7], %s355
        %s357 = smul.u32 16, %s25
        %p358 = scmp.lt.s32.totalorder %s357, 31
        %s359 = scalar_select %p358, %s357, 31
        %s360 = smul.addr %s359, 8
        %s361 = scalar_lea.vmem %s0, %s360
        %s362 = smul.u32 16, %s25
        %v364 = vld [vmem:[%s361] sm:$0xff]
        %v365 = vld [vmem:[%s361 + $0x8] sm:$0xff]
        %v366 = vld [vmem:[%s361 + $0x10] sm:$0xff]
        %v367 = vld [vmem:[%s361 + $0x18] sm:$0xff]
        %v368 = vld [vmem:[%s361 + $0x20] sm:$0xff]
        %v369 = vld [vmem:[%s361 + $0x28] sm:$0xff]
        %v370 = vld [vmem:[%s361 + $0x30] sm:$0xff]
        %v371 = vld [vmem:[%s361 + $0x38] sm:$0xff]
        %v372 = vld [vmem:[%s361 + $0x40] sm:$0xff]
        %v373 = vld [vmem:[%s361 + $0x48] sm:$0xff]
        %v374 = vld [vmem:[%s361 + $0x50] sm:$0xff]
        %v375 = vld [vmem:[%s361 + $0x58] sm:$0xff]
        %v376 = vld [vmem:[%s361 + $0x60] sm:$0xff]
        %v377 = vld [vmem:[%s361 + $0x68] sm:$0xff]
        %v378 = vld [vmem:[%s361 + $0x70] sm:$0xff]
        %v379 = vld [vmem:[%s361 + $0x78] sm:$0xff]
        %v380 = vld [vmem:[%s1] ss:$2 sm:$0xf]
        %382 = vset.pattern.permute.xlu0 0
        %383 = vperm.xlu0 %382, %v364
        %v384 = vpop.permute.xlu0 %383
        %387 = vset.pattern.permute.xlu0 0
        %388 = vperm.xlu0 %387, %v365
        %v389 = vpop.permute.xlu0 %388
        %392 = vset.pattern.permute.xlu0 0
        %393 = vperm.xlu0 %392, %v366
        %v394 = vpop.permute.xlu0 %393
        %397 = vset.pattern.permute.xlu0 0
        %398 = vperm.xlu0 %397, %v367
        %v399 = vpop.permute.xlu0 %398
        %402 = vset.pattern.permute.xlu0 0
        %403 = vperm.xlu0 %402, %v368
        %v404 = vpop.permute.xlu0 %403
        %407 = vset.pattern.permute.xlu0 0
        %408 = vperm.xlu0 %407, %v369
        %v409 = vpop.permute.xlu0 %408
        %412 = vset.pattern.permute.xlu0 0
        %413 = vperm.xlu0 %412, %v370
        %v414 = vpop.permute.xlu0 %413
        %417 = vset.pattern.permute.xlu0 0
        %418 = vperm.xlu0 %417, %v371
        %v419 = vpop.permute.xlu0 %418
        %422 = vset.pattern.permute.xlu0 0
        %423 = vperm.xlu0 %422, %v372
        %v424 = vpop.permute.xlu0 %423
        %427 = vset.pattern.permute.xlu0 0
        %428 = vperm.xlu0 %427, %v373
        %v429 = vpop.permute.xlu0 %428
        %432 = vset.pattern.permute.xlu0 0
        %433 = vperm.xlu0 %432, %v374
        %v434 = vpop.permute.xlu0 %433
        %437 = vset.pattern.permute.xlu0 0
        %438 = vperm.xlu0 %437, %v375
        %v439 = vpop.permute.xlu0 %438
        %442 = vset.pattern.permute.xlu0 0
        %443 = vperm.xlu0 %442, %v376
        %v444 = vpop.permute.xlu0 %443
        %447 = vset.pattern.permute.xlu0 0
        %448 = vperm.xlu0 %447, %v377
        %v449 = vpop.permute.xlu0 %448
        %452 = vset.pattern.permute.xlu0 0
        %453 = vperm.xlu0 %452, %v378
        %v454 = vpop.permute.xlu0 %453
        %457 = vset.pattern.permute.xlu0 0
        %458 = vperm.xlu0 %457, %v379
        %v459 = vpop.permute.xlu0 %458
        %v462 = vlaneseq
        %v463 = vshrl.u32 %v462, 7
        %v464 = vsub.s32 0, %v463
        %v465 = vrot.slane %v380, %v464
        %v466 = vlaneseq
        %v467 = vshrl.u32 %v466, 7
        %v468 = vsub.s32 1, %v467
        %v469 = vrot.slane %v380, %v468
        %v470 = vlaneseq
        %v471 = vshrl.u32 %v470, 7
        %v472 = vsub.s32 2, %v471
        %v473 = vrot.slane %v380, %v472
        %v474 = vlaneseq
        %v475 = vshrl.u32 %v474, 7
        %v476 = vsub.s32 3, %v475
        %v477 = vrot.slane %v380, %v476
        %v482 = vmul.f32 %v384, %v465
        %v483 = vmul.f32 %v384, %v469
        %v484 = vmul.f32 %v384, %v473
        %v485 = vmul.f32 %v384, %v477
        %v486 = vmul.f32 %v389, %v465
        %v487 = vmul.f32 %v389, %v469
        %v488 = vmul.f32 %v389, %v473
        %v489 = vmul.f32 %v389, %v477
        %v490 = vmul.f32 %v394, %v465
        %v491 = vmul.f32 %v394, %v469
        %v492 = vmul.f32 %v394, %v473
        %v493 = vmul.f32 %v394, %v477
        %v494 = vmul.f32 %v399, %v465
        %v495 = vmul.f32 %v399, %v469
        %v496 = vmul.f32 %v399, %v473
        %v497 = vmul.f32 %v399, %v477
        %v498 = vmul.f32 %v404, %v465
        %v499 = vmul.f32 %v404, %v469
        %v500 = vmul.f32 %v404, %v473
        %v501 = vmul.f32 %v404, %v477
        %v502 = vmul.f32 %v409, %v465
        %v503 = vmul.f32 %v409, %v469
        %v504 = vmul.f32 %v409, %v473
        %v505 = vmul.f32 %v409, %v477
        %v506 = vmul.f32 %v414, %v465
        %v507 = vmul.f32 %v414, %v469
        %v508 = vmul.f32 %v414, %v473
        %v509 = vmul.f32 %v414, %v477
        %v510 = vmul.f32 %v419, %v465
        %v511 = vmul.f32 %v419, %v469
        %v512 = vmul.f32 %v419, %v473
        %v513 = vmul.f32 %v419, %v477
        %v514 = vmul.f32 %v424, %v465
        %v515 = vmul.f32 %v424, %v469
        %v516 = vmul.f32 %v424, %v473
        %v517 = vmul.f32 %v424, %v477
        %v518 = vmul.f32 %v429, %v465
        %v519 = vmul.f32 %v429, %v469
        %v520 = vmul.f32 %v429, %v473
        %v521 = vmul.f32 %v429, %v477
        %v522 = vmul.f32 %v434, %v465
        %v523 = vmul.f32 %v434, %v469
        %v524 = vmul.f32 %v434, %v473
        %v525 = vmul.f32 %v434, %v477
        %v526 = vmul.f32 %v439, %v465
        %v527 = vmul.f32 %v439, %v469
        %v528 = vmul.f32 %v439, %v473
        %v529 = vmul.f32 %v439, %v477
        %v530 = vmul.f32 %v444, %v465
        %v531 = vmul.f32 %v444, %v469
        %v532 = vmul.f32 %v444, %v473
        %v533 = vmul.f32 %v444, %v477
        %v534 = vmul.f32 %v449, %v465
        %v535 = vmul.f32 %v449, %v469
        %v536 = vmul.f32 %v449, %v473
        %v537 = vmul.f32 %v449, %v477
        %v538 = vmul.f32 %v454, %v465
        %v539 = vmul.f32 %v454, %v469
        %v540 = vmul.f32 %v454, %v473
        %v541 = vmul.f32 %v454, %v477
        %v542 = vmul.f32 %v459, %v465
        %v543 = vmul.f32 %v459, %v469
        %v544 = vmul.f32 %v459, %v473
        %v545 = vmul.f32 %v459, %v477
        %s546 = scalar_lea.vmem %s1, 1
        %v547 = vld [vmem:[%s546] ss:$2 sm:$0xf]
        %548 = vset.pattern.permute.xlu0 1
        %549 = vperm.xlu0 %548, %v364
        %v550 = vpop.permute.xlu0 %549
        %552 = vset.pattern.permute.xlu0 1
        %553 = vperm.xlu0 %552, %v365
        %v554 = vpop.permute.xlu0 %553
        %556 = vset.pattern.permute.xlu0 1
        %557 = vperm.xlu0 %556, %v366
        %v558 = vpop.permute.xlu0 %557
        %560 = vset.pattern.permute.xlu0 1
        %561 = vperm.xlu0 %560, %v367
        %v562 = vpop.permute.xlu0 %561
        %564 = vset.pattern.permute.xlu0 1
        %565 = vperm.xlu0 %564, %v368
        %v566 = vpop.permute.xlu0 %565
        %568 = vset.pattern.permute.xlu0 1
        %569 = vperm.xlu0 %568, %v369
        %v570 = vpop.permute.xlu0 %569
        %572 = vset.pattern.permute.xlu0 1
        %573 = vperm.xlu0 %572, %v370
        %v574 = vpop.permute.xlu0 %573
        %576 = vset.pattern.permute.xlu0 1
        %577 = vperm.xlu0 %576, %v371
        %v578 = vpop.permute.xlu0 %577
        %580 = vset.pattern.permute.xlu0 1
        %581 = vperm.xlu0 %580, %v372
        %v582 = vpop.permute.xlu0 %581
        %584 = vset.pattern.permute.xlu0 1
        %585 = vperm.xlu0 %584, %v373
        %v586 = vpop.permute.xlu0 %585
        %588 = vset.pattern.permute.xlu0 1
        %589 = vperm.xlu0 %588, %v374
        %v590 = vpop.permute.xlu0 %589
        %592 = vset.pattern.permute.xlu0 1
        %593 = vperm.xlu0 %592, %v375
        %v594 = vpop.permute.xlu0 %593
        %596 = vset.pattern.permute.xlu0 1
        %597 = vperm.xlu0 %596, %v376
        %v598 = vpop.permute.xlu0 %597
        %600 = vset.pattern.permute.xlu0 1
        %601 = vperm.xlu0 %600, %v377
        %v602 = vpop.permute.xlu0 %601
        %604 = vset.pattern.permute.xlu0 1
        %605 = vperm.xlu0 %604, %v378
        %v606 = vpop.permute.xlu0 %605
        %608 = vset.pattern.permute.xlu0 1
        %609 = vperm.xlu0 %608, %v379
        %v610 = vpop.permute.xlu0 %609
        %v613 = vlaneseq
        %v614 = vshrl.u32 %v613, 7
        %v615 = vsub.s32 0, %v614
        %v616 = vrot.slane %v547, %v615
        %v617 = vlaneseq
        %v618 = vshrl.u32 %v617, 7
        %v619 = vsub.s32 1, %v618
        %v620 = vrot.slane %v547, %v619
        %v621 = vlaneseq
        %v622 = vshrl.u32 %v621, 7
        %v623 = vsub.s32 2, %v622
        %v624 = vrot.slane %v547, %v623
        %v625 = vlaneseq
        %v626 = vshrl.u32 %v625, 7
        %v627 = vsub.s32 3, %v626
        %v628 = vrot.slane %v547, %v627
        %v633 = vmul.f32 %v550, %v616
        %v634 = vmul.f32 %v550, %v620
        %v635 = vmul.f32 %v550, %v624
        %v636 = vmul.f32 %v550, %v628
        %v637 = vmul.f32 %v554, %v616
        %v638 = vmul.f32 %v554, %v620
        %v639 = vmul.f32 %v554, %v624
        %v640 = vmul.f32 %v554, %v628
        %v641 = vmul.f32 %v558, %v616
        %v642 = vmul.f32 %v558, %v620
        %v643 = vmul.f32 %v558, %v624
        %v644 = vmul.f32 %v558, %v628
        %v645 = vmul.f32 %v562, %v616
        %v646 = vmul.f32 %v562, %v620
        %v647 = vmul.f32 %v562, %v624
        %v648 = vmul.f32 %v562, %v628
        %v649 = vmul.f32 %v566, %v616
        %v650 = vmul.f32 %v566, %v620
        %v651 = vmul.f32 %v566, %v624
        %v652 = vmul.f32 %v566, %v628
        %v653 = vmul.f32 %v570, %v616
        %v654 = vmul.f32 %v570, %v620
        %v655 = vmul.f32 %v570, %v624
        %v656 = vmul.f32 %v570, %v628
        %v657 = vmul.f32 %v574, %v616
        %v658 = vmul.f32 %v574, %v620
        %v659 = vmul.f32 %v574, %v624
        %v660 = vmul.f32 %v574, %v628
        %v661 = vmul.f32 %v578, %v616
        %v662 = vmul.f32 %v578, %v620
        %v663 = vmul.f32 %v578, %v624
        %v664 = vmul.f32 %v578, %v628
        %v665 = vmul.f32 %v582, %v616
        %v666 = vmul.f32 %v582, %v620
        %v667 = vmul.f32 %v582, %v624
        %v668 = vmul.f32 %v582, %v628
        %v669 = vmul.f32 %v586, %v616
        %v670 = vmul.f32 %v586, %v620
        %v671 = vmul.f32 %v586, %v624
        %v672 = vmul.f32 %v586, %v628
        %v673 = vmul.f32 %v590, %v616
        %v674 = vmul.f32 %v590, %v620
        %v675 = vmul.f32 %v590, %v624
        %v676 = vmul.f32 %v590, %v628
        %v677 = vmul.f32 %v594, %v616
        %v678 = vmul.f32 %v594, %v620
        %v679 = vmul.f32 %v594, %v624
        %v680 = vmul.f32 %v594, %v628
        %v681 = vmul.f32 %v598, %v616
        %v682 = vmul.f32 %v598, %v620
        %v683 = vmul.f32 %v598, %v624
        %v684 = vmul.f32 %v598, %v628
        %v685 = vmul.f32 %v602, %v616
        %v686 = vmul.f32 %v602, %v620
        %v687 = vmul.f32 %v602, %v624
        %v688 = vmul.f32 %v602, %v628
        %v689 = vmul.f32 %v606, %v616
        %v690 = vmul.f32 %v606, %v620
        %v691 = vmul.f32 %v606, %v624
        %v692 = vmul.f32 %v606, %v628
        %v693 = vmul.f32 %v610, %v616
        %v694 = vmul.f32 %v610, %v620
        %v695 = vmul.f32 %v610, %v624
        %v696 = vmul.f32 %v610, %v628
        %v697 = vadd.f32 %v482, %v633
        %v698 = vadd.f32 %v483, %v634
        %v699 = vadd.f32 %v484, %v635
        %v700 = vadd.f32 %v485, %v636
        %v701 = vadd.f32 %v486, %v637
        %v702 = vadd.f32 %v487, %v638
        %v703 = vadd.f32 %v488, %v639
        %v704 = vadd.f32 %v489, %v640
        %v705 = vadd.f32 %v490, %v641
        %v706 = vadd.f32 %v491, %v642
        %v707 = vadd.f32 %v492, %v643
        %v708 = vadd.f32 %v493, %v644
        %v709 = vadd.f32 %v494, %v645
        %v710 = vadd.f32 %v495, %v646
        %v711 = vadd.f32 %v496, %v647
        %v712 = vadd.f32 %v497, %v648
        %v713 = vadd.f32 %v498, %v649
        %v714 = vadd.f32 %v499, %v650
        %v715 = vadd.f32 %v500, %v651
        %v716 = vadd.f32 %v501, %v652
        %v717 = vadd.f32 %v502, %v653
        %v718 = vadd.f32 %v503, %v654
        %v719 = vadd.f32 %v504, %v655
        %v720 = vadd.f32 %v505, %v656
        %v721 = vadd.f32 %v506, %v657
        %v722 = vadd.f32 %v507, %v658
        %v723 = vadd.f32 %v508, %v659
        %v724 = vadd.f32 %v509, %v660
        %v725 = vadd.f32 %v510, %v661
        %v726 = vadd.f32 %v511, %v662
        %v727 = vadd.f32 %v512, %v663
        %v728 = vadd.f32 %v513, %v664
        %v729 = vadd.f32 %v514, %v665
        %v730 = vadd.f32 %v515, %v666
        %v731 = vadd.f32 %v516, %v667
        %v732 = vadd.f32 %v517, %v668
        %v733 = vadd.f32 %v518, %v669
        %v734 = vadd.f32 %v519, %v670
        %v735 = vadd.f32 %v520, %v671
        %v736 = vadd.f32 %v521, %v672
        %v737 = vadd.f32 %v522, %v673
        %v738 = vadd.f32 %v523, %v674
        %v739 = vadd.f32 %v524, %v675
        %v740 = vadd.f32 %v525, %v676
        %v741 = vadd.f32 %v526, %v677
        %v742 = vadd.f32 %v527, %v678
        %v743 = vadd.f32 %v528, %v679
        %v744 = vadd.f32 %v529, %v680
        %v745 = vadd.f32 %v530, %v681
        %v746 = vadd.f32 %v531, %v682
        %v747 = vadd.f32 %v532, %v683
        %v748 = vadd.f32 %v533, %v684
        %v749 = vadd.f32 %v534, %v685
        %v750 = vadd.f32 %v535, %v686
        %v751 = vadd.f32 %v536, %v687
        %v752 = vadd.f32 %v537, %v688
        %v753 = vadd.f32 %v538, %v689
        %v754 = vadd.f32 %v539, %v690
        %v755 = vadd.f32 %v540, %v691
        %v756 = vadd.f32 %v541, %v692
        %v757 = vadd.f32 %v542, %v693
        %v758 = vadd.f32 %v543, %v694
        %v759 = vadd.f32 %v544, %v695
        %v760 = vadd.f32 %v545, %v696
        %v761 = vld [vmem:[%s2] sm:$0xf]
        %v763 = vlaneseq
        %v764 = vshrl.u32 %v763, 7
        %v765 = vsub.s32 0, %v764
        %v766 = vrot.slane %v761, %v765
        %v767 = vlaneseq
        %v768 = vshrl.u32 %v767, 7
        %v769 = vsub.s32 1, %v768
        %v770 = vrot.slane %v761, %v769
        %v771 = vlaneseq
        %v772 = vshrl.u32 %v771, 7
        %v773 = vsub.s32 2, %v772
        %v774 = vrot.slane %v761, %v773
        %v775 = vlaneseq
        %v776 = vshrl.u32 %v775, 7
        %v777 = vsub.s32 3, %v776
        %v778 = vrot.slane %v761, %v777
        %v783 = vadd.f32 %v697, %v766
        %v784 = vadd.f32 %v698, %v770
        %v785 = vadd.f32 %v699, %v774
        %v786 = vadd.f32 %v700, %v778
        %v787 = vadd.f32 %v701, %v766
        %v788 = vadd.f32 %v702, %v770
        %v789 = vadd.f32 %v703, %v774
        %v790 = vadd.f32 %v704, %v778
        %v791 = vadd.f32 %v705, %v766
        %v792 = vadd.f32 %v706, %v770
        %v793 = vadd.f32 %v707, %v774
        %v794 = vadd.f32 %v708, %v778
        %v795 = vadd.f32 %v709, %v766
        %v796 = vadd.f32 %v710, %v770
        %v797 = vadd.f32 %v711, %v774
        %v798 = vadd.f32 %v712, %v778
        %v799 = vadd.f32 %v713, %v766
        %v800 = vadd.f32 %v714, %v770
        %v801 = vadd.f32 %v715, %v774
        %v802 = vadd.f32 %v716, %v778
        %v803 = vadd.f32 %v717, %v766
        %v804 = vadd.f32 %v718, %v770
        %v805 = vadd.f32 %v719, %v774
        %v806 = vadd.f32 %v720, %v778
        %v807 = vadd.f32 %v721, %v766
        %v808 = vadd.f32 %v722, %v770
        %v809 = vadd.f32 %v723, %v774
        %v810 = vadd.f32 %v724, %v778
        %v811 = vadd.f32 %v725, %v766
        %v812 = vadd.f32 %v726, %v770
        %v813 = vadd.f32 %v727, %v774
        %v814 = vadd.f32 %v728, %v778
        %v815 = vadd.f32 %v729, %v766
        %v816 = vadd.f32 %v730, %v770
        %v817 = vadd.f32 %v731, %v774
        %v818 = vadd.f32 %v732, %v778
        %v819 = vadd.f32 %v733, %v766
        %v820 = vadd.f32 %v734, %v770
        %v821 = vadd.f32 %v735, %v774
        %v822 = vadd.f32 %v736, %v778
        %v823 = vadd.f32 %v737, %v766
        %v824 = vadd.f32 %v738, %v770
        %v825 = vadd.f32 %v739, %v774
        %v826 = vadd.f32 %v740, %v778
        %v827 = vadd.f32 %v741, %v766
        %v828 = vadd.f32 %v742, %v770
        %v829 = vadd.f32 %v743, %v774
        %v830 = vadd.f32 %v744, %v778
        %v831 = vadd.f32 %v745, %v766
        %v832 = vadd.f32 %v746, %v770
        %v833 = vadd.f32 %v747, %v774
        %v834 = vadd.f32 %v748, %v778
        %v835 = vadd.f32 %v749, %v766
        %v836 = vadd.f32 %v750, %v770
        %v837 = vadd.f32 %v751, %v774
        %v838 = vadd.f32 %v752, %v778
        %v839 = vadd.f32 %v753, %v766
        %v840 = vadd.f32 %v754, %v770
        %v841 = vadd.f32 %v755, %v774
        %v842 = vadd.f32 %v756, %v778
        %v843 = vadd.f32 %v757, %v766
        %v844 = vadd.f32 %v758, %v770
        %v845 = vadd.f32 %v759, %v774
        %v846 = vadd.f32 %v760, %v778
        %v847 = vmax.f32 %v783, 0.0
        %v848 = vmax.f32 %v784, 0.0
        %v849 = vmax.f32 %v785, 0.0
        %v850 = vmax.f32 %v786, 0.0
        %v851 = vmax.f32 %v787, 0.0
        %v852 = vmax.f32 %v788, 0.0
        %v853 = vmax.f32 %v789, 0.0
        %v854 = vmax.f32 %v790, 0.0
        %v855 = vmax.f32 %v791, 0.0
        %v856 = vmax.f32 %v792, 0.0
        %v857 = vmax.f32 %v793, 0.0
        %v858 = vmax.f32 %v794, 0.0
        %v859 = vmax.f32 %v795, 0.0
        %v860 = vmax.f32 %v796, 0.0
        %v861 = vmax.f32 %v797, 0.0
        %v862 = vmax.f32 %v798, 0.0
        %v863 = vmax.f32 %v799, 0.0
        %v864 = vmax.f32 %v800, 0.0
        %v865 = vmax.f32 %v801, 0.0
        %v866 = vmax.f32 %v802, 0.0
        %v867 = vmax.f32 %v803, 0.0
        %v868 = vmax.f32 %v804, 0.0
        %v869 = vmax.f32 %v805, 0.0
        %v870 = vmax.f32 %v806, 0.0
        %v871 = vmax.f32 %v807, 0.0
        %v872 = vmax.f32 %v808, 0.0
        %v873 = vmax.f32 %v809, 0.0
        %v874 = vmax.f32 %v810, 0.0
        %v875 = vmax.f32 %v811, 0.0
        %v876 = vmax.f32 %v812, 0.0
        %v877 = vmax.f32 %v813, 0.0
        %v878 = vmax.f32 %v814, 0.0
        %v879 = vmax.f32 %v815, 0.0
        %v880 = vmax.f32 %v816, 0.0
        %v881 = vmax.f32 %v817, 0.0
        %v882 = vmax.f32 %v818, 0.0
        %v883 = vmax.f32 %v819, 0.0
        %v884 = vmax.f32 %v820, 0.0
        %v885 = vmax.f32 %v821, 0.0
        %v886 = vmax.f32 %v822, 0.0
        %v887 = vmax.f32 %v823, 0.0
        %v888 = vmax.f32 %v824, 0.0
        %v889 = vmax.f32 %v825, 0.0
        %v890 = vmax.f32 %v826, 0.0
        %v891 = vmax.f32 %v827, 0.0
        %v892 = vmax.f32 %v828, 0.0
        %v893 = vmax.f32 %v829, 0.0
        %v894 = vmax.f32 %v830, 0.0
        %v895 = vmax.f32 %v831, 0.0
        %v896 = vmax.f32 %v832, 0.0
        %v897 = vmax.f32 %v833, 0.0
        %v898 = vmax.f32 %v834, 0.0
        %v899 = vmax.f32 %v835, 0.0
        %v900 = vmax.f32 %v836, 0.0
        %v901 = vmax.f32 %v837, 0.0
        %v902 = vmax.f32 %v838, 0.0
        %v903 = vmax.f32 %v839, 0.0
        %v904 = vmax.f32 %v840, 0.0
        %v905 = vmax.f32 %v841, 0.0
        %v906 = vmax.f32 %v842, 0.0
        %v907 = vmax.f32 %v843, 0.0
        %v908 = vmax.f32 %v844, 0.0
        %v909 = vmax.f32 %v845, 0.0
        %v910 = vmax.f32 %v846, 0.0
        %v911 = vpack.c.bf16 %v851, %v847
        %v912 = vpack.c.bf16 %v852, %v848
        %v913 = vpack.c.bf16 %v853, %v849
        %v914 = vpack.c.bf16 %v854, %v850
        %v915 = vpack.c.bf16 %v859, %v855
        %v916 = vpack.c.bf16 %v860, %v856
        %v917 = vpack.c.bf16 %v861, %v857
        %v918 = vpack.c.bf16 %v862, %v858
        %v919 = vpack.c.bf16 %v867, %v863
        %v920 = vpack.c.bf16 %v868, %v864
        %v921 = vpack.c.bf16 %v869, %v865
        %v922 = vpack.c.bf16 %v870, %v866
        %v923 = vpack.c.bf16 %v875, %v871
        %v924 = vpack.c.bf16 %v876, %v872
        %v925 = vpack.c.bf16 %v877, %v873
        %v926 = vpack.c.bf16 %v878, %v874
        %v927 = vpack.c.bf16 %v883, %v879
        %v928 = vpack.c.bf16 %v884, %v880
        %v929 = vpack.c.bf16 %v885, %v881
        %v930 = vpack.c.bf16 %v886, %v882
        %v931 = vpack.c.bf16 %v891, %v887
        %v932 = vpack.c.bf16 %v892, %v888
        %v933 = vpack.c.bf16 %v893, %v889
        %v934 = vpack.c.bf16 %v894, %v890
        %v935 = vpack.c.bf16 %v899, %v895
        %v936 = vpack.c.bf16 %v900, %v896
        %v937 = vpack.c.bf16 %v901, %v897
        %v938 = vpack.c.bf16 %v902, %v898
        %v939 = vpack.c.bf16 %v907, %v903
        %v940 = vpack.c.bf16 %v908, %v904
        %v941 = vpack.c.bf16 %v909, %v905
        %v942 = vpack.c.bf16 %v910, %v906
        %v943 = vld [vmem:[#allocation2] sm:$0xff]
        %v944 = vld [vmem:[#allocation2 + $0x8] sm:$0xff]
        %v945 = vld [vmem:[#allocation2 + $0x10] sm:$0xff]
        %v946 = vld [vmem:[#allocation2 + $0x18] sm:$0xff]
        %v947 = vld [vmem:[#allocation2 + $0x20] sm:$0xff]
        %v948 = vld [vmem:[#allocation2 + $0x28] sm:$0xff]
        %v949 = vld [vmem:[#allocation2 + $0x30] sm:$0xff]
        %v950 = vld [vmem:[#allocation2 + $0x38] sm:$0xff]
        %v951 = vld [vmem:[#allocation2 + $0x40] sm:$0xff]
        %v952 = vld [vmem:[#allocation2 + $0x48] sm:$0xff]
        %v953 = vld [vmem:[#allocation2 + $0x50] sm:$0xff]
        %v954 = vld [vmem:[#allocation2 + $0x58] sm:$0xff]
        %v955 = vld [vmem:[#allocation2 + $0x60] sm:$0xff]
        %v956 = vld [vmem:[#allocation2 + $0x68] sm:$0xff]
        %v957 = vld [vmem:[#allocation2 + $0x70] sm:$0xff]
        %v958 = vld [vmem:[#allocation2 + $0x78] sm:$0xff]
        %v959 = vld [vmem:[#allocation2 + $0x80] sm:$0xff]
        %v960 = vld [vmem:[#allocation2 + $0x88] sm:$0xff]
        %v961 = vld [vmem:[#allocation2 + $0x90] sm:$0xff]
        %v962 = vld [vmem:[#allocation2 + $0x98] sm:$0xff]
        %v963 = vld [vmem:[#allocation2 + $0xa0] sm:$0xff]
        %v964 = vld [vmem:[#allocation2 + $0xa8] sm:$0xff]
        %v965 = vld [vmem:[#allocation2 + $0xb0] sm:$0xff]
        %v966 = vld [vmem:[#allocation2 + $0xb8] sm:$0xff]
        %v967 = vld [vmem:[#allocation2 + $0xc0] sm:$0xff]
        %v968 = vld [vmem:[#allocation2 + $0xc8] sm:$0xff]
        %v969 = vld [vmem:[#allocation2 + $0xd0] sm:$0xff]
        %v970 = vld [vmem:[#allocation2 + $0xd8] sm:$0xff]
        %v971 = vld [vmem:[#allocation2 + $0xe0] sm:$0xff]
        %v972 = vld [vmem:[#allocation2 + $0xe8] sm:$0xff]
        %v973 = vld [vmem:[#allocation2 + $0xf0] sm:$0xff]
        %v974 = vld [vmem:[#allocation2 + $0xf8] sm:$0xff]
        %v975 = vld [vmem:[#allocation2 + $0x100] sm:$0xff]
        %v976 = vld [vmem:[#allocation2 + $0x108] sm:$0xff]
        %v977 = vld [vmem:[#allocation2 + $0x110] sm:$0xff]
        %v978 = vld [vmem:[#allocation2 + $0x118] sm:$0xff]
        %v979 = vld [vmem:[#allocation2 + $0x120] sm:$0xff]
        %v980 = vld [vmem:[#allocation2 + $0x128] sm:$0xff]
        %v981 = vld [vmem:[#allocation2 + $0x130] sm:$0xff]
        %v982 = vld [vmem:[#allocation2 + $0x138] sm:$0xff]
        %v983 = vld [vmem:[#allocation2 + $0x140] sm:$0xff]
        %v984 = vld [vmem:[#allocation2 + $0x148] sm:$0xff]
        %v985 = vld [vmem:[#allocation2 + $0x150] sm:$0xff]
        %v986 = vld [vmem:[#allocation2 + $0x158] sm:$0xff]
        %v987 = vld [vmem:[#allocation2 + $0x160] sm:$0xff]
        %v988 = vld [vmem:[#allocation2 + $0x168] sm:$0xff]
        %v989 = vld [vmem:[#allocation2 + $0x170] sm:$0xff]
        %v990 = vld [vmem:[#allocation2 + $0x178] sm:$0xff]
        %v991 = vld [vmem:[#allocation2 + $0x180] sm:$0xff]
        %v992 = vld [vmem:[#allocation2 + $0x188] sm:$0xff]
        %v993 = vld [vmem:[#allocation2 + $0x190] sm:$0xff]
        %v994 = vld [vmem:[#allocation2 + $0x198] sm:$0xff]
        %v995 = vld [vmem:[#allocation2 + $0x1a0] sm:$0xff]
        %v996 = vld [vmem:[#allocation2 + $0x1a8] sm:$0xff]
        %v997 = vld [vmem:[#allocation2 + $0x1b0] sm:$0xff]
        %v998 = vld [vmem:[#allocation2 + $0x1b8] sm:$0xff]
        %v999 = vld [vmem:[#allocation2 + $0x1c0] sm:$0xff]
        %v1000 = vld [vmem:[#allocation2 + $0x1c8] sm:$0xff]
        %v1001 = vld [vmem:[#allocation2 + $0x1d0] sm:$0xff]
        %v1002 = vld [vmem:[#allocation2 + $0x1d8] sm:$0xff]
        %v1003 = vld [vmem:[#allocation2 + $0x1e0] sm:$0xff]
        %v1004 = vld [vmem:[#allocation2 + $0x1e8] sm:$0xff]
        %v1005 = vld [vmem:[#allocation2 + $0x1f0] sm:$0xff]
        %v1006 = vld [vmem:[#allocation2 + $0x1f8] sm:$0xff]
        %v1007 = vld [vmem:[#allocation2 + $0x200] sm:$0xff]
        %v1008 = vld [vmem:[#allocation2 + $0x208] sm:$0xff]
        %v1009 = vld [vmem:[#allocation2 + $0x210] sm:$0xff]
        %v1010 = vld [vmem:[#allocation2 + $0x218] sm:$0xff]
        %v1011 = vld [vmem:[#allocation2 + $0x220] sm:$0xff]
        %v1012 = vld [vmem:[#allocation2 + $0x228] sm:$0xff]
        %v1013 = vld [vmem:[#allocation2 + $0x230] sm:$0xff]
        %v1014 = vld [vmem:[#allocation2 + $0x238] sm:$0xff]
        %v1015 = vld [vmem:[#allocation2 + $0x240] sm:$0xff]
        %v1016 = vld [vmem:[#allocation2 + $0x248] sm:$0xff]
        %v1017 = vld [vmem:[#allocation2 + $0x250] sm:$0xff]
        %v1018 = vld [vmem:[#allocation2 + $0x258] sm:$0xff]
        %v1019 = vld [vmem:[#allocation2 + $0x260] sm:$0xff]
        %v1020 = vld [vmem:[#allocation2 + $0x268] sm:$0xff]
        %v1021 = vld [vmem:[#allocation2 + $0x270] sm:$0xff]
        %v1022 = vld [vmem:[#allocation2 + $0x278] sm:$0xff]
        %v1023 = vld [vmem:[#allocation2 + $0x280] sm:$0xff]
        %v1024 = vld [vmem:[#allocation2 + $0x288] sm:$0xff]
        %v1025 = vld [vmem:[#allocation2 + $0x290] sm:$0xff]
        %v1026 = vld [vmem:[#allocation2 + $0x298] sm:$0xff]
        %v1027 = vld [vmem:[#allocation2 + $0x2a0] sm:$0xff]
        %v1028 = vld [vmem:[#allocation2 + $0x2a8] sm:$0xff]
        %v1029 = vld [vmem:[#allocation2 + $0x2b0] sm:$0xff]
        %v1030 = vld [vmem:[#allocation2 + $0x2b8] sm:$0xff]
        %v1031 = vld [vmem:[#allocation2 + $0x2c0] sm:$0xff]
        %v1032 = vld [vmem:[#allocation2 + $0x2c8] sm:$0xff]
        %v1033 = vld [vmem:[#allocation2 + $0x2d0] sm:$0xff]
        %v1034 = vld [vmem:[#allocation2 + $0x2d8] sm:$0xff]
        %v1035 = vld [vmem:[#allocation2 + $0x2e0] sm:$0xff]
        %v1036 = vld [vmem:[#allocation2 + $0x2e8] sm:$0xff]
        %v1037 = vld [vmem:[#allocation2 + $0x2f0] sm:$0xff]
        %v1038 = vld [vmem:[#allocation2 + $0x2f8] sm:$0xff]
        %v1039 = vld [vmem:[#allocation2 + $0x300] sm:$0xff]
        %v1040 = vld [vmem:[#allocation2 + $0x308] sm:$0xff]
        %v1041 = vld [vmem:[#allocation2 + $0x310] sm:$0xff]
        %v1042 = vld [vmem:[#allocation2 + $0x318] sm:$0xff]
        %v1043 = vld [vmem:[#allocation2 + $0x320] sm:$0xff]
        %v1044 = vld [vmem:[#allocation2 + $0x328] sm:$0xff]
        %v1045 = vld [vmem:[#allocation2 + $0x330] sm:$0xff]
        %v1046 = vld [vmem:[#allocation2 + $0x338] sm:$0xff]
        %v1047 = vld [vmem:[#allocation2 + $0x340] sm:$0xff]
        %v1048 = vld [vmem:[#allocation2 + $0x348] sm:$0xff]
        %v1049 = vld [vmem:[#allocation2 + $0x350] sm:$0xff]
        %v1050 = vld [vmem:[#allocation2 + $0x358] sm:$0xff]
        %v1051 = vld [vmem:[#allocation2 + $0x360] sm:$0xff]
        %v1052 = vld [vmem:[#allocation2 + $0x368] sm:$0xff]
        %v1053 = vld [vmem:[#allocation2 + $0x370] sm:$0xff]
        %v1054 = vld [vmem:[#allocation2 + $0x378] sm:$0xff]
        %v1055 = vld [vmem:[#allocation2 + $0x380] sm:$0xff]
        %v1056 = vld [vmem:[#allocation2 + $0x388] sm:$0xff]
        %v1057 = vld [vmem:[#allocation2 + $0x390] sm:$0xff]
        %v1058 = vld [vmem:[#allocation2 + $0x398] sm:$0xff]
        %v1059 = vld [vmem:[#allocation2 + $0x3a0] sm:$0xff]
        %v1060 = vld [vmem:[#allocation2 + $0x3a8] sm:$0xff]
        %v1061 = vld [vmem:[#allocation2 + $0x3b0] sm:$0xff]
        %v1062 = vld [vmem:[#allocation2 + $0x3b8] sm:$0xff]
        %v1063 = vld [vmem:[#allocation2 + $0x3c0] sm:$0xff]
        %v1064 = vld [vmem:[#allocation2 + $0x3c8] sm:$0xff]
        %v1065 = vld [vmem:[#allocation2 + $0x3d0] sm:$0xff]
        %v1066 = vld [vmem:[#allocation2 + $0x3d8] sm:$0xff]
        %v1067 = vld [vmem:[#allocation2 + $0x3e0] sm:$0xff]
        %v1068 = vld [vmem:[#allocation2 + $0x3e8] sm:$0xff]
        %v1069 = vld [vmem:[#allocation2 + $0x3f0] sm:$0xff]
        %v1070 = vld [vmem:[#allocation2 + $0x3f8] sm:$0xff]
        %v1071 = vld [vmem:[%s4] sm:$0xf]
        %v1073 = vlaneseq
        %v1074 = vshrl.u32 %v1073, 7
        %v1075 = vsub.s32 0, %v1074
        %v1076 = vrot.slane %v1071, %v1075
        %v1077 = vlaneseq
        %v1078 = vshrl.u32 %v1077, 7
        %v1079 = vsub.s32 1, %v1078
        %v1080 = vrot.slane %v1071, %v1079
        %v1081 = vlaneseq
        %v1082 = vshrl.u32 %v1081, 7
        %v1083 = vsub.s32 2, %v1082
        %v1084 = vrot.slane %v1071, %v1083
        %v1085 = vlaneseq
        %v1086 = vshrl.u32 %v1085, 7
        %v1087 = vsub.s32 3, %v1086
        %v1088 = vrot.slane %v1071, %v1087
        %v1221 = vunpack.c.l.b16 %v943
        %v1222 = vunpack.c.h.b16 %v943
        %v1223 = vunpack.c.l.b16 %v944
        %v1224 = vunpack.c.h.b16 %v944
        %v1225 = vunpack.c.l.b16 %v945
        %v1226 = vunpack.c.h.b16 %v945
        %v1227 = vunpack.c.l.b16 %v946
        %v1228 = vunpack.c.h.b16 %v946
        %v1229 = vunpack.c.l.b16 %v947
        %v1230 = vunpack.c.h.b16 %v947
        %v1231 = vunpack.c.l.b16 %v948
        %v1232 = vunpack.c.h.b16 %v948
        %v1233 = vunpack.c.l.b16 %v949
        %v1234 = vunpack.c.h.b16 %v949
        %v1235 = vunpack.c.l.b16 %v950
        %v1236 = vunpack.c.h.b16 %v950
        %v1237 = vunpack.c.l.b16 %v951
        %v1238 = vunpack.c.h.b16 %v951
        %v1239 = vunpack.c.l.b16 %v952
        %v1240 = vunpack.c.h.b16 %v952
        %v1241 = vunpack.c.l.b16 %v953
        %v1242 = vunpack.c.h.b16 %v953
        %v1243 = vunpack.c.l.b16 %v954
        %v1244 = vunpack.c.h.b16 %v954
        %v1245 = vunpack.c.l.b16 %v955
        %v1246 = vunpack.c.h.b16 %v955
        %v1247 = vunpack.c.l.b16 %v956
        %v1248 = vunpack.c.h.b16 %v956
        %v1249 = vunpack.c.l.b16 %v957
        %v1250 = vunpack.c.h.b16 %v957
        %v1251 = vunpack.c.l.b16 %v958
        %v1252 = vunpack.c.h.b16 %v958
        %v1253 = vunpack.c.l.b16 %v959
        %v1254 = vunpack.c.h.b16 %v959
        %v1255 = vunpack.c.l.b16 %v960
        %v1256 = vunpack.c.h.b16 %v960
        %v1257 = vunpack.c.l.b16 %v961
        %v1258 = vunpack.c.h.b16 %v961
        %v1259 = vunpack.c.l.b16 %v962
        %v1260 = vunpack.c.h.b16 %v962
        %v1261 = vunpack.c.l.b16 %v963
        %v1262 = vunpack.c.h.b16 %v963
        %v1263 = vunpack.c.l.b16 %v964
        %v1264 = vunpack.c.h.b16 %v964
        %v1265 = vunpack.c.l.b16 %v965
        %v1266 = vunpack.c.h.b16 %v965
        %v1267 = vunpack.c.l.b16 %v966
        %v1268 = vunpack.c.h.b16 %v966
        %v1269 = vunpack.c.l.b16 %v967
        %v1270 = vunpack.c.h.b16 %v967
        %v1271 = vunpack.c.l.b16 %v968
        %v1272 = vunpack.c.h.b16 %v968
        %v1273 = vunpack.c.l.b16 %v969
        %v1274 = vunpack.c.h.b16 %v969
        %v1275 = vunpack.c.l.b16 %v970
        %v1276 = vunpack.c.h.b16 %v970
        %v1277 = vunpack.c.l.b16 %v971
        %v1278 = vunpack.c.h.b16 %v971
        %v1279 = vunpack.c.l.b16 %v972
        %v1280 = vunpack.c.h.b16 %v972
        %v1281 = vunpack.c.l.b16 %v973
        %v1282 = vunpack.c.h.b16 %v973
        %v1283 = vunpack.c.l.b16 %v974
        %v1284 = vunpack.c.h.b16 %v974
        %v1285 = vunpack.c.l.b16 %v975
        %v1286 = vunpack.c.h.b16 %v975
        %v1287 = vunpack.c.l.b16 %v976
        %v1288 = vunpack.c.h.b16 %v976
        %v1289 = vunpack.c.l.b16 %v977
        %v1290 = vunpack.c.h.b16 %v977
        %v1291 = vunpack.c.l.b16 %v978
        %v1292 = vunpack.c.h.b16 %v978
        %v1293 = vunpack.c.l.b16 %v979
        %v1294 = vunpack.c.h.b16 %v979
        %v1295 = vunpack.c.l.b16 %v980
        %v1296 = vunpack.c.h.b16 %v980
        %v1297 = vunpack.c.l.b16 %v981
        %v1298 = vunpack.c.h.b16 %v981
        %v1299 = vunpack.c.l.b16 %v982
        %v1300 = vunpack.c.h.b16 %v982
        %v1301 = vunpack.c.l.b16 %v983
        %v1302 = vunpack.c.h.b16 %v983
        %v1303 = vunpack.c.l.b16 %v984
        %v1304 = vunpack.c.h.b16 %v984
        %v1305 = vunpack.c.l.b16 %v985
        %v1306 = vunpack.c.h.b16 %v985
        %v1307 = vunpack.c.l.b16 %v986
        %v1308 = vunpack.c.h.b16 %v986
        %v1309 = vunpack.c.l.b16 %v987
        %v1310 = vunpack.c.h.b16 %v987
        %v1311 = vunpack.c.l.b16 %v988
        %v1312 = vunpack.c.h.b16 %v988
        %v1313 = vunpack.c.l.b16 %v989
        %v1314 = vunpack.c.h.b16 %v989
        %v1315 = vunpack.c.l.b16 %v990
        %v1316 = vunpack.c.h.b16 %v990
        %v1317 = vunpack.c.l.b16 %v991
        %v1318 = vunpack.c.h.b16 %v991
        %v1319 = vunpack.c.l.b16 %v992
        %v1320 = vunpack.c.h.b16 %v992
        %v1321 = vunpack.c.l.b16 %v993
        %v1322 = vunpack.c.h.b16 %v993
        %v1323 = vunpack.c.l.b16 %v994
        %v1324 = vunpack.c.h.b16 %v994
        %v1325 = vunpack.c.l.b16 %v995
        %v1326 = vunpack.c.h.b16 %v995
        %v1327 = vunpack.c.l.b16 %v996
        %v1328 = vunpack.c.h.b16 %v996
        %v1329 = vunpack.c.l.b16 %v997
        %v1330 = vunpack.c.h.b16 %v997
        %v1331 = vunpack.c.l.b16 %v998
        %v1332 = vunpack.c.h.b16 %v998
        %v1333 = vunpack.c.l.b16 %v999
        %v1334 = vunpack.c.h.b16 %v999
        %v1335 = vunpack.c.l.b16 %v1000
        %v1336 = vunpack.c.h.b16 %v1000
        %v1337 = vunpack.c.l.b16 %v1001
        %v1338 = vunpack.c.h.b16 %v1001
        %v1339 = vunpack.c.l.b16 %v1002
        %v1340 = vunpack.c.h.b16 %v1002
        %v1341 = vunpack.c.l.b16 %v1003
        %v1342 = vunpack.c.h.b16 %v1003
        %v1343 = vunpack.c.l.b16 %v1004
        %v1344 = vunpack.c.h.b16 %v1004
        %v1345 = vunpack.c.l.b16 %v1005
        %v1346 = vunpack.c.h.b16 %v1005
        %v1347 = vunpack.c.l.b16 %v1006
        %v1348 = vunpack.c.h.b16 %v1006
        %v1349 = vunpack.c.l.b16 %v1007
        %v1350 = vunpack.c.h.b16 %v1007
        %v1351 = vunpack.c.l.b16 %v1008
        %v1352 = vunpack.c.h.b16 %v1008
        %v1353 = vunpack.c.l.b16 %v1009
        %v1354 = vunpack.c.h.b16 %v1009
        %v1355 = vunpack.c.l.b16 %v1010
        %v1356 = vunpack.c.h.b16 %v1010
        %v1357 = vunpack.c.l.b16 %v1011
        %v1358 = vunpack.c.h.b16 %v1011
        %v1359 = vunpack.c.l.b16 %v1012
        %v1360 = vunpack.c.h.b16 %v1012
        %v1361 = vunpack.c.l.b16 %v1013
        %v1362 = vunpack.c.h.b16 %v1013
        %v1363 = vunpack.c.l.b16 %v1014
        %v1364 = vunpack.c.h.b16 %v1014
        %v1365 = vunpack.c.l.b16 %v1015
        %v1366 = vunpack.c.h.b16 %v1015
        %v1367 = vunpack.c.l.b16 %v1016
        %v1368 = vunpack.c.h.b16 %v1016
        %v1369 = vunpack.c.l.b16 %v1017
        %v1370 = vunpack.c.h.b16 %v1017
        %v1371 = vunpack.c.l.b16 %v1018
        %v1372 = vunpack.c.h.b16 %v1018
        %v1373 = vunpack.c.l.b16 %v1019
        %v1374 = vunpack.c.h.b16 %v1019
        %v1375 = vunpack.c.l.b16 %v1020
        %v1376 = vunpack.c.h.b16 %v1020
        %v1377 = vunpack.c.l.b16 %v1021
        %v1378 = vunpack.c.h.b16 %v1021
        %v1379 = vunpack.c.l.b16 %v1022
        %v1380 = vunpack.c.h.b16 %v1022
        %v1381 = vunpack.c.l.b16 %v1023
        %v1382 = vunpack.c.h.b16 %v1023
        %v1383 = vunpack.c.l.b16 %v1024
        %v1384 = vunpack.c.h.b16 %v1024
        %v1385 = vunpack.c.l.b16 %v1025
        %v1386 = vunpack.c.h.b16 %v1025
        %v1387 = vunpack.c.l.b16 %v1026
        %v1388 = vunpack.c.h.b16 %v1026
        %v1389 = vunpack.c.l.b16 %v1027
        %v1390 = vunpack.c.h.b16 %v1027
        %v1391 = vunpack.c.l.b16 %v1028
        %v1392 = vunpack.c.h.b16 %v1028
        %v1393 = vunpack.c.l.b16 %v1029
        %v1394 = vunpack.c.h.b16 %v1029
        %v1395 = vunpack.c.l.b16 %v1030
        %v1396 = vunpack.c.h.b16 %v1030
        %v1397 = vunpack.c.l.b16 %v1031
        %v1398 = vunpack.c.h.b16 %v1031
        %v1399 = vunpack.c.l.b16 %v1032
        %v1400 = vunpack.c.h.b16 %v1032
        %v1401 = vunpack.c.l.b16 %v1033
        %v1402 = vunpack.c.h.b16 %v1033
        %v1403 = vunpack.c.l.b16 %v1034
        %v1404 = vunpack.c.h.b16 %v1034
        %v1405 = vunpack.c.l.b16 %v1035
        %v1406 = vunpack.c.h.b16 %v1035
        %v1407 = vunpack.c.l.b16 %v1036
        %v1408 = vunpack.c.h.b16 %v1036
        %v1409 = vunpack.c.l.b16 %v1037
        %v1410 = vunpack.c.h.b16 %v1037
        %v1411 = vunpack.c.l.b16 %v1038
        %v1412 = vunpack.c.h.b16 %v1038
        %v1413 = vunpack.c.l.b16 %v1039
        %v1414 = vunpack.c.h.b16 %v1039
        %v1415 = vunpack.c.l.b16 %v1040
        %v1416 = vunpack.c.h.b16 %v1040
        %v1417 = vunpack.c.l.b16 %v1041
        %v1418 = vunpack.c.h.b16 %v1041
        %v1419 = vunpack.c.l.b16 %v1042
        %v1420 = vunpack.c.h.b16 %v1042
        %v1421 = vunpack.c.l.b16 %v1043
        %v1422 = vunpack.c.h.b16 %v1043
        %v1423 = vunpack.c.l.b16 %v1044
        %v1424 = vunpack.c.h.b16 %v1044
        %v1425 = vunpack.c.l.b16 %v1045
        %v1426 = vunpack.c.h.b16 %v1045
        %v1427 = vunpack.c.l.b16 %v1046
        %v1428 = vunpack.c.h.b16 %v1046
        %v1429 = vunpack.c.l.b16 %v1047
        %v1430 = vunpack.c.h.b16 %v1047
        %v1431 = vunpack.c.l.b16 %v1048
        %v1432 = vunpack.c.h.b16 %v1048
        %v1433 = vunpack.c.l.b16 %v1049
        %v1434 = vunpack.c.h.b16 %v1049
        %v1435 = vunpack.c.l.b16 %v1050
        %v1436 = vunpack.c.h.b16 %v1050
        %v1437 = vunpack.c.l.b16 %v1051
        %v1438 = vunpack.c.h.b16 %v1051
        %v1439 = vunpack.c.l.b16 %v1052
        %v1440 = vunpack.c.h.b16 %v1052
        %v1441 = vunpack.c.l.b16 %v1053
        %v1442 = vunpack.c.h.b16 %v1053
        %v1443 = vunpack.c.l.b16 %v1054
        %v1444 = vunpack.c.h.b16 %v1054
        %v1445 = vunpack.c.l.b16 %v1055
        %v1446 = vunpack.c.h.b16 %v1055
        %v1447 = vunpack.c.l.b16 %v1056
        %v1448 = vunpack.c.h.b16 %v1056
        %v1449 = vunpack.c.l.b16 %v1057
        %v1450 = vunpack.c.h.b16 %v1057
        %v1451 = vunpack.c.l.b16 %v1058
        %v1452 = vunpack.c.h.b16 %v1058
        %v1453 = vunpack.c.l.b16 %v1059
        %v1454 = vunpack.c.h.b16 %v1059
        %v1455 = vunpack.c.l.b16 %v1060
        %v1456 = vunpack.c.h.b16 %v1060
        %v1457 = vunpack.c.l.b16 %v1061
        %v1458 = vunpack.c.h.b16 %v1061
        %v1459 = vunpack.c.l.b16 %v1062
        %v1460 = vunpack.c.h.b16 %v1062
        %v1461 = vunpack.c.l.b16 %v1063
        %v1462 = vunpack.c.h.b16 %v1063
        %v1463 = vunpack.c.l.b16 %v1064
        %v1464 = vunpack.c.h.b16 %v1064
        %v1465 = vunpack.c.l.b16 %v1065
        %v1466 = vunpack.c.h.b16 %v1065
        %v1467 = vunpack.c.l.b16 %v1066
        %v1468 = vunpack.c.h.b16 %v1066
        %v1469 = vunpack.c.l.b16 %v1067
        %v1470 = vunpack.c.h.b16 %v1067
        %v1471 = vunpack.c.l.b16 %v1068
        %v1472 = vunpack.c.h.b16 %v1068
        %v1473 = vunpack.c.l.b16 %v1069
        %v1474 = vunpack.c.h.b16 %v1069
        %v1475 = vunpack.c.l.b16 %v1070
        %v1476 = vunpack.c.h.b16 %v1070
        %v1477 = vpack.c.b16 %v1225, %v1221
        %v1478 = vpack.c.b16 %v1226, %v1222
        %v1479 = vpack.c.b16 %v1227, %v1223
        %v1480 = vpack.c.b16 %v1228, %v1224
        %v1481 = vpack.c.b16 %v1233, %v1229
        %v1482 = vpack.c.b16 %v1234, %v1230
        %v1483 = vpack.c.b16 %v1235, %v1231
        %v1484 = vpack.c.b16 %v1236, %v1232
        %v1485 = vpack.c.b16 %v1241, %v1237
        %v1486 = vpack.c.b16 %v1242, %v1238
        %v1487 = vpack.c.b16 %v1243, %v1239
        %v1488 = vpack.c.b16 %v1244, %v1240
        %v1489 = vpack.c.b16 %v1249, %v1245
        %v1490 = vpack.c.b16 %v1250, %v1246
        %v1491 = vpack.c.b16 %v1251, %v1247
        %v1492 = vpack.c.b16 %v1252, %v1248
        %v1493 = vpack.c.b16 %v1257, %v1253
        %v1494 = vpack.c.b16 %v1258, %v1254
        %v1495 = vpack.c.b16 %v1259, %v1255
        %v1496 = vpack.c.b16 %v1260, %v1256
        %v1497 = vpack.c.b16 %v1265, %v1261
        %v1498 = vpack.c.b16 %v1266, %v1262
        %v1499 = vpack.c.b16 %v1267, %v1263
        %v1500 = vpack.c.b16 %v1268, %v1264
        %v1501 = vpack.c.b16 %v1273, %v1269
        %v1502 = vpack.c.b16 %v1274, %v1270
        %v1503 = vpack.c.b16 %v1275, %v1271
        %v1504 = vpack.c.b16 %v1276, %v1272
        %v1505 = vpack.c.b16 %v1281, %v1277
        %v1506 = vpack.c.b16 %v1282, %v1278
        %v1507 = vpack.c.b16 %v1283, %v1279
        %v1508 = vpack.c.b16 %v1284, %v1280
        %v1509 = vpack.c.b16 %v1289, %v1285
        %v1510 = vpack.c.b16 %v1290, %v1286
        %v1511 = vpack.c.b16 %v1291, %v1287
        %v1512 = vpack.c.b16 %v1292, %v1288
        %v1513 = vpack.c.b16 %v1297, %v1293
        %v1514 = vpack.c.b16 %v1298, %v1294
        %v1515 = vpack.c.b16 %v1299, %v1295
        %v1516 = vpack.c.b16 %v1300, %v1296
        %v1517 = vpack.c.b16 %v1305, %v1301
        %v1518 = vpack.c.b16 %v1306, %v1302
        %v1519 = vpack.c.b16 %v1307, %v1303
        %v1520 = vpack.c.b16 %v1308, %v1304
        %v1521 = vpack.c.b16 %v1313, %v1309
        %v1522 = vpack.c.b16 %v1314, %v1310
        %v1523 = vpack.c.b16 %v1315, %v1311
        %v1524 = vpack.c.b16 %v1316, %v1312
        %v1525 = vpack.c.b16 %v1321, %v1317
        %v1526 = vpack.c.b16 %v1322, %v1318
        %v1527 = vpack.c.b16 %v1323, %v1319
        %v1528 = vpack.c.b16 %v1324, %v1320
        %v1529 = vpack.c.b16 %v1329, %v1325
        %v1530 = vpack.c.b16 %v1330, %v1326
        %v1531 = vpack.c.b16 %v1331, %v1327
        %v1532 = vpack.c.b16 %v1332, %v1328
        %v1533 = vpack.c.b16 %v1337, %v1333
        %v1534 = vpack.c.b16 %v1338, %v1334
        %v1535 = vpack.c.b16 %v1339, %v1335
        %v1536 = vpack.c.b16 %v1340, %v1336
        %v1537 = vpack.c.b16 %v1345, %v1341
        %v1538 = vpack.c.b16 %v1346, %v1342
        %v1539 = vpack.c.b16 %v1347, %v1343
        %v1540 = vpack.c.b16 %v1348, %v1344
        %v1541 = vpack.c.b16 %v1353, %v1349
        %v1542 = vpack.c.b16 %v1354, %v1350
        %v1543 = vpack.c.b16 %v1355, %v1351
        %v1544 = vpack.c.b16 %v1356, %v1352
        %v1545 = vpack.c.b16 %v1361, %v1357
        %v1546 = vpack.c.b16 %v1362, %v1358
        %v1547 = vpack.c.b16 %v1363, %v1359
        %v1548 = vpack.c.b16 %v1364, %v1360
        %v1549 = vpack.c.b16 %v1369, %v1365
        %v1550 = vpack.c.b16 %v1370, %v1366
        %v1551 = vpack.c.b16 %v1371, %v1367
        %v1552 = vpack.c.b16 %v1372, %v1368
        %v1553 = vpack.c.b16 %v1377, %v1373
        %v1554 = vpack.c.b16 %v1378, %v1374
        %v1555 = vpack.c.b16 %v1379, %v1375
        %v1556 = vpack.c.b16 %v1380, %v1376
        %v1557 = vpack.c.b16 %v1385, %v1381
        %v1558 = vpack.c.b16 %v1386, %v1382
        %v1559 = vpack.c.b16 %v1387, %v1383
        %v1560 = vpack.c.b16 %v1388, %v1384
        %v1561 = vpack.c.b16 %v1393, %v1389
        %v1562 = vpack.c.b16 %v1394, %v1390
        %v1563 = vpack.c.b16 %v1395, %v1391
        %v1564 = vpack.c.b16 %v1396, %v1392
        %v1565 = vpack.c.b16 %v1401, %v1397
        %v1566 = vpack.c.b16 %v1402, %v1398
        %v1567 = vpack.c.b16 %v1403, %v1399
        %v1568 = vpack.c.b16 %v1404, %v1400
        %v1569 = vpack.c.b16 %v1409, %v1405
        %v1570 = vpack.c.b16 %v1410, %v1406
        %v1571 = vpack.c.b16 %v1411, %v1407
        %v1572 = vpack.c.b16 %v1412, %v1408
        %v1573 = vpack.c.b16 %v1417, %v1413
        %v1574 = vpack.c.b16 %v1418, %v1414
        %v1575 = vpack.c.b16 %v1419, %v1415
        %v1576 = vpack.c.b16 %v1420, %v1416
        %v1577 = vpack.c.b16 %v1425, %v1421
        %v1578 = vpack.c.b16 %v1426, %v1422
        %v1579 = vpack.c.b16 %v1427, %v1423
        %v1580 = vpack.c.b16 %v1428, %v1424
        %v1581 = vpack.c.b16 %v1433, %v1429
        %v1582 = vpack.c.b16 %v1434, %v1430
        %v1583 = vpack.c.b16 %v1435, %v1431
        %v1584 = vpack.c.b16 %v1436, %v1432
        %v1585 = vpack.c.b16 %v1441, %v1437
        %v1586 = vpack.c.b16 %v1442, %v1438
        %v1587 = vpack.c.b16 %v1443, %v1439
        %v1588 = vpack.c.b16 %v1444, %v1440
        %v1589 = vpack.c.b16 %v1449, %v1445
        %v1590 = vpack.c.b16 %v1450, %v1446
        %v1591 = vpack.c.b16 %v1451, %v1447
        %v1592 = vpack.c.b16 %v1452, %v1448
        %v1593 = vpack.c.b16 %v1457, %v1453
        %v1594 = vpack.c.b16 %v1458, %v1454
        %v1595 = vpack.c.b16 %v1459, %v1455
        %v1596 = vpack.c.b16 %v1460, %v1456
        %v1597 = vpack.c.b16 %v1465, %v1461
        %v1598 = vpack.c.b16 %v1466, %v1462
        %v1599 = vpack.c.b16 %v1467, %v1463
        %v1600 = vpack.c.b16 %v1468, %v1464
        %v1601 = vpack.c.b16 %v1473, %v1469
        %v1602 = vpack.c.b16 %v1474, %v1470
        %v1603 = vpack.c.b16 %v1475, %v1471
        %v1604 = vpack.c.b16 %v1476, %v1472
        %1733 = vmatprep.subr.bf16.mxu0 %v1478
        %1734 = vmatpush1.bf16.msra.mxu0 %v1477
        %1735 = vmatprep.subr.bf16.mxu0 %v1482
        %1736 = vmatpush1.bf16.msra.mxu0 %v1481
        %1737 = vmatprep.subr.bf16.mxu0 %v1486
        %1738 = vmatpush1.bf16.msra.mxu0 %v1485
        %1739 = vmatprep.subr.bf16.mxu0 %v1490
        %1740 = vmatpush1.bf16.msra.mxu0 %v1489
        %1741 = vmatprep.subr.bf16.mxu0 %v1494
        %1742 = vmatpush1.bf16.msra.mxu0 %v1493
        %1743 = vmatprep.subr.bf16.mxu0 %v1498
        %1744 = vmatpush1.bf16.msra.mxu0 %v1497
        %1745 = vmatprep.subr.bf16.mxu0 %v1502
        %1746 = vmatpush1.bf16.msra.mxu0 %v1501
        %1747 = vmatprep.subr.bf16.mxu0 %v1506
        %1748 = vmatpush1.bf16.msra.mxu0 %v1505
        %1749 = vmatprep.subr.bf16.mxu0 %v1510
        %1750 = vmatpush1.bf16.msra.mxu0 %v1509
        %1751 = vmatprep.subr.bf16.mxu0 %v1514
        %1752 = vmatpush1.bf16.msra.mxu0 %v1513
        %1753 = vmatprep.subr.bf16.mxu0 %v1518
        %1754 = vmatpush1.bf16.msra.mxu0 %v1517
        %1755 = vmatprep.subr.bf16.mxu0 %v1522
        %1756 = vmatpush1.bf16.msra.mxu0 %v1521
        %1757 = vmatprep.subr.bf16.mxu0 %v1526
        %1758 = vmatpush1.bf16.msra.mxu0 %v1525
        %1759 = vmatprep.subr.bf16.mxu0 %v1530
        %1760 = vmatpush1.bf16.msra.mxu0 %v1529
        %1761 = vmatprep.subr.bf16.mxu0 %v1534
        %1762 = vmatpush1.bf16.msra.mxu0 %v1533
        %1763 = vmatprep.subr.bf16.mxu0 %v1538
        %1764 = vmatpush1.bf16.msra.mxu0 %v1537
        %1765 = vmatprep.mubr.bf16.mxu0 %v912
        %1766 = vmatmul.mubr.bf16.gmra.mrb[0].mxu0 %v911
        %v1767 = vpop.f32.mrb[0].mxu0
        %v1768 = vadd.f32 %v1076, %v1767
        %v1769 = vpop.f32.mrb[0].mxu0
        %v1770 = vadd.f32 %v1080, %v1769
        %v1771 = vpop.f32.mrb[0].mxu0
        %v1772 = vadd.f32 %v1076, %v1771
        %v1773 = vpop.f32.mrb[0].mxu0
        %v1774 = vadd.f32 %v1080, %v1773
        %1775 = vmatprep.mubr.bf16.mxu0 %v916
        %1776 = vmatmul.mubr.bf16.gmra.mrb[0].mxu0 %v915
        %v1777 = vpop.f32.mrb[0].mxu0
        %v1778 = vadd.f32 %v1076, %v1777
        %v1779 = vpop.f32.mrb[0].mxu0
        %v1780 = vadd.f32 %v1080, %v1779
        %v1781 = vpop.f32.mrb[0].mxu0
        %v1782 = vadd.f32 %v1076, %v1781
        %v1783 = vpop.f32.mrb[0].mxu0
        %v1784 = vadd.f32 %v1080, %v1783
        %1785 = vmatprep.mubr.bf16.mxu0 %v920
        %1786 = vmatmul.mubr.bf16.gmra.mrb[0].mxu0 %v919
        %v1787 = vpop.f32.mrb[0].mxu0
        %v1788 = vadd.f32 %v1076, %v1787
        %v1789 = vpop.f32.mrb[0].mxu0
        %v1790 = vadd.f32 %v1080, %v1789
        %v1791 = vpop.f32.mrb[0].mxu0
        %v1792 = vadd.f32 %v1076, %v1791
        %v1793 = vpop.f32.mrb[0].mxu0
        %v1794 = vadd.f32 %v1080, %v1793
        %1795 = vmatprep.mubr.bf16.mxu0 %v924
        %1796 = vmatmul.mubr.bf16.gmra.mrb[0].mxu0 %v923
        %v1797 = vpop.f32.mrb[0].mxu0
        %v1798 = vadd.f32 %v1076, %v1797
        %v1799 = vpop.f32.mrb[0].mxu0
        %v1800 = vadd.f32 %v1080, %v1799
        %v1801 = vpop.f32.mrb[0].mxu0
        %v1802 = vadd.f32 %v1076, %v1801
        %v1803 = vpop.f32.mrb[0].mxu0
        %v1804 = vadd.f32 %v1080, %v1803
        %1805 = vmatprep.mubr.bf16.mxu0 %v928
        %1806 = vmatmul.mubr.bf16.gmra.mrb[0].mxu0 %v927
        %v1807 = vpop.f32.mrb[0].mxu0
        %v1808 = vadd.f32 %v1076, %v1807
        %v1809 = vpop.f32.mrb[0].mxu0
        %v1810 = vadd.f32 %v1080, %v1809
        %v1811 = vpop.f32.mrb[0].mxu0
        %v1812 = vadd.f32 %v1076, %v1811
        %v1813 = vpop.f32.mrb[0].mxu0
        %v1814 = vadd.f32 %v1080, %v1813
        %1815 = vmatprep.mubr.bf16.mxu0 %v932
        %1816 = vmatmul.mubr.bf16.gmra.mrb[0].mxu0 %v931
        %v1817 = vpop.f32.mrb[0].mxu0
        %v1818 = vadd.f32 %v1076, %v1817
        %v1819 = vpop.f32.mrb[0].mxu0
        %v1820 = vadd.f32 %v1080, %v1819
        %v1821 = vpop.f32.mrb[0].mxu0
        %v1822 = vadd.f32 %v1076, %v1821
        %v1823 = vpop.f32.mrb[0].mxu0
        %v1824 = vadd.f32 %v1080, %v1823
        %1825 = vmatprep.mubr.bf16.mxu0 %v936
        %1826 = vmatmul.mubr.bf16.gmra.mrb[0].mxu0 %v935
        %v1827 = vpop.f32.mrb[0].mxu0
        %v1828 = vadd.f32 %v1076, %v1827
        %v1829 = vpop.f32.mrb[0].mxu0
        %v1830 = vadd.f32 %v1080, %v1829
        %v1831 = vpop.f32.mrb[0].mxu0
        %v1832 = vadd.f32 %v1076, %v1831
        %v1833 = vpop.f32.mrb[0].mxu0
        %v1834 = vadd.f32 %v1080, %v1833
        %1835 = vmatprep.mubr.bf16.mxu0 %v940
        %1836 = vmatmul.mubr.bf16.gmra.mrb[0].mxu0 %v939
        %v1837 = vpop.f32.mrb[0].mxu0
        %v1838 = vadd.f32 %v1076, %v1837
        %v1839 = vpop.f32.mrb[0].mxu0
        %v1840 = vadd.f32 %v1080, %v1839
        %v1841 = vpop.f32.mrb[0].mxu0
        %v1842 = vadd.f32 %v1076, %v1841
        %v1843 = vpop.f32.mrb[0].mxu0
        %v1844 = vadd.f32 %v1080, %v1843
        %1845 = vdwg.mxu0
        %1846 = vmatprep.subr.bf16.mxu0 %v1542
        %1847 = vmatpush1.bf16.msra.mxu0 %v1541
        %1848 = vmatprep.subr.bf16.mxu0 %v1546
        %1849 = vmatpush1.bf16.msra.mxu0 %v1545
        %1850 = vmatprep.subr.bf16.mxu0 %v1550
        %1851 = vmatpush1.bf16.msra.mxu0 %v1549
        %1852 = vmatprep.subr.bf16.mxu0 %v1554
        %1853 = vmatpush1.bf16.msra.mxu0 %v1553
        %1854 = vmatprep.subr.bf16.mxu0 %v1558
        %1855 = vmatpush1.bf16.msra.mxu0 %v1557
        %1856 = vmatprep.subr.bf16.mxu0 %v1562
        %1857 = vmatpush1.bf16.msra.mxu0 %v1561
        %1858 = vmatprep.subr.bf16.mxu0 %v1566
        %1859 = vmatpush1.bf16.msra.mxu0 %v1565
        %1860 = vmatprep.subr.bf16.mxu0 %v1570
        %1861 = vmatpush1.bf16.msra.mxu0 %v1569
        %1862 = vmatprep.subr.bf16.mxu0 %v1574
        %1863 = vmatpush1.bf16.msra.mxu0 %v1573
        %1864 = vmatprep.subr.bf16.mxu0 %v1578
        %1865 = vmatpush1.bf16.msra.mxu0 %v1577
        %1866 = vmatprep.subr.bf16.mxu0 %v1582
        %1867 = vmatpush1.bf16.msra.mxu0 %v1581
        %1868 = vmatprep.subr.bf16.mxu0 %v1586
        %1869 = vmatpush1.bf16.msra.mxu0 %v1585
        %1870 = vmatprep.subr.bf16.mxu0 %v1590
        %1871 = vmatpush1.bf16.msra.mxu0 %v1589
        %1872 = vmatprep.subr.bf16.mxu0 %v1594
        %1873 = vmatpush1.bf16.msra.mxu0 %v1593
        %1874 = vmatprep.subr.bf16.mxu0 %v1598
        %1875 = vmatpush1.bf16.msra.mxu0 %v1597
        %1876 = vmatprep.subr.bf16.mxu0 %v1602
        %1877 = vmatpush1.bf16.msra.mxu0 %v1601
        %1878 = vmatprep.mubr.bf16.mxu0 %v914
        %1879 = vmatmul.mubr.bf16.gmra.mrb[0].mxu0 %v913
        %v1880 = vpop.f32.mrb[0].mxu0
        %v1881 = vadd.f32 %v1768, %v1880
        %v1882 = vpop.f32.mrb[0].mxu0
        %v1883 = vadd.f32 %v1770, %v1882
        %v1884 = vpop.f32.mrb[0].mxu0
        %v1885 = vadd.f32 %v1772, %v1884
        %v1886 = vpop.f32.mrb[0].mxu0
        %v1887 = vadd.f32 %v1774, %v1886
        %1888 = vmatprep.mubr.bf16.mxu0 %v918
        %1889 = vmatmul.mubr.bf16.gmra.mrb[0].mxu0 %v917
        %v1890 = vpop.f32.mrb[0].mxu0
        %v1891 = vadd.f32 %v1778, %v1890
        %v1892 = vpop.f32.mrb[0].mxu0
        %v1893 = vadd.f32 %v1780, %v1892
        %v1894 = vpop.f32.mrb[0].mxu0
        %v1895 = vadd.f32 %v1782, %v1894
        %v1896 = vpop.f32.mrb[0].mxu0
        %v1897 = vadd.f32 %v1784, %v1896
        %1898 = vmatprep.mubr.bf16.mxu0 %v922
        %1899 = vmatmul.mubr.bf16.gmra.mrb[0].mxu0 %v921
        %v1900 = vpop.f32.mrb[0].mxu0
        %v1901 = vadd.f32 %v1788, %v1900
        %v1902 = vpop.f32.mrb[0].mxu0
        %v1903 = vadd.f32 %v1790, %v1902
        %v1904 = vpop.f32.mrb[0].mxu0
        %v1905 = vadd.f32 %v1792, %v1904
        %v1906 = vpop.f32.mrb[0].mxu0
        %v1907 = vadd.f32 %v1794, %v1906
        %1908 = vmatprep.mubr.bf16.mxu0 %v926
        %1909 = vmatmul.mubr.bf16.gmra.mrb[0].mxu0 %v925
        %v1910 = vpop.f32.mrb[0].mxu0
        %v1911 = vadd.f32 %v1798, %v1910
        %v1912 = vpop.f32.mrb[0].mxu0
        %v1913 = vadd.f32 %v1800, %v1912
        %v1914 = vpop.f32.mrb[0].mxu0
        %v1915 = vadd.f32 %v1802, %v1914
        %v1916 = vpop.f32.mrb[0].mxu0
        %v1917 = vadd.f32 %v1804, %v1916
        %1918 = vmatprep.mubr.bf16.mxu0 %v930
        %1919 = vmatmul.mubr.bf16.gmra.mrb[0].mxu0 %v929
        %v1920 = vpop.f32.mrb[0].mxu0
        %v1921 = vadd.f32 %v1808, %v1920
        %v1922 = vpop.f32.mrb[0].mxu0
        %v1923 = vadd.f32 %v1810, %v1922
        %v1924 = vpop.f32.mrb[0].mxu0
        %v1925 = vadd.f32 %v1812, %v1924
        %v1926 = vpop.f32.mrb[0].mxu0
        %v1927 = vadd.f32 %v1814, %v1926
        %1928 = vmatprep.mubr.bf16.mxu0 %v934
        %1929 = vmatmul.mubr.bf16.gmra.mrb[0].mxu0 %v933
        %v1930 = vpop.f32.mrb[0].mxu0
        %v1931 = vadd.f32 %v1818, %v1930
        %v1932 = vpop.f32.mrb[0].mxu0
        %v1933 = vadd.f32 %v1820, %v1932
        %v1934 = vpop.f32.mrb[0].mxu0
        %v1935 = vadd.f32 %v1822, %v1934
        %v1936 = vpop.f32.mrb[0].mxu0
        %v1937 = vadd.f32 %v1824, %v1936
        %1938 = vmatprep.mubr.bf16.mxu0 %v938
        %1939 = vmatmul.mubr.bf16.gmra.mrb[0].mxu0 %v937
        %v1940 = vpop.f32.mrb[0].mxu0
        %v1941 = vadd.f32 %v1828, %v1940
        %v1942 = vpop.f32.mrb[0].mxu0
        %v1943 = vadd.f32 %v1830, %v1942
        %v1944 = vpop.f32.mrb[0].mxu0
        %v1945 = vadd.f32 %v1832, %v1944
        %v1946 = vpop.f32.mrb[0].mxu0
        %v1947 = vadd.f32 %v1834, %v1946
        %1948 = vmatprep.mubr.bf16.mxu0 %v942
        %1949 = vmatmul.mubr.bf16.gmra.mrb[0].mxu0 %v941
        %v1950 = vpop.f32.mrb[0].mxu0
        %v1951 = vadd.f32 %v1838, %v1950
        %v1952 = vpop.f32.mrb[0].mxu0
        %v1953 = vadd.f32 %v1840, %v1952
        %v1954 = vpop.f32.mrb[0].mxu0
        %v1955 = vadd.f32 %v1842, %v1954
        %v1956 = vpop.f32.mrb[0].mxu0
        %v1957 = vadd.f32 %v1844, %v1956
        %1958 = vdwg.mxu0
        %1959 = vmatprep.subr.bf16.mxu0 %v1480
        %1960 = vmatpush1.bf16.msra.mxu0 %v1479
        %1961 = vmatprep.subr.bf16.mxu0 %v1484
        %1962 = vmatpush1.bf16.msra.mxu0 %v1483
        %1963 = vmatprep.subr.bf16.mxu0 %v1488
        %1964 = vmatpush1.bf16.msra.mxu0 %v1487
        %1965 = vmatprep.subr.bf16.mxu0 %v1492
        %1966 = vmatpush1.bf16.msra.mxu0 %v1491
        %1967 = vmatprep.subr.bf16.mxu0 %v1496
        %1968 = vmatpush1.bf16.msra.mxu0 %v1495
        %1969 = vmatprep.subr.bf16.mxu0 %v1500
        %1970 = vmatpush1.bf16.msra.mxu0 %v1499
        %1971 = vmatprep.subr.bf16.mxu0 %v1504
        %1972 = vmatpush1.bf16.msra.mxu0 %v1503
        %1973 = vmatprep.subr.bf16.mxu0 %v1508
        %1974 = vmatpush1.bf16.msra.mxu0 %v1507
        %1975 = vmatprep.subr.bf16.mxu0 %v1512
        %1976 = vmatpush1.bf16.msra.mxu0 %v1511
        %1977 = vmatprep.subr.bf16.mxu0 %v1516
        %1978 = vmatpush1.bf16.msra.mxu0 %v1515
        %1979 = vmatprep.subr.bf16.mxu0 %v1520
        %1980 = vmatpush1.bf16.msra.mxu0 %v1519
        %1981 = vmatprep.subr.bf16.mxu0 %v1524
        %1982 = vmatpush1.bf16.msra.mxu0 %v1523
        %1983 = vmatprep.subr.bf16.mxu0 %v1528
        %1984 = vmatpush1.bf16.msra.mxu0 %v1527
        %1985 = vmatprep.subr.bf16.mxu0 %v1532
        %1986 = vmatpush1.bf16.msra.mxu0 %v1531
        %1987 = vmatprep.subr.bf16.mxu0 %v1536
        %1988 = vmatpush1.bf16.msra.mxu0 %v1535
        %1989 = vmatprep.subr.bf16.mxu0 %v1540
        %1990 = vmatpush1.bf16.msra.mxu0 %v1539
        %1991 = vmatprep.mubr.bf16.mxu0 %v912
        %1992 = vmatmul.mubr.bf16.gmra.mrb[0].mxu0 %v911
        %v1993 = vpop.f32.mrb[0].mxu0
        %v1994 = vadd.f32 %v1084, %v1993
        %v1995 = vpop.f32.mrb[0].mxu0
        %v1996 = vadd.f32 %v1088, %v1995
        %v1997 = vpop.f32.mrb[0].mxu0
        %v1998 = vadd.f32 %v1084, %v1997
        %v1999 = vpop.f32.mrb[0].mxu0
        %v2000 = vadd.f32 %v1088, %v1999
        %2001 = vmatprep.mubr.bf16.mxu0 %v916
        %2002 = vmatmul.mubr.bf16.gmra.mrb[0].mxu0 %v915
        %v2003 = vpop.f32.mrb[0].mxu0
        %v2004 = vadd.f32 %v1084, %v2003
        %v2005 = vpop.f32.mrb[0].mxu0
        %v2006 = vadd.f32 %v1088, %v2005
        %v2007 = vpop.f32.mrb[0].mxu0
        %v2008 = vadd.f32 %v1084, %v2007
        %v2009 = vpop.f32.mrb[0].mxu0
        %v2010 = vadd.f32 %v1088, %v2009
        %2011 = vmatprep.mubr.bf16.mxu0 %v920
        %2012 = vmatmul.mubr.bf16.gmra.mrb[0].mxu0 %v919
        %v2013 = vpop.f32.mrb[0].mxu0
        %v2014 = vadd.f32 %v1084, %v2013
        %v2015 = vpop.f32.mrb[0].mxu0
        %v2016 = vadd.f32 %v1088, %v2015
        %v2017 = vpop.f32.mrb[0].mxu0
        %v2018 = vadd.f32 %v1084, %v2017
        %v2019 = vpop.f32.mrb[0].mxu0
        %v2020 = vadd.f32 %v1088, %v2019
        %2021 = vmatprep.mubr.bf16.mxu0 %v924
        %2022 = vmatmul.mubr.bf16.gmra.mrb[0].mxu0 %v923
        %v2023 = vpop.f32.mrb[0].mxu0
        %v2024 = vadd.f32 %v1084, %v2023
        %v2025 = vpop.f32.mrb[0].mxu0
        %v2026 = vadd.f32 %v1088, %v2025
        %v2027 = vpop.f32.mrb[0].mxu0
        %v2028 = vadd.f32 %v1084, %v2027
        %v2029 = vpop.f32.mrb[0].mxu0
        %v2030 = vadd.f32 %v1088, %v2029
        %2031 = vmatprep.mubr.bf16.mxu0 %v928
        %2032 = vmatmul.mubr.bf16.gmra.mrb[0].mxu0 %v927
        %v2033 = vpop.f32.mrb[0].mxu0
        %v2034 = vadd.f32 %v1084, %v2033
        %v2035 = vpop.f32.mrb[0].mxu0
        %v2036 = vadd.f32 %v1088, %v2035
        %v2037 = vpop.f32.mrb[0].mxu0
        %v2038 = vadd.f32 %v1084, %v2037
        %v2039 = vpop.f32.mrb[0].mxu0
        %v2040 = vadd.f32 %v1088, %v2039
        %2041 = vmatprep.mubr.bf16.mxu0 %v932
        %2042 = vmatmul.mubr.bf16.gmra.mrb[0].mxu0 %v931
        %v2043 = vpop.f32.mrb[0].mxu0
        %v2044 = vadd.f32 %v1084, %v2043
        %v2045 = vpop.f32.mrb[0].mxu0
        %v2046 = vadd.f32 %v1088, %v2045
        %v2047 = vpop.f32.mrb[0].mxu0
        %v2048 = vadd.f32 %v1084, %v2047
        %v2049 = vpop.f32.mrb[0].mxu0
        %v2050 = vadd.f32 %v1088, %v2049
        %2051 = vmatprep.mubr.bf16.mxu0 %v936
        %2052 = vmatmul.mubr.bf16.gmra.mrb[0].mxu0 %v935
        %v2053 = vpop.f32.mrb[0].mxu0
        %v2054 = vadd.f32 %v1084, %v2053
        %v2055 = vpop.f32.mrb[0].mxu0
        %v2056 = vadd.f32 %v1088, %v2055
        %v2057 = vpop.f32.mrb[0].mxu0
        %v2058 = vadd.f32 %v1084, %v2057
        %v2059 = vpop.f32.mrb[0].mxu0
        %v2060 = vadd.f32 %v1088, %v2059
        %2061 = vmatprep.mubr.bf16.mxu0 %v940
        %2062 = vmatmul.mubr.bf16.gmra.mrb[0].mxu0 %v939
        %v2063 = vpop.f32.mrb[0].mxu0
        %v2064 = vadd.f32 %v1084, %v2063
        %v2065 = vpop.f32.mrb[0].mxu0
        %v2066 = vadd.f32 %v1088, %v2065
        %v2067 = vpop.f32.mrb[0].mxu0
        %v2068 = vadd.f32 %v1084, %v2067
        %v2069 = vpop.f32.mrb[0].mxu0
        %v2070 = vadd.f32 %v1088, %v2069
        %2071 = vdwg.mxu0
        %2072 = vmatprep.subr.bf16.mxu0 %v1544
        %2073 = vmatpush1.bf16.msra.mxu0 %v1543
        %2074 = vmatprep.subr.bf16.mxu0 %v1548
        %2075 = vmatpush1.bf16.msra.mxu0 %v1547
        %2076 = vmatprep.subr.bf16.mxu0 %v1552
        %2077 = vmatpush1.bf16.msra.mxu0 %v1551
        %2078 = vmatprep.subr.bf16.mxu0 %v1556
        %2079 = vmatpush1.bf16.msra.mxu0 %v1555
        %2080 = vmatprep.subr.bf16.mxu0 %v1560
        %2081 = vmatpush1.bf16.msra.mxu0 %v1559
        %2082 = vmatprep.subr.bf16.mxu0 %v1564
        %2083 = vmatpush1.bf16.msra.mxu0 %v1563
        %2084 = vmatprep.subr.bf16.mxu0 %v1568
        %2085 = vmatpush1.bf16.msra.mxu0 %v1567
        %2086 = vmatprep.subr.bf16.mxu0 %v1572
        %2087 = vmatpush1.bf16.msra.mxu0 %v1571
        %2088 = vmatprep.subr.bf16.mxu0 %v1576
        %2089 = vmatpush1.bf16.msra.mxu0 %v1575
        %2090 = vmatprep.subr.bf16.mxu0 %v1580
        %2091 = vmatpush1.bf16.msra.mxu0 %v1579
        %2092 = vmatprep.subr.bf16.mxu0 %v1584
        %2093 = vmatpush1.bf16.msra.mxu0 %v1583
        %2094 = vmatprep.subr.bf16.mxu0 %v1588
        %2095 = vmatpush1.bf16.msra.mxu0 %v1587
        %2096 = vmatprep.subr.bf16.mxu0 %v1592
        %2097 = vmatpush1.bf16.msra.mxu0 %v1591
        %2098 = vmatprep.subr.bf16.mxu0 %v1596
        %2099 = vmatpush1.bf16.msra.mxu0 %v1595
        %2100 = vmatprep.subr.bf16.mxu0 %v1600
        %2101 = vmatpush1.bf16.msra.mxu0 %v1599
        %2102 = vmatprep.subr.bf16.mxu0 %v1604
        %2103 = vmatpush1.bf16.msra.mxu0 %v1603
        %2104 = vmatprep.mubr.bf16.mxu0 %v914
        %2105 = vmatmul.mubr.bf16.gmra.mrb[0].mxu0 %v913
        %v2106 = vpop.f32.mrb[0].mxu0
        %v2107 = vadd.f32 %v1994, %v2106
        %v2108 = vpop.f32.mrb[0].mxu0
        %v2109 = vadd.f32 %v1996, %v2108
        %v2110 = vpop.f32.mrb[0].mxu0
        %v2111 = vadd.f32 %v1998, %v2110
        %v2112 = vpop.f32.mrb[0].mxu0
        %v2113 = vadd.f32 %v2000, %v2112
        %2114 = vmatprep.mubr.bf16.mxu0 %v918
        %2115 = vmatmul.mubr.bf16.gmra.mrb[0].mxu0 %v917
        %v2116 = vpop.f32.mrb[0].mxu0
        %v2117 = vadd.f32 %v2004, %v2116
        %v2118 = vpop.f32.mrb[0].mxu0
        %v2119 = vadd.f32 %v2006, %v2118
        %v2120 = vpop.f32.mrb[0].mxu0
        %v2121 = vadd.f32 %v2008, %v2120
        %v2122 = vpop.f32.mrb[0].mxu0
        %v2123 = vadd.f32 %v2010, %v2122
        %2124 = vmatprep.mubr.bf16.mxu0 %v922
        %2125 = vmatmul.mubr.bf16.gmra.mrb[0].mxu0 %v921
        %v2126 = vpop.f32.mrb[0].mxu0
        %v2127 = vadd.f32 %v2014, %v2126
        %v2128 = vpop.f32.mrb[0].mxu0
        %v2129 = vadd.f32 %v2016, %v2128
        %v2130 = vpop.f32.mrb[0].mxu0
        %v2131 = vadd.f32 %v2018, %v2130
        %v2132 = vpop.f32.mrb[0].mxu0
        %v2133 = vadd.f32 %v2020, %v2132
        %2134 = vmatprep.mubr.bf16.mxu0 %v926
        %2135 = vmatmul.mubr.bf16.gmra.mrb[0].mxu0 %v925
        %v2136 = vpop.f32.mrb[0].mxu0
        %v2137 = vadd.f32 %v2024, %v2136
        %v2138 = vpop.f32.mrb[0].mxu0
        %v2139 = vadd.f32 %v2026, %v2138
        %v2140 = vpop.f32.mrb[0].mxu0
        %v2141 = vadd.f32 %v2028, %v2140
        %v2142 = vpop.f32.mrb[0].mxu0
        %v2143 = vadd.f32 %v2030, %v2142
        %2144 = vmatprep.mubr.bf16.mxu0 %v930
        %2145 = vmatmul.mubr.bf16.gmra.mrb[0].mxu0 %v929
        %v2146 = vpop.f32.mrb[0].mxu0
        %v2147 = vadd.f32 %v2034, %v2146
        %v2148 = vpop.f32.mrb[0].mxu0
        %v2149 = vadd.f32 %v2036, %v2148
        %v2150 = vpop.f32.mrb[0].mxu0
        %v2151 = vadd.f32 %v2038, %v2150
        %v2152 = vpop.f32.mrb[0].mxu0
        %v2153 = vadd.f32 %v2040, %v2152
        %2154 = vmatprep.mubr.bf16.mxu0 %v934
        %2155 = vmatmul.mubr.bf16.gmra.mrb[0].mxu0 %v933
        %v2156 = vpop.f32.mrb[0].mxu0
        %v2157 = vadd.f32 %v2044, %v2156
        %v2158 = vpop.f32.mrb[0].mxu0
        %v2159 = vadd.f32 %v2046, %v2158
        %v2160 = vpop.f32.mrb[0].mxu0
        %v2161 = vadd.f32 %v2048, %v2160
        %v2162 = vpop.f32.mrb[0].mxu0
        %v2163 = vadd.f32 %v2050, %v2162
        %2164 = vmatprep.mubr.bf16.mxu0 %v938
        %2165 = vmatmul.mubr.bf16.gmra.mrb[0].mxu0 %v937
        %v2166 = vpop.f32.mrb[0].mxu0
        %v2167 = vadd.f32 %v2054, %v2166
        %v2168 = vpop.f32.mrb[0].mxu0
        %v2169 = vadd.f32 %v2056, %v2168
        %v2170 = vpop.f32.mrb[0].mxu0
        %v2171 = vadd.f32 %v2058, %v2170
        %v2172 = vpop.f32.mrb[0].mxu0
        %v2173 = vadd.f32 %v2060, %v2172
        %2174 = vmatprep.mubr.bf16.mxu0 %v942
        %2175 = vmatmul.mubr.bf16.gmra.mrb[0].mxu0 %v941
        %v2176 = vpop.f32.mrb[0].mxu0
        %v2177 = vadd.f32 %v2064, %v2176
        %v2178 = vpop.f32.mrb[0].mxu0
        %v2179 = vadd.f32 %v2066, %v2178
        %v2180 = vpop.f32.mrb[0].mxu0
        %v2181 = vadd.f32 %v2068, %v2180
        %v2182 = vpop.f32.mrb[0].mxu0
        %v2183 = vadd.f32 %v2070, %v2182
        %2184 = vdwg.mxu0
        %v2185 = vmax.f32 %v1881, 0.0
        %v2186 = vmax.f32 %v1883, 0.0
        %v2187 = vmax.f32 %v2107, 0.0
        %v2188 = vmax.f32 %v2109, 0.0
        %v2189 = vmax.f32 %v1885, 0.0
        %v2190 = vmax.f32 %v1887, 0.0
        %v2191 = vmax.f32 %v2111, 0.0
        %v2192 = vmax.f32 %v2113, 0.0
        %v2193 = vmax.f32 %v1891, 0.0
        %v2194 = vmax.f32 %v1893, 0.0
        %v2195 = vmax.f32 %v2117, 0.0
        %v2196 = vmax.f32 %v2119, 0.0
        %v2197 = vmax.f32 %v1895, 0.0
        %v2198 = vmax.f32 %v1897, 0.0
        %v2199 = vmax.f32 %v2121, 0.0
        %v2200 = vmax.f32 %v2123, 0.0
        %v2201 = vmax.f32 %v1901, 0.0
        %v2202 = vmax.f32 %v1903, 0.0
        %v2203 = vmax.f32 %v2127, 0.0
        %v2204 = vmax.f32 %v2129, 0.0
        %v2205 = vmax.f32 %v1905, 0.0
        %v2206 = vmax.f32 %v1907, 0.0
        %v2207 = vmax.f32 %v2131, 0.0
        %v2208 = vmax.f32 %v2133, 0.0
        %v2209 = vmax.f32 %v1911, 0.0
        %v2210 = vmax.f32 %v1913, 0.0
        %v2211 = vmax.f32 %v2137, 0.0
        %v2212 = vmax.f32 %v2139, 0.0
        %v2213 = vmax.f32 %v1915, 0.0
        %v2214 = vmax.f32 %v1917, 0.0
        %v2215 = vmax.f32 %v2141, 0.0
        %v2216 = vmax.f32 %v2143, 0.0
        %v2217 = vmax.f32 %v1921, 0.0
        %v2218 = vmax.f32 %v1923, 0.0
        %v2219 = vmax.f32 %v2147, 0.0
        %v2220 = vmax.f32 %v2149, 0.0
        %v2221 = vmax.f32 %v1925, 0.0
        %v2222 = vmax.f32 %v1927, 0.0
        %v2223 = vmax.f32 %v2151, 0.0
        %v2224 = vmax.f32 %v2153, 0.0
        %v2225 = vmax.f32 %v1931, 0.0
        %v2226 = vmax.f32 %v1933, 0.0
        %v2227 = vmax.f32 %v2157, 0.0
        %v2228 = vmax.f32 %v2159, 0.0
        %v2229 = vmax.f32 %v1935, 0.0
        %v2230 = vmax.f32 %v1937, 0.0
        %v2231 = vmax.f32 %v2161, 0.0
        %v2232 = vmax.f32 %v2163, 0.0
        %v2233 = vmax.f32 %v1941, 0.0
        %v2234 = vmax.f32 %v1943, 0.0
        %v2235 = vmax.f32 %v2167, 0.0
        %v2236 = vmax.f32 %v2169, 0.0
        %v2237 = vmax.f32 %v1945, 0.0
        %v2238 = vmax.f32 %v1947, 0.0
        %v2239 = vmax.f32 %v2171, 0.0
        %v2240 = vmax.f32 %v2173, 0.0
        %v2241 = vmax.f32 %v1951, 0.0
        %v2242 = vmax.f32 %v1953, 0.0
        %v2243 = vmax.f32 %v2177, 0.0
        %v2244 = vmax.f32 %v2179, 0.0
        %v2245 = vmax.f32 %v1955, 0.0
        %v2246 = vmax.f32 %v1957, 0.0
        %v2247 = vmax.f32 %v2181, 0.0
        %v2248 = vmax.f32 %v2183, 0.0
        %v2249 = vpack.c.bf16 %v2189, %v2185
        %v2250 = vpack.c.bf16 %v2190, %v2186
        %v2251 = vpack.c.bf16 %v2191, %v2187
        %v2252 = vpack.c.bf16 %v2192, %v2188
        %v2253 = vpack.c.bf16 %v2197, %v2193
        %v2254 = vpack.c.bf16 %v2198, %v2194
        %v2255 = vpack.c.bf16 %v2199, %v2195
        %v2256 = vpack.c.bf16 %v2200, %v2196
        %v2257 = vpack.c.bf16 %v2205, %v2201
        %v2258 = vpack.c.bf16 %v2206, %v2202
        %v2259 = vpack.c.bf16 %v2207, %v2203
        %v2260 = vpack.c.bf16 %v2208, %v2204
        %v2261 = vpack.c.bf16 %v2213, %v2209
        %v2262 = vpack.c.bf16 %v2214, %v2210
        %v2263 = vpack.c.bf16 %v2215, %v2211
        %v2264 = vpack.c.bf16 %v2216, %v2212
        %v2265 = vpack.c.bf16 %v2221, %v2217
        %v2266 = vpack.c.bf16 %v2222, %v2218
        %v2267 = vpack.c.bf16 %v2223, %v2219
        %v2268 = vpack.c.bf16 %v2224, %v2220
        %v2269 = vpack.c.bf16 %v2229, %v2225
        %v2270 = vpack.c.bf16 %v2230, %v2226
        %v2271 = vpack.c.bf16 %v2231, %v2227
        %v2272 = vpack.c.bf16 %v2232, %v2228
        %v2273 = vpack.c.bf16 %v2237, %v2233
        %v2274 = vpack.c.bf16 %v2238, %v2234
        %v2275 = vpack.c.bf16 %v2239, %v2235
        %v2276 = vpack.c.bf16 %v2240, %v2236
        %v2277 = vpack.c.bf16 %v2245, %v2241
        %v2278 = vpack.c.bf16 %v2246, %v2242
        %v2279 = vpack.c.bf16 %v2247, %v2243
        %v2280 = vpack.c.bf16 %v2248, %v2244
        %v2281 = vld [vmem:[#allocation5] sm:$0xff]
        %v2282 = vld [vmem:[#allocation5 + $0x8] sm:$0xff]
        %v2283 = vld [vmem:[#allocation5 + $0x10] sm:$0xff]
        %v2284 = vld [vmem:[#allocation5 + $0x18] sm:$0xff]
        %v2285 = vld [vmem:[#allocation5 + $0x20] sm:$0xff]
        %v2286 = vld [vmem:[#allocation5 + $0x28] sm:$0xff]
        %v2287 = vld [vmem:[#allocation5 + $0x30] sm:$0xff]
        %v2288 = vld [vmem:[#allocation5 + $0x38] sm:$0xff]
        %v2289 = vld [vmem:[#allocation5 + $0x40] sm:$0xff]
        %v2290 = vld [vmem:[#allocation5 + $0x48] sm:$0xff]
        %v2291 = vld [vmem:[#allocation5 + $0x50] sm:$0xff]
        %v2292 = vld [vmem:[#allocation5 + $0x58] sm:$0xff]
        %v2293 = vld [vmem:[#allocation5 + $0x60] sm:$0xff]
        %v2294 = vld [vmem:[#allocation5 + $0x68] sm:$0xff]
        %v2295 = vld [vmem:[#allocation5 + $0x70] sm:$0xff]
        %v2296 = vld [vmem:[#allocation5 + $0x78] sm:$0xff]
        %v2297 = vld [vmem:[#allocation5 + $0x80] sm:$0xff]
        %v2298 = vld [vmem:[#allocation5 + $0x88] sm:$0xff]
        %v2299 = vld [vmem:[#allocation5 + $0x90] sm:$0xff]
        %v2300 = vld [vmem:[#allocation5 + $0x98] sm:$0xff]
        %v2301 = vld [vmem:[#allocation5 + $0xa0] sm:$0xff]
        %v2302 = vld [vmem:[#allocation5 + $0xa8] sm:$0xff]
        %v2303 = vld [vmem:[#allocation5 + $0xb0] sm:$0xff]
        %v2304 = vld [vmem:[#allocation5 + $0xb8] sm:$0xff]
        %v2305 = vld [vmem:[#allocation5 + $0xc0] sm:$0xff]
        %v2306 = vld [vmem:[#allocation5 + $0xc8] sm:$0xff]
        %v2307 = vld [vmem:[#allocation5 + $0xd0] sm:$0xff]
        %v2308 = vld [vmem:[#allocation5 + $0xd8] sm:$0xff]
        %v2309 = vld [vmem:[#allocation5 + $0xe0] sm:$0xff]
        %v2310 = vld [vmem:[#allocation5 + $0xe8] sm:$0xff]
        %v2311 = vld [vmem:[#allocation5 + $0xf0] sm:$0xff]
        %v2312 = vld [vmem:[#allocation5 + $0xf8] sm:$0xff]
        %v2313 = vld [vmem:[#allocation5 + $0x100] sm:$0xff]
        %v2314 = vld [vmem:[#allocation5 + $0x108] sm:$0xff]
        %v2315 = vld [vmem:[#allocation5 + $0x110] sm:$0xff]
        %v2316 = vld [vmem:[#allocation5 + $0x118] sm:$0xff]
        %v2317 = vld [vmem:[#allocation5 + $0x120] sm:$0xff]
        %v2318 = vld [vmem:[#allocation5 + $0x128] sm:$0xff]
        %v2319 = vld [vmem:[#allocation5 + $0x130] sm:$0xff]
        %v2320 = vld [vmem:[#allocation5 + $0x138] sm:$0xff]
        %v2321 = vld [vmem:[#allocation5 + $0x140] sm:$0xff]
        %v2322 = vld [vmem:[#allocation5 + $0x148] sm:$0xff]
        %v2323 = vld [vmem:[#allocation5 + $0x150] sm:$0xff]
        %v2324 = vld [vmem:[#allocation5 + $0x158] sm:$0xff]
        %v2325 = vld [vmem:[#allocation5 + $0x160] sm:$0xff]
        %v2326 = vld [vmem:[#allocation5 + $0x168] sm:$0xff]
        %v2327 = vld [vmem:[#allocation5 + $0x170] sm:$0xff]
        %v2328 = vld [vmem:[#allocation5 + $0x178] sm:$0xff]
        %v2329 = vld [vmem:[#allocation5 + $0x180] sm:$0xff]
        %v2330 = vld [vmem:[#allocation5 + $0x188] sm:$0xff]
        %v2331 = vld [vmem:[#allocation5 + $0x190] sm:$0xff]
        %v2332 = vld [vmem:[#allocation5 + $0x198] sm:$0xff]
        %v2333 = vld [vmem:[#allocation5 + $0x1a0] sm:$0xff]
        %v2334 = vld [vmem:[#allocation5 + $0x1a8] sm:$0xff]
        %v2335 = vld [vmem:[#allocation5 + $0x1b0] sm:$0xff]
        %v2336 = vld [vmem:[#allocation5 + $0x1b8] sm:$0xff]
        %v2337 = vld [vmem:[#allocation5 + $0x1c0] sm:$0xff]
        %v2338 = vld [vmem:[#allocation5 + $0x1c8] sm:$0xff]
        %v2339 = vld [vmem:[#allocation5 + $0x1d0] sm:$0xff]
        %v2340 = vld [vmem:[#allocation5 + $0x1d8] sm:$0xff]
        %v2341 = vld [vmem:[#allocation5 + $0x1e0] sm:$0xff]
        %v2342 = vld [vmem:[#allocation5 + $0x1e8] sm:$0xff]
        %v2343 = vld [vmem:[#allocation5 + $0x1f0] sm:$0xff]
        %v2344 = vld [vmem:[#allocation5 + $0x1f8] sm:$0xff]
        %v2345 = vld [vmem:[#allocation5 + $0x200] sm:$0xff]
        %v2346 = vld [vmem:[#allocation5 + $0x208] sm:$0xff]
        %v2347 = vld [vmem:[#allocation5 + $0x210] sm:$0xff]
        %v2348 = vld [vmem:[#allocation5 + $0x218] sm:$0xff]
        %v2349 = vld [vmem:[#allocation5 + $0x220] sm:$0xff]
        %v2350 = vld [vmem:[#allocation5 + $0x228] sm:$0xff]
        %v2351 = vld [vmem:[#allocation5 + $0x230] sm:$0xff]
        %v2352 = vld [vmem:[#allocation5 + $0x238] sm:$0xff]
        %v2353 = vld [vmem:[#allocation5 + $0x240] sm:$0xff]
        %v2354 = vld [vmem:[#allocation5 + $0x248] sm:$0xff]
        %v2355 = vld [vmem:[#allocation5 + $0x250] sm:$0xff]
        %v2356 = vld [vmem:[#allocation5 + $0x258] sm:$0xff]
        %v2357 = vld [vmem:[#allocation5 + $0x260] sm:$0xff]
        %v2358 = vld [vmem:[#allocation5 + $0x268] sm:$0xff]
        %v2359 = vld [vmem:[#allocation5 + $0x270] sm:$0xff]
        %v2360 = vld [vmem:[#allocation5 + $0x278] sm:$0xff]
        %v2361 = vld [vmem:[#allocation5 + $0x280] sm:$0xff]
        %v2362 = vld [vmem:[#allocation5 + $0x288] sm:$0xff]
        %v2363 = vld [vmem:[#allocation5 + $0x290] sm:$0xff]
        %v2364 = vld [vmem:[#allocation5 + $0x298] sm:$0xff]
        %v2365 = vld [vmem:[#allocation5 + $0x2a0] sm:$0xff]
        %v2366 = vld [vmem:[#allocation5 + $0x2a8] sm:$0xff]
        %v2367 = vld [vmem:[#allocation5 + $0x2b0] sm:$0xff]
        %v2368 = vld [vmem:[#allocation5 + $0x2b8] sm:$0xff]
        %v2369 = vld [vmem:[#allocation5 + $0x2c0] sm:$0xff]
        %v2370 = vld [vmem:[#allocation5 + $0x2c8] sm:$0xff]
        %v2371 = vld [vmem:[#allocation5 + $0x2d0] sm:$0xff]
        %v2372 = vld [vmem:[#allocation5 + $0x2d8] sm:$0xff]
        %v2373 = vld [vmem:[#allocation5 + $0x2e0] sm:$0xff]
        %v2374 = vld [vmem:[#allocation5 + $0x2e8] sm:$0xff]
        %v2375 = vld [vmem:[#allocation5 + $0x2f0] sm:$0xff]
        %v2376 = vld [vmem:[#allocation5 + $0x2f8] sm:$0xff]
        %v2377 = vld [vmem:[#allocation5 + $0x300] sm:$0xff]
        %v2378 = vld [vmem:[#allocation5 + $0x308] sm:$0xff]
        %v2379 = vld [vmem:[#allocation5 + $0x310] sm:$0xff]
        %v2380 = vld [vmem:[#allocation5 + $0x318] sm:$0xff]
        %v2381 = vld [vmem:[#allocation5 + $0x320] sm:$0xff]
        %v2382 = vld [vmem:[#allocation5 + $0x328] sm:$0xff]
        %v2383 = vld [vmem:[#allocation5 + $0x330] sm:$0xff]
        %v2384 = vld [vmem:[#allocation5 + $0x338] sm:$0xff]
        %v2385 = vld [vmem:[#allocation5 + $0x340] sm:$0xff]
        %v2386 = vld [vmem:[#allocation5 + $0x348] sm:$0xff]
        %v2387 = vld [vmem:[#allocation5 + $0x350] sm:$0xff]
        %v2388 = vld [vmem:[#allocation5 + $0x358] sm:$0xff]
        %v2389 = vld [vmem:[#allocation5 + $0x360] sm:$0xff]
        %v2390 = vld [vmem:[#allocation5 + $0x368] sm:$0xff]
        %v2391 = vld [vmem:[#allocation5 + $0x370] sm:$0xff]
        %v2392 = vld [vmem:[#allocation5 + $0x378] sm:$0xff]
        %v2393 = vld [vmem:[#allocation5 + $0x380] sm:$0xff]
        %v2394 = vld [vmem:[#allocation5 + $0x388] sm:$0xff]
        %v2395 = vld [vmem:[#allocation5 + $0x390] sm:$0xff]
        %v2396 = vld [vmem:[#allocation5 + $0x398] sm:$0xff]
        %v2397 = vld [vmem:[#allocation5 + $0x3a0] sm:$0xff]
        %v2398 = vld [vmem:[#allocation5 + $0x3a8] sm:$0xff]
        %v2399 = vld [vmem:[#allocation5 + $0x3b0] sm:$0xff]
        %v2400 = vld [vmem:[#allocation5 + $0x3b8] sm:$0xff]
        %v2401 = vld [vmem:[#allocation5 + $0x3c0] sm:$0xff]
        %v2402 = vld [vmem:[#allocation5 + $0x3c8] sm:$0xff]
        %v2403 = vld [vmem:[#allocation5 + $0x3d0] sm:$0xff]
        %v2404 = vld [vmem:[#allocation5 + $0x3d8] sm:$0xff]
        %v2405 = vld [vmem:[#allocation5 + $0x3e0] sm:$0xff]
        %v2406 = vld [vmem:[#allocation5 + $0x3e8] sm:$0xff]
        %v2407 = vld [vmem:[#allocation5 + $0x3f0] sm:$0xff]
        %v2408 = vld [vmem:[#allocation5 + $0x3f8] sm:$0xff]
        %v2409 = vld [vmem:[%s6] sm:$0xf]
        %v2411 = vlaneseq
        %v2412 = vshrl.u32 %v2411, 7
        %v2413 = vsub.s32 0, %v2412
        %v2414 = vrot.slane %v2409, %v2413
        %v2415 = vlaneseq
        %v2416 = vshrl.u32 %v2415, 7
        %v2417 = vsub.s32 1, %v2416
        %v2418 = vrot.slane %v2409, %v2417
        %v2419 = vlaneseq
        %v2420 = vshrl.u32 %v2419, 7
        %v2421 = vsub.s32 2, %v2420
        %v2422 = vrot.slane %v2409, %v2421
        %v2423 = vlaneseq
        %v2424 = vshrl.u32 %v2423, 7
        %v2425 = vsub.s32 3, %v2424
        %v2426 = vrot.slane %v2409, %v2425
        %v2559 = vunpack.c.l.b16 %v2281
        %v2560 = vunpack.c.h.b16 %v2281
        %v2561 = vunpack.c.l.b16 %v2282
        %v2562 = vunpack.c.h.b16 %v2282
        %v2563 = vunpack.c.l.b16 %v2283
        %v2564 = vunpack.c.h.b16 %v2283
        %v2565 = vunpack.c.l.b16 %v2284
        %v2566 = vunpack.c.h.b16 %v2284
        %v2567 = vunpack.c.l.b16 %v2285
        %v2568 = vunpack.c.h.b16 %v2285
        %v2569 = vunpack.c.l.b16 %v2286
        %v2570 = vunpack.c.h.b16 %v2286
        %v2571 = vunpack.c.l.b16 %v2287
        %v2572 = vunpack.c.h.b16 %v2287
        %v2573 = vunpack.c.l.b16 %v2288
        %v2574 = vunpack.c.h.b16 %v2288
        %v2575 = vunpack.c.l.b16 %v2289
        %v2576 = vunpack.c.h.b16 %v2289
        %v2577 = vunpack.c.l.b16 %v2290
        %v2578 = vunpack.c.h.b16 %v2290
        %v2579 = vunpack.c.l.b16 %v2291
        %v2580 = vunpack.c.h.b16 %v2291
        %v2581 = vunpack.c.l.b16 %v2292
        %v2582 = vunpack.c.h.b16 %v2292
        %v2583 = vunpack.c.l.b16 %v2293
        %v2584 = vunpack.c.h.b16 %v2293
        %v2585 = vunpack.c.l.b16 %v2294
        %v2586 = vunpack.c.h.b16 %v2294
        %v2587 = vunpack.c.l.b16 %v2295
        %v2588 = vunpack.c.h.b16 %v2295
        %v2589 = vunpack.c.l.b16 %v2296
        %v2590 = vunpack.c.h.b16 %v2296
        %v2591 = vunpack.c.l.b16 %v2297
        %v2592 = vunpack.c.h.b16 %v2297
        %v2593 = vunpack.c.l.b16 %v2298
        %v2594 = vunpack.c.h.b16 %v2298
        %v2595 = vunpack.c.l.b16 %v2299
        %v2596 = vunpack.c.h.b16 %v2299
        %v2597 = vunpack.c.l.b16 %v2300
        %v2598 = vunpack.c.h.b16 %v2300
        %v2599 = vunpack.c.l.b16 %v2301
        %v2600 = vunpack.c.h.b16 %v2301
        %v2601 = vunpack.c.l.b16 %v2302
        %v2602 = vunpack.c.h.b16 %v2302
        %v2603 = vunpack.c.l.b16 %v2303
        %v2604 = vunpack.c.h.b16 %v2303
        %v2605 = vunpack.c.l.b16 %v2304
        %v2606 = vunpack.c.h.b16 %v2304
        %v2607 = vunpack.c.l.b16 %v2305
        %v2608 = vunpack.c.h.b16 %v2305
        %v2609 = vunpack.c.l.b16 %v2306
        %v2610 = vunpack.c.h.b16 %v2306
        %v2611 = vunpack.c.l.b16 %v2307
        %v2612 = vunpack.c.h.b16 %v2307
        %v2613 = vunpack.c.l.b16 %v2308
        %v2614 = vunpack.c.h.b16 %v2308
        %v2615 = vunpack.c.l.b16 %v2309
        %v2616 = vunpack.c.h.b16 %v2309
        %v2617 = vunpack.c.l.b16 %v2310
        %v2618 = vunpack.c.h.b16 %v2310
        %v2619 = vunpack.c.l.b16 %v2311
        %v2620 = vunpack.c.h.b16 %v2311
        %v2621 = vunpack.c.l.b16 %v2312
        %v2622 = vunpack.c.h.b16 %v2312
        %v2623 = vunpack.c.l.b16 %v2313
        %v2624 = vunpack.c.h.b16 %v2313
        %v2625 = vunpack.c.l.b16 %v2314
        %v2626 = vunpack.c.h.b16 %v2314
        %v2627 = vunpack.c.l.b16 %v2315
        %v2628 = vunpack.c.h.b16 %v2315
        %v2629 = vunpack.c.l.b16 %v2316
        %v2630 = vunpack.c.h.b16 %v2316
        %v2631 = vunpack.c.l.b16 %v2317
        %v2632 = vunpack.c.h.b16 %v2317
        %v2633 = vunpack.c.l.b16 %v2318
        %v2634 = vunpack.c.h.b16 %v2318
        %v2635 = vunpack.c.l.b16 %v2319
        %v2636 = vunpack.c.h.b16 %v2319
        %v2637 = vunpack.c.l.b16 %v2320
        %v2638 = vunpack.c.h.b16 %v2320
        %v2639 = vunpack.c.l.b16 %v2321
        %v2640 = vunpack.c.h.b16 %v2321
        %v2641 = vunpack.c.l.b16 %v2322
        %v2642 = vunpack.c.h.b16 %v2322
        %v2643 = vunpack.c.l.b16 %v2323
        %v2644 = vunpack.c.h.b16 %v2323
        %v2645 = vunpack.c.l.b16 %v2324
        %v2646 = vunpack.c.h.b16 %v2324
        %v2647 = vunpack.c.l.b16 %v2325
        %v2648 = vunpack.c.h.b16 %v2325
        %v2649 = vunpack.c.l.b16 %v2326
        %v2650 = vunpack.c.h.b16 %v2326
        %v2651 = vunpack.c.l.b16 %v2327
        %v2652 = vunpack.c.h.b16 %v2327
        %v2653 = vunpack.c.l.b16 %v2328
        %v2654 = vunpack.c.h.b16 %v2328
        %v2655 = vunpack.c.l.b16 %v2329
        %v2656 = vunpack.c.h.b16 %v2329
        %v2657 = vunpack.c.l.b16 %v2330
        %v2658 = vunpack.c.h.b16 %v2330
        %v2659 = vunpack.c.l.b16 %v2331
        %v2660 = vunpack.c.h.b16 %v2331
        %v2661 = vunpack.c.l.b16 %v2332
        %v2662 = vunpack.c.h.b16 %v2332
        %v2663 = vunpack.c.l.b16 %v2333
        %v2664 = vunpack.c.h.b16 %v2333
        %v2665 = vunpack.c.l.b16 %v2334
        %v2666 = vunpack.c.h.b16 %v2334
        %v2667 = vunpack.c.l.b16 %v2335
        %v2668 = vunpack.c.h.b16 %v2335
        %v2669 = vunpack.c.l.b16 %v2336
        %v2670 = vunpack.c.h.b16 %v2336
        %v2671 = vunpack.c.l.b16 %v2337
        %v2672 = vunpack.c.h.b16 %v2337
        %v2673 = vunpack.c.l.b16 %v2338
        %v2674 = vunpack.c.h.b16 %v2338
        %v2675 = vunpack.c.l.b16 %v2339
        %v2676 = vunpack.c.h.b16 %v2339
        %v2677 = vunpack.c.l.b16 %v2340
        %v2678 = vunpack.c.h.b16 %v2340
        %v2679 = vunpack.c.l.b16 %v2341
        %v2680 = vunpack.c.h.b16 %v2341
        %v2681 = vunpack.c.l.b16 %v2342
        %v2682 = vunpack.c.h.b16 %v2342
        %v2683 = vunpack.c.l.b16 %v2343
        %v2684 = vunpack.c.h.b16 %v2343
        %v2685 = vunpack.c.l.b16 %v2344
        %v2686 = vunpack.c.h.b16 %v2344
        %v2687 = vunpack.c.l.b16 %v2345
        %v2688 = vunpack.c.h.b16 %v2345
        %v2689 = vunpack.c.l.b16 %v2346
        %v2690 = vunpack.c.h.b16 %v2346
        %v2691 = vunpack.c.l.b16 %v2347
        %v2692 = vunpack.c.h.b16 %v2347
        %v2693 = vunpack.c.l.b16 %v2348
        %v2694 = vunpack.c.h.b16 %v2348
        %v2695 = vunpack.c.l.b16 %v2349
        %v2696 = vunpack.c.h.b16 %v2349
        %v2697 = vunpack.c.l.b16 %v2350
        %v2698 = vunpack.c.h.b16 %v2350
        %v2699 = vunpack.c.l.b16 %v2351
        %v2700 = vunpack.c.h.b16 %v2351
        %v2701 = vunpack.c.l.b16 %v2352
        %v2702 = vunpack.c.h.b16 %v2352
        %v2703 = vunpack.c.l.b16 %v2353
        %v2704 = vunpack.c.h.b16 %v2353
        %v2705 = vunpack.c.l.b16 %v2354
        %v2706 = vunpack.c.h.b16 %v2354
        %v2707 = vunpack.c.l.b16 %v2355
        %v2708 = vunpack.c.h.b16 %v2355
        %v2709 = vunpack.c.l.b16 %v2356
        %v2710 = vunpack.c.h.b16 %v2356
        %v2711 = vunpack.c.l.b16 %v2357
        %v2712 = vunpack.c.h.b16 %v2357
        %v2713 = vunpack.c.l.b16 %v2358
        %v2714 = vunpack.c.h.b16 %v2358
        %v2715 = vunpack.c.l.b16 %v2359
        %v2716 = vunpack.c.h.b16 %v2359
        %v2717 = vunpack.c.l.b16 %v2360
        %v2718 = vunpack.c.h.b16 %v2360
        %v2719 = vunpack.c.l.b16 %v2361
        %v2720 = vunpack.c.h.b16 %v2361
        %v2721 = vunpack.c.l.b16 %v2362
        %v2722 = vunpack.c.h.b16 %v2362
        %v2723 = vunpack.c.l.b16 %v2363
        %v2724 = vunpack.c.h.b16 %v2363
        %v2725 = vunpack.c.l.b16 %v2364
        %v2726 = vunpack.c.h.b16 %v2364
        %v2727 = vunpack.c.l.b16 %v2365
        %v2728 = vunpack.c.h.b16 %v2365
        %v2729 = vunpack.c.l.b16 %v2366
        %v2730 = vunpack.c.h.b16 %v2366
        %v2731 = vunpack.c.l.b16 %v2367
        %v2732 = vunpack.c.h.b16 %v2367
        %v2733 = vunpack.c.l.b16 %v2368
        %v2734 = vunpack.c.h.b16 %v2368
        %v2735 = vunpack.c.l.b16 %v2369
        %v2736 = vunpack.c.h.b16 %v2369
        %v2737 = vunpack.c.l.b16 %v2370
        %v2738 = vunpack.c.h.b16 %v2370
        %v2739 = vunpack.c.l.b16 %v2371
        %v2740 = vunpack.c.h.b16 %v2371
        %v2741 = vunpack.c.l.b16 %v2372
        %v2742 = vunpack.c.h.b16 %v2372
        %v2743 = vunpack.c.l.b16 %v2373
        %v2744 = vunpack.c.h.b16 %v2373
        %v2745 = vunpack.c.l.b16 %v2374
        %v2746 = vunpack.c.h.b16 %v2374
        %v2747 = vunpack.c.l.b16 %v2375
        %v2748 = vunpack.c.h.b16 %v2375
        %v2749 = vunpack.c.l.b16 %v2376
        %v2750 = vunpack.c.h.b16 %v2376
        %v2751 = vunpack.c.l.b16 %v2377
        %v2752 = vunpack.c.h.b16 %v2377
        %v2753 = vunpack.c.l.b16 %v2378
        %v2754 = vunpack.c.h.b16 %v2378
        %v2755 = vunpack.c.l.b16 %v2379
        %v2756 = vunpack.c.h.b16 %v2379
        %v2757 = vunpack.c.l.b16 %v2380
        %v2758 = vunpack.c.h.b16 %v2380
        %v2759 = vunpack.c.l.b16 %v2381
        %v2760 = vunpack.c.h.b16 %v2381
        %v2761 = vunpack.c.l.b16 %v2382
        %v2762 = vunpack.c.h.b16 %v2382
        %v2763 = vunpack.c.l.b16 %v2383
        %v2764 = vunpack.c.h.b16 %v2383
        %v2765 = vunpack.c.l.b16 %v2384
        %v2766 = vunpack.c.h.b16 %v2384
        %v2767 = vunpack.c.l.b16 %v2385
        %v2768 = vunpack.c.h.b16 %v2385
        %v2769 = vunpack.c.l.b16 %v2386
        %v2770 = vunpack.c.h.b16 %v2386
        %v2771 = vunpack.c.l.b16 %v2387
        %v2772 = vunpack.c.h.b16 %v2387
        %v2773 = vunpack.c.l.b16 %v2388
        %v2774 = vunpack.c.h.b16 %v2388
        %v2775 = vunpack.c.l.b16 %v2389
        %v2776 = vunpack.c.h.b16 %v2389
        %v2777 = vunpack.c.l.b16 %v2390
        %v2778 = vunpack.c.h.b16 %v2390
        %v2779 = vunpack.c.l.b16 %v2391
        %v2780 = vunpack.c.h.b16 %v2391
        %v2781 = vunpack.c.l.b16 %v2392
        %v2782 = vunpack.c.h.b16 %v2392
        %v2783 = vunpack.c.l.b16 %v2393
        %v2784 = vunpack.c.h.b16 %v2393
        %v2785 = vunpack.c.l.b16 %v2394
        %v2786 = vunpack.c.h.b16 %v2394
        %v2787 = vunpack.c.l.b16 %v2395
        %v2788 = vunpack.c.h.b16 %v2395
        %v2789 = vunpack.c.l.b16 %v2396
        %v2790 = vunpack.c.h.b16 %v2396
        %v2791 = vunpack.c.l.b16 %v2397
        %v2792 = vunpack.c.h.b16 %v2397
        %v2793 = vunpack.c.l.b16 %v2398
        %v2794 = vunpack.c.h.b16 %v2398
        %v2795 = vunpack.c.l.b16 %v2399
        %v2796 = vunpack.c.h.b16 %v2399
        %v2797 = vunpack.c.l.b16 %v2400
        %v2798 = vunpack.c.h.b16 %v2400
        %v2799 = vunpack.c.l.b16 %v2401
        %v2800 = vunpack.c.h.b16 %v2401
        %v2801 = vunpack.c.l.b16 %v2402
        %v2802 = vunpack.c.h.b16 %v2402
        %v2803 = vunpack.c.l.b16 %v2403
        %v2804 = vunpack.c.h.b16 %v2403
        %v2805 = vunpack.c.l.b16 %v2404
        %v2806 = vunpack.c.h.b16 %v2404
        %v2807 = vunpack.c.l.b16 %v2405
        %v2808 = vunpack.c.h.b16 %v2405
        %v2809 = vunpack.c.l.b16 %v2406
        %v2810 = vunpack.c.h.b16 %v2406
        %v2811 = vunpack.c.l.b16 %v2407
        %v2812 = vunpack.c.h.b16 %v2407
        %v2813 = vunpack.c.l.b16 %v2408
        %v2814 = vunpack.c.h.b16 %v2408
        %v2815 = vpack.c.b16 %v2563, %v2559
        %v2816 = vpack.c.b16 %v2564, %v2560
        %v2817 = vpack.c.b16 %v2565, %v2561
        %v2818 = vpack.c.b16 %v2566, %v2562
        %v2819 = vpack.c.b16 %v2571, %v2567
        %v2820 = vpack.c.b16 %v2572, %v2568
        %v2821 = vpack.c.b16 %v2573, %v2569
        %v2822 = vpack.c.b16 %v2574, %v2570
        %v2823 = vpack.c.b16 %v2579, %v2575
        %v2824 = vpack.c.b16 %v2580, %v2576
        %v2825 = vpack.c.b16 %v2581, %v2577
        %v2826 = vpack.c.b16 %v2582, %v2578
        %v2827 = vpack.c.b16 %v2587, %v2583
        %v2828 = vpack.c.b16 %v2588, %v2584
        %v2829 = vpack.c.b16 %v2589, %v2585
        %v2830 = vpack.c.b16 %v2590, %v2586
        %v2831 = vpack.c.b16 %v2595, %v2591
        %v2832 = vpack.c.b16 %v2596, %v2592
        %v2833 = vpack.c.b16 %v2597, %v2593
        %v2834 = vpack.c.b16 %v2598, %v2594
        %v2835 = vpack.c.b16 %v2603, %v2599
        %v2836 = vpack.c.b16 %v2604, %v2600
        %v2837 = vpack.c.b16 %v2605, %v2601
        %v2838 = vpack.c.b16 %v2606, %v2602
        %v2839 = vpack.c.b16 %v2611, %v2607
        %v2840 = vpack.c.b16 %v2612, %v2608
        %v2841 = vpack.c.b16 %v2613, %v2609
        %v2842 = vpack.c.b16 %v2614, %v2610
        %v2843 = vpack.c.b16 %v2619, %v2615
        %v2844 = vpack.c.b16 %v2620, %v2616
        %v2845 = vpack.c.b16 %v2621, %v2617
        %v2846 = vpack.c.b16 %v2622, %v2618
        %v2847 = vpack.c.b16 %v2627, %v2623
        %v2848 = vpack.c.b16 %v2628, %v2624
        %v2849 = vpack.c.b16 %v2629, %v2625
        %v2850 = vpack.c.b16 %v2630, %v2626
        %v2851 = vpack.c.b16 %v2635, %v2631
        %v2852 = vpack.c.b16 %v2636, %v2632
        %v2853 = vpack.c.b16 %v2637, %v2633
        %v2854 = vpack.c.b16 %v2638, %v2634
        %v2855 = vpack.c.b16 %v2643, %v2639
        %v2856 = vpack.c.b16 %v2644, %v2640
        %v2857 = vpack.c.b16 %v2645, %v2641
        %v2858 = vpack.c.b16 %v2646, %v2642
        %v2859 = vpack.c.b16 %v2651, %v2647
        %v2860 = vpack.c.b16 %v2652, %v2648
        %v2861 = vpack.c.b16 %v2653, %v2649
        %v2862 = vpack.c.b16 %v2654, %v2650
        %v2863 = vpack.c.b16 %v2659, %v2655
        %v2864 = vpack.c.b16 %v2660, %v2656
        %v2865 = vpack.c.b16 %v2661, %v2657
        %v2866 = vpack.c.b16 %v2662, %v2658
        %v2867 = vpack.c.b16 %v2667, %v2663
        %v2868 = vpack.c.b16 %v2668, %v2664
        %v2869 = vpack.c.b16 %v2669, %v2665
        %v2870 = vpack.c.b16 %v2670, %v2666
        %v2871 = vpack.c.b16 %v2675, %v2671
        %v2872 = vpack.c.b16 %v2676, %v2672
        %v2873 = vpack.c.b16 %v2677, %v2673
        %v2874 = vpack.c.b16 %v2678, %v2674
        %v2875 = vpack.c.b16 %v2683, %v2679
        %v2876 = vpack.c.b16 %v2684, %v2680
        %v2877 = vpack.c.b16 %v2685, %v2681
        %v2878 = vpack.c.b16 %v2686, %v2682
        %v2879 = vpack.c.b16 %v2691, %v2687
        %v2880 = vpack.c.b16 %v2692, %v2688
        %v2881 = vpack.c.b16 %v2693, %v2689
        %v2882 = vpack.c.b16 %v2694, %v2690
        %v2883 = vpack.c.b16 %v2699, %v2695
        %v2884 = vpack.c.b16 %v2700, %v2696
        %v2885 = vpack.c.b16 %v2701, %v2697
        %v2886 = vpack.c.b16 %v2702, %v2698
        %v2887 = vpack.c.b16 %v2707, %v2703
        %v2888 = vpack.c.b16 %v2708, %v2704
        %v2889 = vpack.c.b16 %v2709, %v2705
        %v2890 = vpack.c.b16 %v2710, %v2706
        %v2891 = vpack.c.b16 %v2715, %v2711
        %v2892 = vpack.c.b16 %v2716, %v2712
        %v2893 = vpack.c.b16 %v2717, %v2713
        %v2894 = vpack.c.b16 %v2718, %v2714
        %v2895 = vpack.c.b16 %v2723, %v2719
        %v2896 = vpack.c.b16 %v2724, %v2720
        %v2897 = vpack.c.b16 %v2725, %v2721
        %v2898 = vpack.c.b16 %v2726, %v2722
        %v2899 = vpack.c.b16 %v2731, %v2727
        %v2900 = vpack.c.b16 %v2732, %v2728
        %v2901 = vpack.c.b16 %v2733, %v2729
        %v2902 = vpack.c.b16 %v2734, %v2730
        %v2903 = vpack.c.b16 %v2739, %v2735
        %v2904 = vpack.c.b16 %v2740, %v2736
        %v2905 = vpack.c.b16 %v2741, %v2737
        %v2906 = vpack.c.b16 %v2742, %v2738
        %v2907 = vpack.c.b16 %v2747, %v2743
        %v2908 = vpack.c.b16 %v2748, %v2744
        %v2909 = vpack.c.b16 %v2749, %v2745
        %v2910 = vpack.c.b16 %v2750, %v2746
        %v2911 = vpack.c.b16 %v2755, %v2751
        %v2912 = vpack.c.b16 %v2756, %v2752
        %v2913 = vpack.c.b16 %v2757, %v2753
        %v2914 = vpack.c.b16 %v2758, %v2754
        %v2915 = vpack.c.b16 %v2763, %v2759
        %v2916 = vpack.c.b16 %v2764, %v2760
        %v2917 = vpack.c.b16 %v2765, %v2761
        %v2918 = vpack.c.b16 %v2766, %v2762
        %v2919 = vpack.c.b16 %v2771, %v2767
        %v2920 = vpack.c.b16 %v2772, %v2768
        %v2921 = vpack.c.b16 %v2773, %v2769
        %v2922 = vpack.c.b16 %v2774, %v2770
        %v2923 = vpack.c.b16 %v2779, %v2775
        %v2924 = vpack.c.b16 %v2780, %v2776
        %v2925 = vpack.c.b16 %v2781, %v2777
        %v2926 = vpack.c.b16 %v2782, %v2778
        %v2927 = vpack.c.b16 %v2787, %v2783
        %v2928 = vpack.c.b16 %v2788, %v2784
        %v2929 = vpack.c.b16 %v2789, %v2785
        %v2930 = vpack.c.b16 %v2790, %v2786
        %v2931 = vpack.c.b16 %v2795, %v2791
        %v2932 = vpack.c.b16 %v2796, %v2792
        %v2933 = vpack.c.b16 %v2797, %v2793
        %v2934 = vpack.c.b16 %v2798, %v2794
        %v2935 = vpack.c.b16 %v2803, %v2799
        %v2936 = vpack.c.b16 %v2804, %v2800
        %v2937 = vpack.c.b16 %v2805, %v2801
        %v2938 = vpack.c.b16 %v2806, %v2802
        %v2939 = vpack.c.b16 %v2811, %v2807
        %v2940 = vpack.c.b16 %v2812, %v2808
        %v2941 = vpack.c.b16 %v2813, %v2809
        %v2942 = vpack.c.b16 %v2814, %v2810
        %3071 = vmatprep.subr.bf16.mxu0 %v2816
        %3072 = vmatpush1.bf16.msra.mxu0 %v2815
        %3073 = vmatprep.subr.bf16.mxu0 %v2820
        %3074 = vmatpush1.bf16.msra.mxu0 %v2819
        %3075 = vmatprep.subr.bf16.mxu0 %v2824
        %3076 = vmatpush1.bf16.msra.mxu0 %v2823
        %3077 = vmatprep.subr.bf16.mxu0 %v2828
        %3078 = vmatpush1.bf16.msra.mxu0 %v2827
        %3079 = vmatprep.subr.bf16.mxu0 %v2832
        %3080 = vmatpush1.bf16.msra.mxu0 %v2831
        %3081 = vmatprep.subr.bf16.mxu0 %v2836
        %3082 = vmatpush1.bf16.msra.mxu0 %v2835
        %3083 = vmatprep.subr.bf16.mxu0 %v2840
        %3084 = vmatpush1.bf16.msra.mxu0 %v2839
        %3085 = vmatprep.subr.bf16.mxu0 %v2844
        %3086 = vmatpush1.bf16.msra.mxu0 %v2843
        %3087 = vmatprep.subr.bf16.mxu0 %v2848
        %3088 = vmatpush1.bf16.msra.mxu0 %v2847
        %3089 = vmatprep.subr.bf16.mxu0 %v2852
        %3090 = vmatpush1.bf16.msra.mxu0 %v2851
        %3091 = vmatprep.subr.bf16.mxu0 %v2856
        %3092 = vmatpush1.bf16.msra.mxu0 %v2855
        %3093 = vmatprep.subr.bf16.mxu0 %v2860
        %3094 = vmatpush1.bf16.msra.mxu0 %v2859
        %3095 = vmatprep.subr.bf16.mxu0 %v2864
        %3096 = vmatpush1.bf16.msra.mxu0 %v2863
        %3097 = vmatprep.subr.bf16.mxu0 %v2868
        %3098 = vmatpush1.bf16.msra.mxu0 %v2867
        %3099 = vmatprep.subr.bf16.mxu0 %v2872
        %3100 = vmatpush1.bf16.msra.mxu0 %v2871
        %3101 = vmatprep.subr.bf16.mxu0 %v2876
        %3102 = vmatpush1.bf16.msra.mxu0 %v2875
        %3103 = vmatprep.mubr.bf16.mxu0 %v2250
        %3104 = vmatmul.mubr.bf16.gmra.mrb[0].mxu0 %v2249
        %v3105 = vpop.f32.mrb[0].mxu0
        %v3106 = vadd.f32 %v2414, %v3105
        %v3107 = vpop.f32.mrb[0].mxu0
        %v3108 = vadd.f32 %v2418, %v3107
        %v3109 = vpop.f32.mrb[0].mxu0
        %v3110 = vadd.f32 %v2414, %v3109
        %v3111 = vpop.f32.mrb[0].mxu0
        %v3112 = vadd.f32 %v2418, %v3111
        %3113 = vmatprep.mubr.bf16.mxu0 %v2254
        %3114 = vmatmul.mubr.bf16.gmra.mrb[0].mxu0 %v2253
        %v3115 = vpop.f32.mrb[0].mxu0
        %v3116 = vadd.f32 %v2414, %v3115
        %v3117 = vpop.f32.mrb[0].mxu0
        %v3118 = vadd.f32 %v2418, %v3117
        %v3119 = vpop.f32.mrb[0].mxu0
        %v3120 = vadd.f32 %v2414, %v3119
        %v3121 = vpop.f32.mrb[0].mxu0
        %v3122 = vadd.f32 %v2418, %v3121
        %3123 = vmatprep.mubr.bf16.mxu0 %v2258
        %3124 = vmatmul.mubr.bf16.gmra.mrb[0].mxu0 %v2257
        %v3125 = vpop.f32.mrb[0].mxu0
        %v3126 = vadd.f32 %v2414, %v3125
        %v3127 = vpop.f32.mrb[0].mxu0
        %v3128 = vadd.f32 %v2418, %v3127
        %v3129 = vpop.f32.mrb[0].mxu0
        %v3130 = vadd.f32 %v2414, %v3129
        %v3131 = vpop.f32.mrb[0].mxu0
        %v3132 = vadd.f32 %v2418, %v3131
        %3133 = vmatprep.mubr.bf16.mxu0 %v2262
        %3134 = vmatmul.mubr.bf16.gmra.mrb[0].mxu0 %v2261
        %v3135 = vpop.f32.mrb[0].mxu0
        %v3136 = vadd.f32 %v2414, %v3135
        %v3137 = vpop.f32.mrb[0].mxu0
        %v3138 = vadd.f32 %v2418, %v3137
        %v3139 = vpop.f32.mrb[0].mxu0
        %v3140 = vadd.f32 %v2414, %v3139
        %v3141 = vpop.f32.mrb[0].mxu0
        %v3142 = vadd.f32 %v2418, %v3141
        %3143 = vmatprep.mubr.bf16.mxu0 %v2266
        %3144 = vmatmul.mubr.bf16.gmra.mrb[0].mxu0 %v2265
        %v3145 = vpop.f32.mrb[0].mxu0
        %v3146 = vadd.f32 %v2414, %v3145
        %v3147 = vpop.f32.mrb[0].mxu0
        %v3148 = vadd.f32 %v2418, %v3147
        %v3149 = vpop.f32.mrb[0].mxu0
        %v3150 = vadd.f32 %v2414, %v3149
        %v3151 = vpop.f32.mrb[0].mxu0
        %v3152 = vadd.f32 %v2418, %v3151
        %3153 = vmatprep.mubr.bf16.mxu0 %v2270
        %3154 = vmatmul.mubr.bf16.gmra.mrb[0].mxu0 %v2269
        %v3155 = vpop.f32.mrb[0].mxu0
        %v3156 = vadd.f32 %v2414, %v3155
        %v3157 = vpop.f32.mrb[0].mxu0
        %v3158 = vadd.f32 %v2418, %v3157
        %v3159 = vpop.f32.mrb[0].mxu0
        %v3160 = vadd.f32 %v2414, %v3159
        %v3161 = vpop.f32.mrb[0].mxu0
        %v3162 = vadd.f32 %v2418, %v3161
        %3163 = vmatprep.mubr.bf16.mxu0 %v2274
        %3164 = vmatmul.mubr.bf16.gmra.mrb[0].mxu0 %v2273
        %v3165 = vpop.f32.mrb[0].mxu0
        %v3166 = vadd.f32 %v2414, %v3165
        %v3167 = vpop.f32.mrb[0].mxu0
        %v3168 = vadd.f32 %v2418, %v3167
        %v3169 = vpop.f32.mrb[0].mxu0
        %v3170 = vadd.f32 %v2414, %v3169
        %v3171 = vpop.f32.mrb[0].mxu0
        %v3172 = vadd.f32 %v2418, %v3171
        %3173 = vmatprep.mubr.bf16.mxu0 %v2278
        %3174 = vmatmul.mubr.bf16.gmra.mrb[0].mxu0 %v2277
        %v3175 = vpop.f32.mrb[0].mxu0
        %v3176 = vadd.f32 %v2414, %v3175
        %v3177 = vpop.f32.mrb[0].mxu0
        %v3178 = vadd.f32 %v2418, %v3177
        %v3179 = vpop.f32.mrb[0].mxu0
        %v3180 = vadd.f32 %v2414, %v3179
        %v3181 = vpop.f32.mrb[0].mxu0
        %v3182 = vadd.f32 %v2418, %v3181
        %3183 = vdwg.mxu0
        %3184 = vmatprep.subr.bf16.mxu0 %v2880
        %3185 = vmatpush1.bf16.msra.mxu0 %v2879
        %3186 = vmatprep.subr.bf16.mxu0 %v2884
        %3187 = vmatpush1.bf16.msra.mxu0 %v2883
        %3188 = vmatprep.subr.bf16.mxu0 %v2888
        %3189 = vmatpush1.bf16.msra.mxu0 %v2887
        %3190 = vmatprep.subr.bf16.mxu0 %v2892
        %3191 = vmatpush1.bf16.msra.mxu0 %v2891
        %3192 = vmatprep.subr.bf16.mxu0 %v2896
        %3193 = vmatpush1.bf16.msra.mxu0 %v2895
        %3194 = vmatprep.subr.bf16.mxu0 %v2900
        %3195 = vmatpush1.bf16.msra.mxu0 %v2899
        %3196 = vmatprep.subr.bf16.mxu0 %v2904
        %3197 = vmatpush1.bf16.msra.mxu0 %v2903
        %3198 = vmatprep.subr.bf16.mxu0 %v2908
        %3199 = vmatpush1.bf16.msra.mxu0 %v2907
        %3200 = vmatprep.subr.bf16.mxu0 %v2912
        %3201 = vmatpush1.bf16.msra.mxu0 %v2911
        %3202 = vmatprep.subr.bf16.mxu0 %v2916
        %3203 = vmatpush1.bf16.msra.mxu0 %v2915
        %3204 = vmatprep.subr.bf16.mxu0 %v2920
        %3205 = vmatpush1.bf16.msra.mxu0 %v2919
        %3206 = vmatprep.subr.bf16.mxu0 %v2924
        %3207 = vmatpush1.bf16.msra.mxu0 %v2923
        %3208 = vmatprep.subr.bf16.mxu0 %v2928
        %3209 = vmatpush1.bf16.msra.mxu0 %v2927
        %3210 = vmatprep.subr.bf16.mxu0 %v2932
        %3211 = vmatpush1.bf16.msra.mxu0 %v2931
        %3212 = vmatprep.subr.bf16.mxu0 %v2936
        %3213 = vmatpush1.bf16.msra.mxu0 %v2935
        %3214 = vmatprep.subr.bf16.mxu0 %v2940
        %3215 = vmatpush1.bf16.msra.mxu0 %v2939
        %3216 = vmatprep.mubr.bf16.mxu0 %v2252
        %3217 = vmatmul.mubr.bf16.gmra.mrb[0].mxu0 %v2251
        %v3218 = vpop.f32.mrb[0].mxu0
        %v3219 = vadd.f32 %v3106, %v3218
        %v3220 = vpop.f32.mrb[0].mxu0
        %v3221 = vadd.f32 %v3108, %v3220
        %v3222 = vpop.f32.mrb[0].mxu0
        %v3223 = vadd.f32 %v3110, %v3222
        %v3224 = vpop.f32.mrb[0].mxu0
        %v3225 = vadd.f32 %v3112, %v3224
        %3226 = vmatprep.mubr.bf16.mxu0 %v2256
        %3227 = vmatmul.mubr.bf16.gmra.mrb[0].mxu0 %v2255
        %v3228 = vpop.f32.mrb[0].mxu0
        %v3229 = vadd.f32 %v3116, %v3228
        %v3230 = vpop.f32.mrb[0].mxu0
        %v3231 = vadd.f32 %v3118, %v3230
        %v3232 = vpop.f32.mrb[0].mxu0
        %v3233 = vadd.f32 %v3120, %v3232
        %v3234 = vpop.f32.mrb[0].mxu0
        %v3235 = vadd.f32 %v3122, %v3234
        %3236 = vmatprep.mubr.bf16.mxu0 %v2260
        %3237 = vmatmul.mubr.bf16.gmra.mrb[0].mxu0 %v2259
        %v3238 = vpop.f32.mrb[0].mxu0
        %v3239 = vadd.f32 %v3126, %v3238
        %v3240 = vpop.f32.mrb[0].mxu0
        %v3241 = vadd.f32 %v3128, %v3240
        %v3242 = vpop.f32.mrb[0].mxu0
        %v3243 = vadd.f32 %v3130, %v3242
        %v3244 = vpop.f32.mrb[0].mxu0
        %v3245 = vadd.f32 %v3132, %v3244
        %3246 = vmatprep.mubr.bf16.mxu0 %v2264
        %3247 = vmatmul.mubr.bf16.gmra.mrb[0].mxu0 %v2263
        %v3248 = vpop.f32.mrb[0].mxu0
        %v3249 = vadd.f32 %v3136, %v3248
        %v3250 = vpop.f32.mrb[0].mxu0
        %v3251 = vadd.f32 %v3138, %v3250
        %v3252 = vpop.f32.mrb[0].mxu0
        %v3253 = vadd.f32 %v3140, %v3252
        %v3254 = vpop.f32.mrb[0].mxu0
        %v3255 = vadd.f32 %v3142, %v3254
        %3256 = vmatprep.mubr.bf16.mxu0 %v2268
        %3257 = vmatmul.mubr.bf16.gmra.mrb[0].mxu0 %v2267
        %v3258 = vpop.f32.mrb[0].mxu0
        %v3259 = vadd.f32 %v3146, %v3258
        %v3260 = vpop.f32.mrb[0].mxu0
        %v3261 = vadd.f32 %v3148, %v3260
        %v3262 = vpop.f32.mrb[0].mxu0
        %v3263 = vadd.f32 %v3150, %v3262
        %v3264 = vpop.f32.mrb[0].mxu0
        %v3265 = vadd.f32 %v3152, %v3264
        %3266 = vmatprep.mubr.bf16.mxu0 %v2272
        %3267 = vmatmul.mubr.bf16.gmra.mrb[0].mxu0 %v2271
        %v3268 = vpop.f32.mrb[0].mxu0
        %v3269 = vadd.f32 %v3156, %v3268
        %v3270 = vpop.f32.mrb[0].mxu0
        %v3271 = vadd.f32 %v3158, %v3270
        %v3272 = vpop.f32.mrb[0].mxu0
        %v3273 = vadd.f32 %v3160, %v3272
        %v3274 = vpop.f32.mrb[0].mxu0
        %v3275 = vadd.f32 %v3162, %v3274
        %3276 = vmatprep.mubr.bf16.mxu0 %v2276
        %3277 = vmatmul.mubr.bf16.gmra.mrb[0].mxu0 %v2275
        %v3278 = vpop.f32.mrb[0].mxu0
        %v3279 = vadd.f32 %v3166, %v3278
        %v3280 = vpop.f32.mrb[0].mxu0
        %v3281 = vadd.f32 %v3168, %v3280
        %v3282 = vpop.f32.mrb[0].mxu0
        %v3283 = vadd.f32 %v3170, %v3282
        %v3284 = vpop.f32.mrb[0].mxu0
        %v3285 = vadd.f32 %v3172, %v3284
        %3286 = vmatprep.mubr.bf16.mxu0 %v2280
        %3287 = vmatmul.mubr.bf16.gmra.mrb[0].mxu0 %v2279
        %v3288 = vpop.f32.mrb[0].mxu0
        %v3289 = vadd.f32 %v3176, %v3288
        %v3290 = vpop.f32.mrb[0].mxu0
        %v3291 = vadd.f32 %v3178, %v3290
        %v3292 = vpop.f32.mrb[0].mxu0
        %v3293 = vadd.f32 %v3180, %v3292
        %v3294 = vpop.f32.mrb[0].mxu0
        %v3295 = vadd.f32 %v3182, %v3294
        %3296 = vdwg.mxu0
        %3297 = vmatprep.subr.bf16.mxu0 %v2818
        %3298 = vmatpush1.bf16.msra.mxu0 %v2817
        %3299 = vmatprep.subr.bf16.mxu0 %v2822
        %3300 = vmatpush1.bf16.msra.mxu0 %v2821
        %3301 = vmatprep.subr.bf16.mxu0 %v2826
        %3302 = vmatpush1.bf16.msra.mxu0 %v2825
        %3303 = vmatprep.subr.bf16.mxu0 %v2830
        %3304 = vmatpush1.bf16.msra.mxu0 %v2829
        %3305 = vmatprep.subr.bf16.mxu0 %v2834
        %3306 = vmatpush1.bf16.msra.mxu0 %v2833
        %3307 = vmatprep.subr.bf16.mxu0 %v2838
        %3308 = vmatpush1.bf16.msra.mxu0 %v2837
        %3309 = vmatprep.subr.bf16.mxu0 %v2842
        %3310 = vmatpush1.bf16.msra.mxu0 %v2841
        %3311 = vmatprep.subr.bf16.mxu0 %v2846
        %3312 = vmatpush1.bf16.msra.mxu0 %v2845
        %3313 = vmatprep.subr.bf16.mxu0 %v2850
        %3314 = vmatpush1.bf16.msra.mxu0 %v2849
        %3315 = vmatprep.subr.bf16.mxu0 %v2854
        %3316 = vmatpush1.bf16.msra.mxu0 %v2853
        %3317 = vmatprep.subr.bf16.mxu0 %v2858
        %3318 = vmatpush1.bf16.msra.mxu0 %v2857
        %3319 = vmatprep.subr.bf16.mxu0 %v2862
        %3320 = vmatpush1.bf16.msra.mxu0 %v2861
        %3321 = vmatprep.subr.bf16.mxu0 %v2866
        %3322 = vmatpush1.bf16.msra.mxu0 %v2865
        %3323 = vmatprep.subr.bf16.mxu0 %v2870
        %3324 = vmatpush1.bf16.msra.mxu0 %v2869
        %3325 = vmatprep.subr.bf16.mxu0 %v2874
        %3326 = vmatpush1.bf16.msra.mxu0 %v2873
        %3327 = vmatprep.subr.bf16.mxu0 %v2878
        %3328 = vmatpush1.bf16.msra.mxu0 %v2877
        %3329 = vmatprep.mubr.bf16.mxu0 %v2250
        %3330 = vmatmul.mubr.bf16.gmra.mrb[0].mxu0 %v2249
        %v3331 = vpop.f32.mrb[0].mxu0
        %v3332 = vadd.f32 %v2422, %v3331
        %v3333 = vpop.f32.mrb[0].mxu0
        %v3334 = vadd.f32 %v2426, %v3333
        %v3335 = vpop.f32.mrb[0].mxu0
        %v3336 = vadd.f32 %v2422, %v3335
        %v3337 = vpop.f32.mrb[0].mxu0
        %v3338 = vadd.f32 %v2426, %v3337
        %3339 = vmatprep.mubr.bf16.mxu0 %v2254
        %3340 = vmatmul.mubr.bf16.gmra.mrb[0].mxu0 %v2253
        %v3341 = vpop.f32.mrb[0].mxu0
        %v3342 = vadd.f32 %v2422, %v3341
        %v3343 = vpop.f32.mrb[0].mxu0
        %v3344 = vadd.f32 %v2426, %v3343
        %v3345 = vpop.f32.mrb[0].mxu0
        %v3346 = vadd.f32 %v2422, %v3345
        %v3347 = vpop.f32.mrb[0].mxu0
        %v3348 = vadd.f32 %v2426, %v3347
        %3349 = vmatprep.mubr.bf16.mxu0 %v2258
        %3350 = vmatmul.mubr.bf16.gmra.mrb[0].mxu0 %v2257
        %v3351 = vpop.f32.mrb[0].mxu0
        %v3352 = vadd.f32 %v2422, %v3351
        %v3353 = vpop.f32.mrb[0].mxu0
        %v3354 = vadd.f32 %v2426, %v3353
        %v3355 = vpop.f32.mrb[0].mxu0
        %v3356 = vadd.f32 %v2422, %v3355
        %v3357 = vpop.f32.mrb[0].mxu0
        %v3358 = vadd.f32 %v2426, %v3357
        %3359 = vmatprep.mubr.bf16.mxu0 %v2262
        %3360 = vmatmul.mubr.bf16.gmra.mrb[0].mxu0 %v2261
        %v3361 = vpop.f32.mrb[0].mxu0
        %v3362 = vadd.f32 %v2422, %v3361
        %v3363 = vpop.f32.mrb[0].mxu0
        %v3364 = vadd.f32 %v2426, %v3363
        %v3365 = vpop.f32.mrb[0].mxu0
        %v3366 = vadd.f32 %v2422, %v3365
        %v3367 = vpop.f32.mrb[0].mxu0
        %v3368 = vadd.f32 %v2426, %v3367
        %3369 = vmatprep.mubr.bf16.mxu0 %v2266
        %3370 = vmatmul.mubr.bf16.gmra.mrb[0].mxu0 %v2265
        %v3371 = vpop.f32.mrb[0].mxu0
        %v3372 = vadd.f32 %v2422, %v3371
        %v3373 = vpop.f32.mrb[0].mxu0
        %v3374 = vadd.f32 %v2426, %v3373
        %v3375 = vpop.f32.mrb[0].mxu0
        %v3376 = vadd.f32 %v2422, %v3375
        %v3377 = vpop.f32.mrb[0].mxu0
        %v3378 = vadd.f32 %v2426, %v3377
        %3379 = vmatprep.mubr.bf16.mxu0 %v2270
        %3380 = vmatmul.mubr.bf16.gmra.mrb[0].mxu0 %v2269
        %v3381 = vpop.f32.mrb[0].mxu0
        %v3382 = vadd.f32 %v2422, %v3381
        %v3383 = vpop.f32.mrb[0].mxu0
        %v3384 = vadd.f32 %v2426, %v3383
        %v3385 = vpop.f32.mrb[0].mxu0
        %v3386 = vadd.f32 %v2422, %v3385
        %v3387 = vpop.f32.mrb[0].mxu0
        %v3388 = vadd.f32 %v2426, %v3387
        %3389 = vmatprep.mubr.bf16.mxu0 %v2274
        %3390 = vmatmul.mubr.bf16.gmra.mrb[0].mxu0 %v2273
        %v3391 = vpop.f32.mrb[0].mxu0
        %v3392 = vadd.f32 %v2422, %v3391
        %v3393 = vpop.f32.mrb[0].mxu0
        %v3394 = vadd.f32 %v2426, %v3393
        %v3395 = vpop.f32.mrb[0].mxu0
        %v3396 = vadd.f32 %v2422, %v3395
        %v3397 = vpop.f32.mrb[0].mxu0
        %v3398 = vadd.f32 %v2426, %v3397
        %3399 = vmatprep.mubr.bf16.mxu0 %v2278
        %3400 = vmatmul.mubr.bf16.gmra.mrb[0].mxu0 %v2277
        %v3401 = vpop.f32.mrb[0].mxu0
        %v3402 = vadd.f32 %v2422, %v3401
        %v3403 = vpop.f32.mrb[0].mxu0
        %v3404 = vadd.f32 %v2426, %v3403
        %v3405 = vpop.f32.mrb[0].mxu0
        %v3406 = vadd.f32 %v2422, %v3405
        %v3407 = vpop.f32.mrb[0].mxu0
        %v3408 = vadd.f32 %v2426, %v3407
        %3409 = vdwg.mxu0
        %3410 = vmatprep.subr.bf16.mxu0 %v2882
        %3411 = vmatpush1.bf16.msra.mxu0 %v2881
        %3412 = vmatprep.subr.bf16.mxu0 %v2886
        %3413 = vmatpush1.bf16.msra.mxu0 %v2885
        %3414 = vmatprep.subr.bf16.mxu0 %v2890
        %3415 = vmatpush1.bf16.msra.mxu0 %v2889
        %3416 = vmatprep.subr.bf16.mxu0 %v2894
        %3417 = vmatpush1.bf16.msra.mxu0 %v2893
        %3418 = vmatprep.subr.bf16.mxu0 %v2898
        %3419 = vmatpush1.bf16.msra.mxu0 %v2897
        %3420 = vmatprep.subr.bf16.mxu0 %v2902
        %3421 = vmatpush1.bf16.msra.mxu0 %v2901
        %3422 = vmatprep.subr.bf16.mxu0 %v2906
        %3423 = vmatpush1.bf16.msra.mxu0 %v2905
        %3424 = vmatprep.subr.bf16.mxu0 %v2910
        %3425 = vmatpush1.bf16.msra.mxu0 %v2909
        %3426 = vmatprep.subr.bf16.mxu0 %v2914
        %3427 = vmatpush1.bf16.msra.mxu0 %v2913
        %3428 = vmatprep.subr.bf16.mxu0 %v2918
        %3429 = vmatpush1.bf16.msra.mxu0 %v2917
        %3430 = vmatprep.subr.bf16.mxu0 %v2922
        %3431 = vmatpush1.bf16.msra.mxu0 %v2921
        %3432 = vmatprep.subr.bf16.mxu0 %v2926
        %3433 = vmatpush1.bf16.msra.mxu0 %v2925
        %3434 = vmatprep.subr.bf16.mxu0 %v2930
        %3435 = vmatpush1.bf16.msra.mxu0 %v2929
        %3436 = vmatprep.subr.bf16.mxu0 %v2934
        %3437 = vmatpush1.bf16.msra.mxu0 %v2933
        %3438 = vmatprep.subr.bf16.mxu0 %v2938
        %3439 = vmatpush1.bf16.msra.mxu0 %v2937
        %3440 = vmatprep.subr.bf16.mxu0 %v2942
        %3441 = vmatpush1.bf16.msra.mxu0 %v2941
        %3442 = vmatprep.mubr.bf16.mxu0 %v2252
        %3443 = vmatmul.mubr.bf16.gmra.mrb[0].mxu0 %v2251
        %v3444 = vpop.f32.mrb[0].mxu0
        %v3445 = vadd.f32 %v3332, %v3444
        %v3446 = vpop.f32.mrb[0].mxu0
        %v3447 = vadd.f32 %v3334, %v3446
        %v3448 = vpop.f32.mrb[0].mxu0
        %v3449 = vadd.f32 %v3336, %v3448
        %v3450 = vpop.f32.mrb[0].mxu0
        %v3451 = vadd.f32 %v3338, %v3450
        %3452 = vmatprep.mubr.bf16.mxu0 %v2256
        %3453 = vmatmul.mubr.bf16.gmra.mrb[0].mxu0 %v2255
        %v3454 = vpop.f32.mrb[0].mxu0
        %v3455 = vadd.f32 %v3342, %v3454
        %v3456 = vpop.f32.mrb[0].mxu0
        %v3457 = vadd.f32 %v3344, %v3456
        %v3458 = vpop.f32.mrb[0].mxu0
        %v3459 = vadd.f32 %v3346, %v3458
        %v3460 = vpop.f32.mrb[0].mxu0
        %v3461 = vadd.f32 %v3348, %v3460
        %3462 = vmatprep.mubr.bf16.mxu0 %v2260
        %3463 = vmatmul.mubr.bf16.gmra.mrb[0].mxu0 %v2259
        %v3464 = vpop.f32.mrb[0].mxu0
        %v3465 = vadd.f32 %v3352, %v3464
        %v3466 = vpop.f32.mrb[0].mxu0
        %v3467 = vadd.f32 %v3354, %v3466
        %v3468 = vpop.f32.mrb[0].mxu0
        %v3469 = vadd.f32 %v3356, %v3468
        %v3470 = vpop.f32.mrb[0].mxu0
        %v3471 = vadd.f32 %v3358, %v3470
        %3472 = vmatprep.mubr.bf16.mxu0 %v2264
        %3473 = vmatmul.mubr.bf16.gmra.mrb[0].mxu0 %v2263
        %v3474 = vpop.f32.mrb[0].mxu0
        %v3475 = vadd.f32 %v3362, %v3474
        %v3476 = vpop.f32.mrb[0].mxu0
        %v3477 = vadd.f32 %v3364, %v3476
        %v3478 = vpop.f32.mrb[0].mxu0
        %v3479 = vadd.f32 %v3366, %v3478
        %v3480 = vpop.f32.mrb[0].mxu0
        %v3481 = vadd.f32 %v3368, %v3480
        %3482 = vmatprep.mubr.bf16.mxu0 %v2268
        %3483 = vmatmul.mubr.bf16.gmra.mrb[0].mxu0 %v2267
        %v3484 = vpop.f32.mrb[0].mxu0
        %v3485 = vadd.f32 %v3372, %v3484
        %v3486 = vpop.f32.mrb[0].mxu0
        %v3487 = vadd.f32 %v3374, %v3486
        %v3488 = vpop.f32.mrb[0].mxu0
        %v3489 = vadd.f32 %v3376, %v3488
        %v3490 = vpop.f32.mrb[0].mxu0
        %v3491 = vadd.f32 %v3378, %v3490
        %3492 = vmatprep.mubr.bf16.mxu0 %v2272
        %3493 = vmatmul.mubr.bf16.gmra.mrb[0].mxu0 %v2271
        %v3494 = vpop.f32.mrb[0].mxu0
        %v3495 = vadd.f32 %v3382, %v3494
        %v3496 = vpop.f32.mrb[0].mxu0
        %v3497 = vadd.f32 %v3384, %v3496
        %v3498 = vpop.f32.mrb[0].mxu0
        %v3499 = vadd.f32 %v3386, %v3498
        %v3500 = vpop.f32.mrb[0].mxu0
        %v3501 = vadd.f32 %v3388, %v3500
        %3502 = vmatprep.mubr.bf16.mxu0 %v2276
        %3503 = vmatmul.mubr.bf16.gmra.mrb[0].mxu0 %v2275
        %v3504 = vpop.f32.mrb[0].mxu0
        %v3505 = vadd.f32 %v3392, %v3504
        %v3506 = vpop.f32.mrb[0].mxu0
        %v3507 = vadd.f32 %v3394, %v3506
        %v3508 = vpop.f32.mrb[0].mxu0
        %v3509 = vadd.f32 %v3396, %v3508
        %v3510 = vpop.f32.mrb[0].mxu0
        %v3511 = vadd.f32 %v3398, %v3510
        %3512 = vmatprep.mubr.bf16.mxu0 %v2280
        %3513 = vmatmul.mubr.bf16.gmra.mrb[0].mxu0 %v2279
        %v3514 = vpop.f32.mrb[0].mxu0
        %v3515 = vadd.f32 %v3402, %v3514
        %v3516 = vpop.f32.mrb[0].mxu0
        %v3517 = vadd.f32 %v3404, %v3516
        %v3518 = vpop.f32.mrb[0].mxu0
        %v3519 = vadd.f32 %v3406, %v3518
        %v3520 = vpop.f32.mrb[0].mxu0
        %v3521 = vadd.f32 %v3408, %v3520
        %3522 = vdwg.mxu0
        %v3523 = vmax.f32 %v3219, 0.0
        %v3524 = vmax.f32 %v3221, 0.0
        %v3525 = vmax.f32 %v3445, 0.0
        %v3526 = vmax.f32 %v3447, 0.0
        %v3527 = vmax.f32 %v3223, 0.0
        %v3528 = vmax.f32 %v3225, 0.0
        %v3529 = vmax.f32 %v3449, 0.0
        %v3530 = vmax.f32 %v3451, 0.0
        %v3531 = vmax.f32 %v3229, 0.0
        %v3532 = vmax.f32 %v3231, 0.0
        %v3533 = vmax.f32 %v3455, 0.0
        %v3534 = vmax.f32 %v3457, 0.0
        %v3535 = vmax.f32 %v3233, 0.0
        %v3536 = vmax.f32 %v3235, 0.0
        %v3537 = vmax.f32 %v3459, 0.0
        %v3538 = vmax.f32 %v3461, 0.0
        %v3539 = vmax.f32 %v3239, 0.0
        %v3540 = vmax.f32 %v3241, 0.0
        %v3541 = vmax.f32 %v3465, 0.0
        %v3542 = vmax.f32 %v3467, 0.0
        %v3543 = vmax.f32 %v3243, 0.0
        %v3544 = vmax.f32 %v3245, 0.0
        %v3545 = vmax.f32 %v3469, 0.0
        %v3546 = vmax.f32 %v3471, 0.0
        %v3547 = vmax.f32 %v3249, 0.0
        %v3548 = vmax.f32 %v3251, 0.0
        %v3549 = vmax.f32 %v3475, 0.0
        %v3550 = vmax.f32 %v3477, 0.0
        %v3551 = vmax.f32 %v3253, 0.0
        %v3552 = vmax.f32 %v3255, 0.0
        %v3553 = vmax.f32 %v3479, 0.0
        %v3554 = vmax.f32 %v3481, 0.0
        %v3555 = vmax.f32 %v3259, 0.0
        %v3556 = vmax.f32 %v3261, 0.0
        %v3557 = vmax.f32 %v3485, 0.0
        %v3558 = vmax.f32 %v3487, 0.0
        %v3559 = vmax.f32 %v3263, 0.0
        %v3560 = vmax.f32 %v3265, 0.0
        %v3561 = vmax.f32 %v3489, 0.0
        %v3562 = vmax.f32 %v3491, 0.0
        %v3563 = vmax.f32 %v3269, 0.0
        %v3564 = vmax.f32 %v3271, 0.0
        %v3565 = vmax.f32 %v3495, 0.0
        %v3566 = vmax.f32 %v3497, 0.0
        %v3567 = vmax.f32 %v3273, 0.0
        %v3568 = vmax.f32 %v3275, 0.0
        %v3569 = vmax.f32 %v3499, 0.0
        %v3570 = vmax.f32 %v3501, 0.0
        %v3571 = vmax.f32 %v3279, 0.0
        %v3572 = vmax.f32 %v3281, 0.0
        %v3573 = vmax.f32 %v3505, 0.0
        %v3574 = vmax.f32 %v3507, 0.0
        %v3575 = vmax.f32 %v3283, 0.0
        %v3576 = vmax.f32 %v3285, 0.0
        %v3577 = vmax.f32 %v3509, 0.0
        %v3578 = vmax.f32 %v3511, 0.0
        %v3579 = vmax.f32 %v3289, 0.0
        %v3580 = vmax.f32 %v3291, 0.0
        %v3581 = vmax.f32 %v3515, 0.0
        %v3582 = vmax.f32 %v3517, 0.0
        %v3583 = vmax.f32 %v3293, 0.0
        %v3584 = vmax.f32 %v3295, 0.0
        %v3585 = vmax.f32 %v3519, 0.0
        %v3586 = vmax.f32 %v3521, 0.0
        %v3587 = vld [vmem:[%s7] sm:$0xf]
        %v3588 = vpack.c.bf16 %v3527, %v3523
        %v3589 = vpack.c.bf16 %v3528, %v3524
        %v3590 = vpack.c.bf16 %v3529, %v3525
        %v3591 = vpack.c.bf16 %v3530, %v3526
        %v3592 = vpack.c.bf16 %v3535, %v3531
        %v3593 = vpack.c.bf16 %v3536, %v3532
        %v3594 = vpack.c.bf16 %v3537, %v3533
        %v3595 = vpack.c.bf16 %v3538, %v3534
        %v3596 = vpack.c.bf16 %v3543, %v3539
        %v3597 = vpack.c.bf16 %v3544, %v3540
        %v3598 = vpack.c.bf16 %v3545, %v3541
        %v3599 = vpack.c.bf16 %v3546, %v3542
        %v3600 = vpack.c.bf16 %v3551, %v3547
        %v3601 = vpack.c.bf16 %v3552, %v3548
        %v3602 = vpack.c.bf16 %v3553, %v3549
        %v3603 = vpack.c.bf16 %v3554, %v3550
        %v3604 = vpack.c.bf16 %v3559, %v3555
        %v3605 = vpack.c.bf16 %v3560, %v3556
        %v3606 = vpack.c.bf16 %v3561, %v3557
        %v3607 = vpack.c.bf16 %v3562, %v3558
        %v3608 = vpack.c.bf16 %v3567, %v3563
        %v3609 = vpack.c.bf16 %v3568, %v3564
        %v3610 = vpack.c.bf16 %v3569, %v3565
        %v3611 = vpack.c.bf16 %v3570, %v3566
        %v3612 = vpack.c.bf16 %v3575, %v3571
        %v3613 = vpack.c.bf16 %v3576, %v3572
        %v3614 = vpack.c.bf16 %v3577, %v3573
        %v3615 = vpack.c.bf16 %v3578, %v3574
        %v3616 = vpack.c.bf16 %v3583, %v3579
        %v3617 = vpack.c.bf16 %v3584, %v3580
        %v3618 = vpack.c.bf16 %v3585, %v3581
        %v3619 = vpack.c.bf16 %v3586, %v3582
        %v3620 = vld [vmem:[%s8] sm:$0x3]
        %3622 = vset.pattern.permute.xlu0 0
        %3623 = vperm.xlu0 %3622, %v3620
        %v3624 = vpop.permute.xlu0 %3623
        %v3628 = vunpack.c.l.s4 1966171168
        %v3629 = vunpack.c.0.s8 %v3628
        %v3630 = vlaneseq
        %v3631 = vshrl.u32 %v3630, 7
        %v3632 = vsub.s32 %v3629, %v3631
        %v3633 = vrot.slane %v3587, %v3632
        %v3634 = vcombine.high %v3633, %v3633
        %v3636 = vunpack.c.l.s4 1966171168
        %v3637 = vunpack.c.0.s8 %v3636
        %v3638 = vlaneseq
        %v3639 = vshrl.u32 %v3638, 7
        %v3640 = vsub.s32 %v3637, %v3639
        %v3641 = vrot.slane %v3633, %v3640
        %v3643 = vunpack.c.l.s4 1966171168
        %v3644 = vunpack.c.0.s8 %v3643
        %v3645 = vlaneseq
        %v3646 = vshrl.u32 %v3645, 7
        %v3647 = vsub.s32 %v3644, %v3646
        %v3648 = vrot.slane %v3634, %v3647
        %v3649 = vcombine.high %v3641, %v3641
        %v3650 = vcombine.high %v3648, %v3648
        %3655 = vmatprep.subr.bf16.mxu0 %v3589
        %3656 = vmatpush1.bf16.xpose.msra.mxu0 %v3588
        %3657 = vmatprep.subr.bf16.mxu0 %v3593
        %3658 = vmatpush1.bf16.xpose.msra.mxu0 %v3592
        %3659 = vmatprep.subr.bf16.mxu0 %v3597
        %3660 = vmatpush1.bf16.xpose.msra.mxu0 %v3596
        %3661 = vmatprep.subr.bf16.mxu0 %v3601
        %3662 = vmatpush1.bf16.xpose.msra.mxu0 %v3600
        %3663 = vmatprep.subr.bf16.mxu0 %v3605
        %3664 = vmatpush1.bf16.xpose.msra.mxu0 %v3604
        %3665 = vmatprep.subr.bf16.mxu0 %v3609
        %3666 = vmatpush1.bf16.xpose.msra.mxu0 %v3608
        %3667 = vmatprep.subr.bf16.mxu0 %v3613
        %3668 = vmatpush1.bf16.xpose.msra.mxu0 %v3612
        %3669 = vmatprep.subr.bf16.mxu0 %v3617
        %3670 = vmatpush1.bf16.xpose.msra.mxu0 %v3616
        %3671 = vmatprep.subr.bf16.mxu0 0
        %3672 = vmatpush1.bf16.xpose.msra.mxu0 0
        %3673 = vmatprep.subr.bf16.mxu0 0
        %3674 = vmatpush1.bf16.xpose.msra.mxu0 0
        %3675 = vmatprep.subr.bf16.mxu0 0
        %3676 = vmatpush1.bf16.xpose.msra.mxu0 0
        %3677 = vmatprep.subr.bf16.mxu0 0
        %3678 = vmatpush1.bf16.xpose.msra.mxu0 0
        %3679 = vmatprep.subr.bf16.mxu0 0
        %3680 = vmatpush1.bf16.xpose.msra.mxu0 0
        %3681 = vmatprep.subr.bf16.mxu0 0
        %3682 = vmatpush1.bf16.xpose.msra.mxu0 0
        %3683 = vmatprep.subr.bf16.mxu0 0
        %3684 = vmatpush1.bf16.xpose.msra.mxu0 0
        %3685 = vmatprep.subr.bf16.mxu0 0
        %3686 = vmatpush1.bf16.xpose.msra.mxu0 0
        %3687 = vmatprep.mubr.bf16.mxu0 %v3648
        %3688 = vmatmul.mubr.bf16.gmra.mrb[0].mxu0 %v3641
        %v3689 = vpop.f32.mrb[0].mxu0
        %v3690 = vadd.f32 %v3624, %v3689
        %v3691 = vpop.f32.mrb[0].mxu0
        %v3692 = vpop.f32.mrb[0].mxu0
        %v3693 = vpop.f32.mrb[0].mxu0
        %3694 = vdwg.mxu0
        %3695 = vmatprep.subr.bf16.mxu0 %v3591
        %3696 = vmatpush1.bf16.xpose.msra.mxu0 %v3590
        %3697 = vmatprep.subr.bf16.mxu0 %v3595
        %3698 = vmatpush1.bf16.xpose.msra.mxu0 %v3594
        %3699 = vmatprep.subr.bf16.mxu0 %v3599
        %3700 = vmatpush1.bf16.xpose.msra.mxu0 %v3598
        %3701 = vmatprep.subr.bf16.mxu0 %v3603
        %3702 = vmatpush1.bf16.xpose.msra.mxu0 %v3602
        %3703 = vmatprep.subr.bf16.mxu0 %v3607
        %3704 = vmatpush1.bf16.xpose.msra.mxu0 %v3606
        %3705 = vmatprep.subr.bf16.mxu0 %v3611
        %3706 = vmatpush1.bf16.xpose.msra.mxu0 %v3610
        %3707 = vmatprep.subr.bf16.mxu0 %v3615
        %3708 = vmatpush1.bf16.xpose.msra.mxu0 %v3614
        %3709 = vmatprep.subr.bf16.mxu0 %v3619
        %3710 = vmatpush1.bf16.xpose.msra.mxu0 %v3618
        %3711 = vmatprep.subr.bf16.mxu0 0
        %3712 = vmatpush1.bf16.xpose.msra.mxu0 0
        %3713 = vmatprep.subr.bf16.mxu0 0
        %3714 = vmatpush1.bf16.xpose.msra.mxu0 0
        %3715 = vmatprep.subr.bf16.mxu0 0
        %3716 = vmatpush1.bf16.xpose.msra.mxu0 0
        %3717 = vmatprep.subr.bf16.mxu0 0
        %3718 = vmatpush1.bf16.xpose.msra.mxu0 0
        %3719 = vmatprep.subr.bf16.mxu0 0
        %3720 = vmatpush1.bf16.xpose.msra.mxu0 0
        %3721 = vmatprep.subr.bf16.mxu0 0
        %3722 = vmatpush1.bf16.xpose.msra.mxu0 0
        %3723 = vmatprep.subr.bf16.mxu0 0
        %3724 = vmatpush1.bf16.xpose.msra.mxu0 0
        %3725 = vmatprep.subr.bf16.mxu0 0
        %3726 = vmatpush1.bf16.xpose.msra.mxu0 0
        %3727 = vmatprep.mubr.bf16.mxu0 %v3650
        %3728 = vmatmul.mubr.bf16.gmra.mrb[0].mxu0 %v3649
        %v3729 = vpop.f32.mrb[0].mxu0
        %v3730 = vadd.f32 %v3690, %v3729
        %v3731 = vpop.f32.mrb[0].mxu0
        %v3732 = vpop.f32.mrb[0].mxu0
        %v3733 = vpop.f32.mrb[0].mxu0
        %3734 = vdwg.mxu0
        %3735 = vst [vmem:[%s356] sm:$0x3] %v3730
        %s3736 = sand.u32 %s227, 1
        %s3737 = scalar_lea.sflag [#allocation4], %s3736
        %s3738 = sand.u32 %s227, 1
        %s3739 = smul.addr %s3738, 2
        %s3740 = scalar_lea.vmem [#allocation7], %s3739
        // Predicated region
        $region65: #{tpu_custom_call.1} parent=55 // pred_check
          %p3741 = pneg %p237
        $region66: #{tpu_custom_call.1} parent=55 // pred_check_branch
          %3743 = sbr.rel (%p3741) target = $region68
        $region67: #{tpu_custom_call.1} parent=55 // pred_region
          %s3745 = ssub.s32 32, 32
          %3746 = vsyncadd %s3737, %s3745
          %s3747 = smul.addr %s25, 32
          %s3748 = scalar_lea.hbm %s9, %s3747
          %s3750 = sshll.u32 %s3740, 4
          %s3751 = int_to_ptr.vmem [resolvable:$true] %s3750
          %3753 = dma.vmem_to_hbm [thread:$0]  %s3751, 32, %s3748, %s3737
        $region68: #{tpu_custom_call.1} parent=55 // pred_fallthru
          _
      $region56: #{tpu_custom_call.1} parent=5 // pred_fallthru
        _
      %p3754 = scmp.le.s32.totalorder 2, %s20
      // Predicated region
      $region69: #{tpu_custom_call.1} parent=5 // pred_check
        %p3755 = pneg %p3754
      $region70: #{tpu_custom_call.1} parent=5 // pred_check_branch
        %3757 = sbr.rel (%p3755) target = $region72
      $region71: #{tpu_custom_call.1} parent=5 // pred_region
        %s3758 = ssub.s32 %s20, 2
        // Predicated region
        $region73: #{tpu_custom_call.1} parent=71 // pred_check
          %p3759 = pneg %p243
        $region74: #{tpu_custom_call.1} parent=71 // pred_check_branch
          %3761 = sbr.rel (%p3759) target = $region76
        $region75: #{tpu_custom_call.1} parent=71 // pred_region
          %s3762 = sand.u32 %s228, 1
          %s3763 = scalar_lea.sflag [#allocation4], %s3762
          %s3764 = sand.u32 %s228, 1
          %s3765 = smul.addr %s3764, 2
          %s3766 = scalar_lea.vmem [#allocation7], %s3765
          %3767 = dma.done %s3763, 32
        $region76: #{tpu_custom_call.1} parent=71 // pred_fallthru
          _
      $region72: #{tpu_custom_call.1} parent=5 // pred_fallthru
        _
    $region6: #{tpu_custom_call.1} parent=1 // loop_footer
      %s24 = sadd.s32 1, %s20
    $region7: #{tpu_custom_call.1} parent=1 // loop_footer_branch
      %19 = sbr.rel target = $region3
    $region8: #{tpu_custom_call.1} parent=1 // loop_exit
      _
    %3768 = vsyncpa [#allocation3], 1
    %s3769 = scalar_lea.sflag [#allocation3], 1
    %3770 = vsyncpa %s3769, 1
    %3771 = vsyncpa [#allocation6], 1
    %3772 = vsyncpa [#allocation4], 1
    %s3773 = scalar_lea.sflag [#allocation4], 1
    %3774 = vsyncpa %s3773, 1

</llo_original>
